<compile_context>
chip_gen: v6e
topology: v6e:2x2x1
jax: 0.10.0
libtpu: 0.0.40
codegen_flags: <defaults>
</compile_context>

<pallas_src>
import functools

import jax
import jax.numpy as jnp
import numpy as np
from jax import lax
from jax.experimental import pallas as pl
from jax.experimental.pallas import tpu as pltpu


def _round_up(x, m):
    return (x + m - 1) // m * m


def _lstm_encoder_kernel(num_layers, seq_len, x_ref, *rest):
    """LSTM stack over the full sequence, entirely in VMEM.

    rest = [w_ih_t_0, w_hh_t_0, b_0, ..., w_ih_t_{L-1}, w_hh_t_{L-1}, b_{L-1},
            h_out_ref, c_out_ref, gates_scratch, y_scratch]

    Shapes (padded, lane-aligned):
      x_ref:         (S*Bp, Ep)     bf16   flattened embedding slab
      w_ih_t_l:      (in_p, 4*Hp)   bf16   pre-transposed, gate-padded
      w_hh_t_l:      (Hp,   4*Hp)   bf16
      b_l:           (1,    4*Hp)   f32    b_ih + b_hh, gate-padded
      h_out/c_out:   (L, Bp, Hp)    f32
      gates_scratch: (S*Bp, 4*Hp)   f32    hoisted input projection (+bias)
      y_scratch:     (S*Bp, Hp)     f32    per-layer output sequence
    Gate order matches PyTorch: i, f, g, o (each in its own Hp lane block).
    """
    weight_refs = rest[: 3 * num_layers]
    h_out_ref = rest[3 * num_layers]
    c_out_ref = rest[3 * num_layers + 1]
    gates_scratch = rest[3 * num_layers + 2]
    y_scratch = rest[3 * num_layers + 3]

    _, BP, HP = h_out_ref.shape

    for layer in range(num_layers):  # static Python loop over layers (L=2)
        w_ih_ref = weight_refs[3 * layer]
        w_hh_ref = weight_refs[3 * layer + 1]
        b_ref = weight_refs[3 * layer + 2]

        # --- Hoisted input projection: one big MXU matmul over the whole
        # sequence, plus the bias broadcast, done once per layer. ---
        if layer == 0:
            src = x_ref[...]                                    # (S*Bp, Ep) bf16
        else:
            src = y_scratch[...].astype(jnp.bfloat16)           # (S*Bp, Hp)
        gates_scratch[...] = (
            jnp.dot(src, w_ih_ref[...], preferred_element_type=jnp.float32)
            + b_ref[...]
        )

        # --- Serial recurrence: only h @ W_hh^T + gates + state update. ---
        def step(t, carry, w_hh_ref=w_hh_ref):
            h, c = carry
            row = pl.multiple_of(t * BP, BP)                    # f32-tile aligned
            gates = gates_scratch[pl.ds(row, BP), :] + jnp.dot(
                h.astype(jnp.bfloat16), w_hh_ref[...],
                preferred_element_type=jnp.float32)             # (Bp, 4*Hp) f32
            # Full 128-lane-block gate extraction (no masked selects).
            i = jax.nn.sigmoid(gates[:, 0 * HP:1 * HP])
            f = jax.nn.sigmoid(gates[:, 1 * HP:2 * HP])
            g = jnp.tanh(gates[:, 2 * HP:3 * HP])
            o = jax.nn.sigmoid(gates[:, 3 * HP:4 * HP])
            c_new = f * c + i * g
            h_new = o * jnp.tanh(c_new)
            # TODO(synk): PyTorch applies inter-layer dropout in train mode;
            # eval-mode semantics (identity) are implemented here.
            y_scratch[pl.ds(row, BP), :] = h_new                # next layer input
            return (h_new, c_new)

        h0 = jnp.zeros((BP, HP), jnp.float32)
        c0 = jnp.zeros((BP, HP), jnp.float32)
        h_fin, c_fin = lax.fori_loop(0, seq_len, step, (h0, c0), unroll=True)
        h_out_ref[layer] = h_fin                                # (8,128) dense vst
        c_out_ref[layer] = c_fin


def encoder_forward(tokens, params):
    """tokens: (seq_len, batch) int32 -> (hidden, cell), each (L, batch, H)."""
    S, B = tokens.shape
    H = params["hidden_size"]
    HP = params["hidden_pad"]
    E = params["embed_size"]
    EP = params["embed_pad"]
    L = params["num_layers"]
    BP = _round_up(max(B, 8), 8)  # pad batch to the sublane multiple

    # Embedding gather + eval-mode dropout (identity): plain-JAX glue.
    emb = params["embedding"][tokens]                           # (S, B, E) bf16
    emb = jnp.pad(emb, ((0, 0), (0, BP - B), (0, EP - E)))      # zero padding
    x = emb.reshape(S * BP, EP)                                 # lane-dense slab

    weight_args = []
    in_specs = [pl.BlockSpec(memory_space=pltpu.MemorySpace.VMEM)]
    for l in range(L):
        weight_args += [
            params[f"w_ih_t_{l}"],
            params[f"w_hh_t_{l}"],
            params[f"b_{l}"],
        ]
        in_specs += [pl.BlockSpec(memory_space=pltpu.MemorySpace.VMEM)] * 3

    kernel = functools.partial(_lstm_encoder_kernel, L, S)
    h_pad, c_pad = pl.pallas_call(
        kernel,
        out_shape=(
            jax.ShapeDtypeStruct((L, BP, HP), jnp.float32),
            jax.ShapeDtypeStruct((L, BP, HP), jnp.float32),
        ),
        in_specs=in_specs,
        out_specs=(
            pl.BlockSpec(memory_space=pltpu.MemorySpace.VMEM),
            pl.BlockSpec(memory_space=pltpu.MemorySpace.VMEM),
        ),
        scratch_shapes=[
            pltpu.VMEM((S * BP, 4 * HP), jnp.float32),   # hoisted input proj
            pltpu.VMEM((S * BP, HP), jnp.float32),       # per-layer outputs
        ],
        compiler_params=pltpu.CompilerParams(
            vmem_limit_bytes=48 * 1024 * 1024),
    )(x, *weight_args)

    # Slice padded outputs back to PyTorch shapes (glue).
    return h_pad[:, :B, :H], c_pad[:, :B, :H]


def init_params(key, input_size, embedding_size, hidden_size, num_layers):
    """Deterministic init mirroring nn.Embedding / nn.LSTM parameter shapes.

    Weights are stored pre-transposed, bf16, and gate-padded so each of the
    four gates (i, f, g, o) occupies a full 128-lane block of width Hp.
    """
    H = hidden_size
    HP = _round_up(hidden_size, 128)
    EP = _round_up(embedding_size, 128)
    keys = jax.random.split(key, 1 + 4 * num_layers)
    params = {
        "hidden_size": hidden_size,
        "hidden_pad": HP,
        "embed_size": embedding_size,
        "embed_pad": EP,
        "num_layers": num_layers,
        # nn.Embedding: N(0, 1); stored bf16 (matmul operand precision).
        "embedding": jax.random.normal(
            keys[0], (input_size, embedding_size), jnp.float32
        ).astype(jnp.bfloat16),
    }
    k = 1.0 / np.sqrt(hidden_size)
    for l in range(num_layers):
        in_dim = embedding_size if l == 0 else hidden_size
        in_pad = EP if l == 0 else HP
        kw = keys[1 + 4 * l: 1 + 4 * (l + 1)]
        w_ih = np.asarray(
            jax.random.uniform(kw[0], (4 * H, in_dim), jnp.float32, -k, k))
        w_hh = np.asarray(
            jax.random.uniform(kw[1], (4 * H, H), jnp.float32, -k, k))
        b_ih = np.asarray(jax.random.uniform(kw[2], (4 * H,), jnp.float32, -k, k))
        b_hh = np.asarray(jax.random.uniform(kw[3], (4 * H,), jnp.float32, -k, k))
        b_sum = b_ih + b_hh

        w_ih_pad = np.zeros((in_pad, 4 * HP), np.float32)
        w_hh_pad = np.zeros((HP, 4 * HP), np.float32)
        b_pad = np.zeros((1, 4 * HP), np.float32)
        for g in range(4):
            w_ih_pad[:in_dim, g * HP:g * HP + H] = w_ih[g * H:(g + 1) * H, :].T
            w_hh_pad[:H, g * HP:g * HP + H] = w_hh[g * H:(g + 1) * H, :].T
            b_pad[0, g * HP:g * HP + H] = b_sum[g * H:(g + 1) * H]

        params[f"w_ih_t_{l}"] = jnp.asarray(w_ih_pad, jnp.bfloat16)
        params[f"w_hh_t_{l}"] = jnp.asarray(w_hh_pad, jnp.bfloat16)
        params[f"b_{l}"] = jnp.asarray(b_pad, jnp.float32)
    return params


def reference_forward(tokens, params):
    """Pure-JAX reference (lax.scan LSTM) on the UNPADDED shapes.

    Uses the same bf16-rounded weights (extracted from the padded layout) and
    the same precision recipe (bf16 matmul operands, f32 accumulation / gate
    math) as the kernel, giving an independent check of the padding scheme.
    """
    H = params["hidden_size"]
    HP = params["hidden_pad"]
    E = params["embed_size"]
    L = params["num_layers"]
    S, B = tokens.shape

    x = params["embedding"][tokens]                              # (S, B, E) bf16
    hs, cs = [], []
    for l in range(L):
        in_dim = E if l == 0 else H
        wi = params[f"w_ih_t_{l}"]
        wh = params[f"w_hh_t_{l}"]
        bp = params[f"b_{l}"]
        w_ih_t = jnp.concatenate(
            [wi[:in_dim, g * HP:g * HP + H] for g in range(4)], axis=1)
        w_hh_t = jnp.concatenate(
            [wh[:H, g * HP:g * HP + H] for g in range(4)], axis=1)
        b = jnp.concatenate(
            [bp[:, g * HP:g * HP + H] for g in range(4)], axis=1)

        def step(carry, xt, w_ih_t=w_ih_t, w_hh_t=w_hh_t, b=b):
            h, c = carry
            gates = (
                jnp.dot(xt, w_ih_t, preferred_element_type=jnp.float32)
                + jnp.dot(h.astype(jnp.bfloat16), w_hh_t,
                          preferred_element_type=jnp.float32)
                + b
            )
            i = jax.nn.sigmoid(gates[:, :H])
            f = jax.nn.sigmoid(gates[:, H:2 * H])
            g = jnp.tanh(gates[:, 2 * H:3 * H])
            o = jax.nn.sigmoid(gates[:, 3 * H:])
            c_new = f * c + i * g
            h_new = o * jnp.tanh(c_new)
            return (h_new, c_new), h_new.astype(jnp.bfloat16)

        init = (jnp.zeros((B, H), jnp.float32), jnp.zeros((B, H), jnp.float32))
        (h, c), ys = lax.scan(step, init, x)
        hs.append(h)
        cs.append(c)
        x = ys
    return jnp.stack(hs), jnp.stack(cs)


if __name__ == "__main__":
    # Small shapes consistent with the module's forward.
    input_size = 50        # vocab
    embedding_size = 32
    hidden_size = 32
    num_layers = 2
    seq_len = 8
    batch = 2

    root = jax.random.PRNGKey(0)
    kp, kx = jax.random.split(root)
    params = init_params(kp, input_size, embedding_size, hidden_size, num_layers)
    tokens = jax.random.randint(kx, (seq_len, batch), 0, input_size, jnp.int32)

    hidden, cell = encoder_forward(tokens, params)
    jax.block_until_ready((hidden, cell))

    h_ref, c_ref = reference_forward(tokens, params)
    np.testing.assert_allclose(np.asarray(hidden), np.asarray(h_ref),
                               atol=2e-3, rtol=2e-3)
    np.testing.assert_allclose(np.asarray(cell), np.asarray(c_ref),
                               atol=2e-3, rtol=2e-3)

    assert hidden.shape == (num_layers, batch, hidden_size)
    assert cell.shape == (num_layers, batch, hidden_size)
    print("KERNEL_OK")
</pallas_src>

<mosaic_0001>
module attributes {stable_mosaic.version = 11 : i64} {
  func.func @_lstm_encoder_kernel(%arg0: memref<64x128xbf16, #tpu.memory_space<vmem>>, %arg1: memref<128x512xbf16, #tpu.memory_space<vmem>>, %arg2: memref<128x512xbf16, #tpu.memory_space<vmem>>, %arg3: memref<1x512xf32, #tpu.memory_space<vmem>>, %arg4: memref<128x512xbf16, #tpu.memory_space<vmem>>, %arg5: memref<128x512xbf16, #tpu.memory_space<vmem>>, %arg6: memref<1x512xf32, #tpu.memory_space<vmem>>, %arg7: memref<2x8x128xf32, #tpu.memory_space<vmem>>, %arg8: memref<2x8x128xf32, #tpu.memory_space<vmem>>, %arg9: memref<64x512xf32, #tpu.memory_space<vmem>>, %arg10: memref<64x128xf32, #tpu.memory_space<vmem>>) attributes {dimension_semantics = [], scalar_prefetch = 0 : i64, scratch_operands = 2 : i64, tpu.core_type = #tpu.core_type<tc>} {
    %c0 = arith.constant 0 : index
    %c0_0 = arith.constant 0 : index
    %0 = vector.load %arg0[%c0, %c0_0] : memref<64x128xbf16, #tpu.memory_space<vmem>>, vector<64x128xbf16>
    %c0_1 = arith.constant 0 : index
    %c0_2 = arith.constant 0 : index
    %1 = vector.load %arg1[%c0_1, %c0_2] : memref<128x512xbf16, #tpu.memory_space<vmem>>, vector<128x512xbf16>
    %cst = arith.constant dense<0.000000e+00> : vector<64x512xf32>
    %2 = tpu.matmul %0, %1, %cst {dimension_numbers = #tpu.dot_dimension_numbers<[1], [0], [0], [1], [0, 0, 1, 1], [], []>} : vector<64x128xbf16>, vector<128x512xbf16>, vector<64x512xf32> -> vector<64x512xf32>
    %c0_3 = arith.constant 0 : index
    %c0_4 = arith.constant 0 : index
    %3 = vector.load %arg3[%c0_3, %c0_4] : memref<1x512xf32, #tpu.memory_space<vmem>>, vector<1x512xf32>
    %4 = vector.broadcast %3 : vector<1x512xf32> to vector<64x512xf32>
    %5 = arith.addf %2, %4 : vector<64x512xf32>
    %c0_5 = arith.constant 0 : index
    %c0_6 = arith.constant 0 : index
    %6 = vector.load %arg9[%c0_5, %c0_6] : memref<64x512xf32, #tpu.memory_space<vmem>>, vector<64x512xf32>
    tpu.vector_store %arg9[%c0_5, %c0_6], %5 {strides = array<i32>} : memref<64x512xf32, #tpu.memory_space<vmem>>, vector<64x512xf32>,
    %cst_7 = arith.constant 0.000000e+00 : f32
    %7 = vector.broadcast %cst_7 : f32 to vector<8x128xf32>
    %cst_8 = arith.constant 0.000000e+00 : f32
    %8 = vector.broadcast %cst_8 : f32 to vector<8x128xf32>
    %c0_i32 = arith.constant 0 : i32
    %c8_i32 = arith.constant 8 : i32
    %9 = arith.muli %c0_i32, %c8_i32 : i32
    %10 = tpu.assume_multiple %9, 8 : i32
    %11 = arith.index_cast %10 : i32 to index
    %c0_9 = arith.constant 0 : index
    %12 = vector.load %arg9[%11, %c0_9] : memref<64x512xf32, #tpu.memory_space<vmem>>, vector<8x512xf32>
    %13 = arith.truncf %7 : vector<8x128xf32> to vector<8x128xbf16>
    %c0_10 = arith.constant 0 : index
    %c0_11 = arith.constant 0 : index
    %14 = vector.load %arg2[%c0_10, %c0_11] : memref<128x512xbf16, #tpu.memory_space<vmem>>, vector<128x512xbf16>
    %cst_12 = arith.constant dense<0.000000e+00> : vector<8x512xf32>
    %15 = tpu.matmul %13, %14, %cst_12 {dimension_numbers = #tpu.dot_dimension_numbers<[1], [0], [0], [1], [0, 0, 1, 1], [], []>} : vector<8x128xbf16>, vector<128x512xbf16>, vector<8x512xf32> -> vector<8x512xf32>
    %16 = arith.addf %12, %15 : vector<8x512xf32>
    %17 = vector.extract_strided_slice %16 {offsets = [0, 0], sizes = [8, 128], strides = [1, 1]} : vector<8x512xf32> to vector<8x128xf32>
    %18 = arith.negf %17 : vector<8x128xf32>
    %19 = math.exp %18 : vector<8x128xf32>
    %cst_13 = arith.constant 1.000000e+00 : f32
    %20 = vector.broadcast %cst_13 : f32 to vector<8x128xf32>
    %21 = arith.addf %20, %19 : vector<8x128xf32>
    %22 = arith.divf %20, %21 : vector<8x128xf32>
    %23 = vector.extract_strided_slice %16 {offsets = [0, 128], sizes = [8, 128], strides = [1, 1]} : vector<8x512xf32> to vector<8x128xf32>
    %24 = arith.negf %23 : vector<8x128xf32>
    %25 = math.exp %24 : vector<8x128xf32>
    %cst_14 = arith.constant 1.000000e+00 : f32
    %26 = vector.broadcast %cst_14 : f32 to vector<8x128xf32>
    %27 = arith.addf %26, %25 : vector<8x128xf32>
    %28 = arith.divf %26, %27 : vector<8x128xf32>
    %29 = vector.extract_strided_slice %16 {offsets = [0, 256], sizes = [8, 128], strides = [1, 1]} : vector<8x512xf32> to vector<8x128xf32>
    %30 = math.tanh %29 : vector<8x128xf32>
    %31 = vector.extract_strided_slice %16 {offsets = [0, 384], sizes = [8, 128], strides = [1, 1]} : vector<8x512xf32> to vector<8x128xf32>
    %32 = arith.negf %31 : vector<8x128xf32>
    %33 = math.exp %32 : vector<8x128xf32>
    %cst_15 = arith.constant 1.000000e+00 : f32
    %34 = vector.broadcast %cst_15 : f32 to vector<8x128xf32>
    %35 = arith.addf %34, %33 : vector<8x128xf32>
    %36 = arith.divf %34, %35 : vector<8x128xf32>
    %37 = arith.mulf %28, %8 : vector<8x128xf32>
    %38 = arith.mulf %22, %30 : vector<8x128xf32>
    %39 = arith.addf %37, %38 : vector<8x128xf32>
    %40 = math.tanh %39 : vector<8x128xf32>
    %41 = arith.mulf %36, %40 : vector<8x128xf32>
    %42 = arith.index_cast %10 : i32 to index
    %c0_16 = arith.constant 0 : index
    %43 = vector.load %arg10[%42, %c0_16] : memref<64x128xf32, #tpu.memory_space<vmem>>, vector<8x128xf32>
    tpu.vector_store %arg10[%42, %c0_16], %41 {strides = array<i32>} : memref<64x128xf32, #tpu.memory_space<vmem>>, vector<8x128xf32>,
    %c1_i32 = arith.constant 1 : i32
    %c8_i32_17 = arith.constant 8 : i32
    %44 = arith.muli %c1_i32, %c8_i32_17 : i32
    %45 = tpu.assume_multiple %44, 8 : i32
    %46 = arith.index_cast %45 : i32 to index
    %c0_18 = arith.constant 0 : index
    %47 = vector.load %arg9[%46, %c0_18] : memref<64x512xf32, #tpu.memory_space<vmem>>, vector<8x512xf32>
    %48 = arith.truncf %41 : vector<8x128xf32> to vector<8x128xbf16>
    %c0_19 = arith.constant 0 : index
    %c0_20 = arith.constant 0 : index
    %49 = vector.load %arg2[%c0_19, %c0_20] : memref<128x512xbf16, #tpu.memory_space<vmem>>, vector<128x512xbf16>
    %cst_21 = arith.constant dense<0.000000e+00> : vector<8x512xf32>
    %50 = tpu.matmul %48, %49, %cst_21 {dimension_numbers = #tpu.dot_dimension_numbers<[1], [0], [0], [1], [0, 0, 1, 1], [], []>} : vector<8x128xbf16>, vector<128x512xbf16>, vector<8x512xf32> -> vector<8x512xf32>
    %51 = arith.addf %47, %50 : vector<8x512xf32>
    %52 = vector.extract_strided_slice %51 {offsets = [0, 0], sizes = [8, 128], strides = [1, 1]} : vector<8x512xf32> to vector<8x128xf32>
    %53 = arith.negf %52 : vector<8x128xf32>
    %54 = math.exp %53 : vector<8x128xf32>
    %cst_22 = arith.constant 1.000000e+00 : f32
    %55 = vector.broadcast %cst_22 : f32 to vector<8x128xf32>
    %56 = arith.addf %55, %54 : vector<8x128xf32>
    %57 = arith.divf %55, %56 : vector<8x128xf32>
    %58 = vector.extract_strided_slice %51 {offsets = [0, 128], sizes = [8, 128], strides = [1, 1]} : vector<8x512xf32> to vector<8x128xf32>
    %59 = arith.negf %58 : vector<8x128xf32>
    %60 = math.exp %59 : vector<8x128xf32>
    %cst_23 = arith.constant 1.000000e+00 : f32
    %61 = vector.broadcast %cst_23 : f32 to vector<8x128xf32>
    %62 = arith.addf %61, %60 : vector<8x128xf32>
    %63 = arith.divf %61, %62 : vector<8x128xf32>
    %64 = vector.extract_strided_slice %51 {offsets = [0, 256], sizes = [8, 128], strides = [1, 1]} : vector<8x512xf32> to vector<8x128xf32>
    %65 = math.tanh %64 : vector<8x128xf32>
    %66 = vector.extract_strided_slice %51 {offsets = [0, 384], sizes = [8, 128], strides = [1, 1]} : vector<8x512xf32> to vector<8x128xf32>
    %67 = arith.negf %66 : vector<8x128xf32>
    %68 = math.exp %67 : vector<8x128xf32>
    %cst_24 = arith.constant 1.000000e+00 : f32
    %69 = vector.broadcast %cst_24 : f32 to vector<8x128xf32>
    %70 = arith.addf %69, %68 : vector<8x128xf32>
    %71 = arith.divf %69, %70 : vector<8x128xf32>
    %72 = arith.mulf %63, %39 : vector<8x128xf32>
    %73 = arith.mulf %57, %65 : vector<8x128xf32>
    %74 = arith.addf %72, %73 : vector<8x128xf32>
    %75 = math.tanh %74 : vector<8x128xf32>
    %76 = arith.mulf %71, %75 : vector<8x128xf32>
    %77 = arith.index_cast %45 : i32 to index
    %c0_25 = arith.constant 0 : index
    %78 = vector.load %arg10[%77, %c0_25] : memref<64x128xf32, #tpu.memory_space<vmem>>, vector<8x128xf32>
    tpu.vector_store %arg10[%77, %c0_25], %76 {strides = array<i32>} : memref<64x128xf32, #tpu.memory_space<vmem>>, vector<8x128xf32>,
    %c2_i32 = arith.constant 2 : i32
    %c8_i32_26 = arith.constant 8 : i32
    %79 = arith.muli %c2_i32, %c8_i32_26 : i32
    %80 = tpu.assume_multiple %79, 8 : i32
    %81 = arith.index_cast %80 : i32 to index
    %c0_27 = arith.constant 0 : index
    %82 = vector.load %arg9[%81, %c0_27] : memref<64x512xf32, #tpu.memory_space<vmem>>, vector<8x512xf32>
    %83 = arith.truncf %76 : vector<8x128xf32> to vector<8x128xbf16>
    %c0_28 = arith.constant 0 : index
    %c0_29 = arith.constant 0 : index
    %84 = vector.load %arg2[%c0_28, %c0_29] : memref<128x512xbf16, #tpu.memory_space<vmem>>, vector<128x512xbf16>
    %cst_30 = arith.constant dense<0.000000e+00> : vector<8x512xf32>
    %85 = tpu.matmul %83, %84, %cst_30 {dimension_numbers = #tpu.dot_dimension_numbers<[1], [0], [0], [1], [0, 0, 1, 1], [], []>} : vector<8x128xbf16>, vector<128x512xbf16>, vector<8x512xf32> -> vector<8x512xf32>
    %86 = arith.addf %82, %85 : vector<8x512xf32>
    %87 = vector.extract_strided_slice %86 {offsets = [0, 0], sizes = [8, 128], strides = [1, 1]} : vector<8x512xf32> to vector<8x128xf32>
    %88 = arith.negf %87 : vector<8x128xf32>
    %89 = math.exp %88 : vector<8x128xf32>
    %cst_31 = arith.constant 1.000000e+00 : f32
    %90 = vector.broadcast %cst_31 : f32 to vector<8x128xf32>
    %91 = arith.addf %90, %89 : vector<8x128xf32>
    %92 = arith.divf %90, %91 : vector<8x128xf32>
    %93 = vector.extract_strided_slice %86 {offsets = [0, 128], sizes = [8, 128], strides = [1, 1]} : vector<8x512xf32> to vector<8x128xf32>
    %94 = arith.negf %93 : vector<8x128xf32>
    %95 = math.exp %94 : vector<8x128xf32>
    %cst_32 = arith.constant 1.000000e+00 : f32
    %96 = vector.broadcast %cst_32 : f32 to vector<8x128xf32>
    %97 = arith.addf %96, %95 : vector<8x128xf32>
    %98 = arith.divf %96, %97 : vector<8x128xf32>
    %99 = vector.extract_strided_slice %86 {offsets = [0, 256], sizes = [8, 128], strides = [1, 1]} : vector<8x512xf32> to vector<8x128xf32>
    %100 = math.tanh %99 : vector<8x128xf32>
    %101 = vector.extract_strided_slice %86 {offsets = [0, 384], sizes = [8, 128], strides = [1, 1]} : vector<8x512xf32> to vector<8x128xf32>
    %102 = arith.negf %101 : vector<8x128xf32>
    %103 = math.exp %102 : vector<8x128xf32>
    %cst_33 = arith.constant 1.000000e+00 : f32
    %104 = vector.broadcast %cst_33 : f32 to vector<8x128xf32>
    %105 = arith.addf %104, %103 : vector<8x128xf32>
    %106 = arith.divf %104, %105 : vector<8x128xf32>
    %107 = arith.mulf %98, %74 : vector<8x128xf32>
    %108 = arith.mulf %92, %100 : vector<8x128xf32>
    %109 = arith.addf %107, %108 : vector<8x128xf32>
    %110 = math.tanh %109 : vector<8x128xf32>
    %111 = arith.mulf %106, %110 : vector<8x128xf32>
    %112 = arith.index_cast %80 : i32 to index
    %c0_34 = arith.constant 0 : index
    %113 = vector.load %arg10[%112, %c0_34] : memref<64x128xf32, #tpu.memory_space<vmem>>, vector<8x128xf32>
    tpu.vector_store %arg10[%112, %c0_34], %111 {strides = array<i32>} : memref<64x128xf32, #tpu.memory_space<vmem>>, vector<8x128xf32>,
    %c3_i32 = arith.constant 3 : i32
    %c8_i32_35 = arith.constant 8 : i32
    %114 = arith.muli %c3_i32, %c8_i32_35 : i32
    %115 = tpu.assume_multiple %114, 8 : i32
    %116 = arith.index_cast %115 : i32 to index
    %c0_36 = arith.constant 0 : index
    %117 = vector.load %arg9[%116, %c0_36] : memref<64x512xf32, #tpu.memory_space<vmem>>, vector<8x512xf32>
    %118 = arith.truncf %111 : vector<8x128xf32> to vector<8x128xbf16>
    %c0_37 = arith.constant 0 : index
    %c0_38 = arith.constant 0 : index
    %119 = vector.load %arg2[%c0_37, %c0_38] : memref<128x512xbf16, #tpu.memory_space<vmem>>, vector<128x512xbf16>
    %cst_39 = arith.constant dense<0.000000e+00> : vector<8x512xf32>
    %120 = tpu.matmul %118, %119, %cst_39 {dimension_numbers = #tpu.dot_dimension_numbers<[1], [0], [0], [1], [0, 0, 1, 1], [], []>} : vector<8x128xbf16>, vector<128x512xbf16>, vector<8x512xf32> -> vector<8x512xf32>
    %121 = arith.addf %117, %120 : vector<8x512xf32>
    %122 = vector.extract_strided_slice %121 {offsets = [0, 0], sizes = [8, 128], strides = [1, 1]} : vector<8x512xf32> to vector<8x128xf32>
    %123 = arith.negf %122 : vector<8x128xf32>
    %124 = math.exp %123 : vector<8x128xf32>
    %cst_40 = arith.constant 1.000000e+00 : f32
    %125 = vector.broadcast %cst_40 : f32 to vector<8x128xf32>
    %126 = arith.addf %125, %124 : vector<8x128xf32>
    %127 = arith.divf %125, %126 : vector<8x128xf32>
    %128 = vector.extract_strided_slice %121 {offsets = [0, 128], sizes = [8, 128], strides = [1, 1]} : vector<8x512xf32> to vector<8x128xf32>
    %129 = arith.negf %128 : vector<8x128xf32>
    %130 = math.exp %129 : vector<8x128xf32>
    %cst_41 = arith.constant 1.000000e+00 : f32
    %131 = vector.broadcast %cst_41 : f32 to vector<8x128xf32>
    %132 = arith.addf %131, %130 : vector<8x128xf32>
    %133 = arith.divf %131, %132 : vector<8x128xf32>
    %134 = vector.extract_strided_slice %121 {offsets = [0, 256], sizes = [8, 128], strides = [1, 1]} : vector<8x512xf32> to vector<8x128xf32>
    %135 = math.tanh %134 : vector<8x128xf32>
    %136 = vector.extract_strided_slice %121 {offsets = [0, 384], sizes = [8, 128], strides = [1, 1]} : vector<8x512xf32> to vector<8x128xf32>
    %137 = arith.negf %136 : vector<8x128xf32>
    %138 = math.exp %137 : vector<8x128xf32>
    %cst_42 = arith.constant 1.000000e+00 : f32
    %139 = vector.broadcast %cst_42 : f32 to vector<8x128xf32>
    %140 = arith.addf %139, %138 : vector<8x128xf32>
    %141 = arith.divf %139, %140 : vector<8x128xf32>
    %142 = arith.mulf %133, %109 : vector<8x128xf32>
    %143 = arith.mulf %127, %135 : vector<8x128xf32>
    %144 = arith.addf %142, %143 : vector<8x128xf32>
    %145 = math.tanh %144 : vector<8x128xf32>
    %146 = arith.mulf %141, %145 : vector<8x128xf32>
    %147 = arith.index_cast %115 : i32 to index
    %c0_43 = arith.constant 0 : index
    %148 = vector.load %arg10[%147, %c0_43] : memref<64x128xf32, #tpu.memory_space<vmem>>, vector<8x128xf32>
    tpu.vector_store %arg10[%147, %c0_43], %146 {strides = array<i32>} : memref<64x128xf32, #tpu.memory_space<vmem>>, vector<8x128xf32>,
    %c4_i32 = arith.constant 4 : i32
    %c8_i32_44 = arith.constant 8 : i32
    %149 = arith.muli %c4_i32, %c8_i32_44 : i32
    %150 = tpu.assume_multiple %149, 8 : i32
    %151 = arith.index_cast %150 : i32 to index
    %c0_45 = arith.constant 0 : index
    %152 = vector.load %arg9[%151, %c0_45] : memref<64x512xf32, #tpu.memory_space<vmem>>, vector<8x512xf32>
    %153 = arith.truncf %146 : vector<8x128xf32> to vector<8x128xbf16>
    %c0_46 = arith.constant 0 : index
    %c0_47 = arith.constant 0 : index
    %154 = vector.load %arg2[%c0_46, %c0_47] : memref<128x512xbf16, #tpu.memory_space<vmem>>, vector<128x512xbf16>
    %cst_48 = arith.constant dense<0.000000e+00> : vector<8x512xf32>
    %155 = tpu.matmul %153, %154, %cst_48 {dimension_numbers = #tpu.dot_dimension_numbers<[1], [0], [0], [1], [0, 0, 1, 1], [], []>} : vector<8x128xbf16>, vector<128x512xbf16>, vector<8x512xf32> -> vector<8x512xf32>
    %156 = arith.addf %152, %155 : vector<8x512xf32>
    %157 = vector.extract_strided_slice %156 {offsets = [0, 0], sizes = [8, 128], strides = [1, 1]} : vector<8x512xf32> to vector<8x128xf32>
    %158 = arith.negf %157 : vector<8x128xf32>
    %159 = math.exp %158 : vector<8x128xf32>
    %cst_49 = arith.constant 1.000000e+00 : f32
    %160 = vector.broadcast %cst_49 : f32 to vector<8x128xf32>
    %161 = arith.addf %160, %159 : vector<8x128xf32>
    %162 = arith.divf %160, %161 : vector<8x128xf32>
    %163 = vector.extract_strided_slice %156 {offsets = [0, 128], sizes = [8, 128], strides = [1, 1]} : vector<8x512xf32> to vector<8x128xf32>
    %164 = arith.negf %163 : vector<8x128xf32>
    %165 = math.exp %164 : vector<8x128xf32>
    %cst_50 = arith.constant 1.000000e+00 : f32
    %166 = vector.broadcast %cst_50 : f32 to vector<8x128xf32>
    %167 = arith.addf %166, %165 : vector<8x128xf32>
    %168 = arith.divf %166, %167 : vector<8x128xf32>
    %169 = vector.extract_strided_slice %156 {offsets = [0, 256], sizes = [8, 128], strides = [1, 1]} : vector<8x512xf32> to vector<8x128xf32>
    %170 = math.tanh %169 : vector<8x128xf32>
    %171 = vector.extract_strided_slice %156 {offsets = [0, 384], sizes = [8, 128], strides = [1, 1]} : vector<8x512xf32> to vector<8x128xf32>
    %172 = arith.negf %171 : vector<8x128xf32>
    %173 = math.exp %172 : vector<8x128xf32>
    %cst_51 = arith.constant 1.000000e+00 : f32
    %174 = vector.broadcast %cst_51 : f32 to vector<8x128xf32>
    %175 = arith.addf %174, %173 : vector<8x128xf32>
    %176 = arith.divf %174, %175 : vector<8x128xf32>
    %177 = arith.mulf %168, %144 : vector<8x128xf32>
    %178 = arith.mulf %162, %170 : vector<8x128xf32>
    %179 = arith.addf %177, %178 : vector<8x128xf32>
    %180 = math.tanh %179 : vector<8x128xf32>
    %181 = arith.mulf %176, %180 : vector<8x128xf32>
    %182 = arith.index_cast %150 : i32 to index
    %c0_52 = arith.constant 0 : index
    %183 = vector.load %arg10[%182, %c0_52] : memref<64x128xf32, #tpu.memory_space<vmem>>, vector<8x128xf32>
    tpu.vector_store %arg10[%182, %c0_52], %181 {strides = array<i32>} : memref<64x128xf32, #tpu.memory_space<vmem>>, vector<8x128xf32>,
    %c5_i32 = arith.constant 5 : i32
    %c8_i32_53 = arith.constant 8 : i32
    %184 = arith.muli %c5_i32, %c8_i32_53 : i32
    %185 = tpu.assume_multiple %184, 8 : i32
    %186 = arith.index_cast %185 : i32 to index
    %c0_54 = arith.constant 0 : index
    %187 = vector.load %arg9[%186, %c0_54] : memref<64x512xf32, #tpu.memory_space<vmem>>, vector<8x512xf32>
    %188 = arith.truncf %181 : vector<8x128xf32> to vector<8x128xbf16>
    %c0_55 = arith.constant 0 : index
    %c0_56 = arith.constant 0 : index
    %189 = vector.load %arg2[%c0_55, %c0_56] : memref<128x512xbf16, #tpu.memory_space<vmem>>, vector<128x512xbf16>
    %cst_57 = arith.constant dense<0.000000e+00> : vector<8x512xf32>
    %190 = tpu.matmul %188, %189, %cst_57 {dimension_numbers = #tpu.dot_dimension_numbers<[1], [0], [0], [1], [0, 0, 1, 1], [], []>} : vector<8x128xbf16>, vector<128x512xbf16>, vector<8x512xf32> -> vector<8x512xf32>
    %191 = arith.addf %187, %190 : vector<8x512xf32>
    %192 = vector.extract_strided_slice %191 {offsets = [0, 0], sizes = [8, 128], strides = [1, 1]} : vector<8x512xf32> to vector<8x128xf32>
    %193 = arith.negf %192 : vector<8x128xf32>
    %194 = math.exp %193 : vector<8x128xf32>
    %cst_58 = arith.constant 1.000000e+00 : f32
    %195 = vector.broadcast %cst_58 : f32 to vector<8x128xf32>
    %196 = arith.addf %195, %194 : vector<8x128xf32>
    %197 = arith.divf %195, %196 : vector<8x128xf32>
    %198 = vector.extract_strided_slice %191 {offsets = [0, 128], sizes = [8, 128], strides = [1, 1]} : vector<8x512xf32> to vector<8x128xf32>
    %199 = arith.negf %198 : vector<8x128xf32>
    %200 = math.exp %199 : vector<8x128xf32>
    %cst_59 = arith.constant 1.000000e+00 : f32
    %201 = vector.broadcast %cst_59 : f32 to vector<8x128xf32>
    %202 = arith.addf %201, %200 : vector<8x128xf32>
    %203 = arith.divf %201, %202 : vector<8x128xf32>
    %204 = vector.extract_strided_slice %191 {offsets = [0, 256], sizes = [8, 128], strides = [1, 1]} : vector<8x512xf32> to vector<8x128xf32>
    %205 = math.tanh %204 : vector<8x128xf32>
    %206 = vector.extract_strided_slice %191 {offsets = [0, 384], sizes = [8, 128], strides = [1, 1]} : vector<8x512xf32> to vector<8x128xf32>
    %207 = arith.negf %206 : vector<8x128xf32>
    %208 = math.exp %207 : vector<8x128xf32>
    %cst_60 = arith.constant 1.000000e+00 : f32
    %209 = vector.broadcast %cst_60 : f32 to vector<8x128xf32>
    %210 = arith.addf %209, %208 : vector<8x128xf32>
    %211 = arith.divf %209, %210 : vector<8x128xf32>
    %212 = arith.mulf %203, %179 : vector<8x128xf32>
    %213 = arith.mulf %197, %205 : vector<8x128xf32>
    %214 = arith.addf %212, %213 : vector<8x128xf32>
    %215 = math.tanh %214 : vector<8x128xf32>
    %216 = arith.mulf %211, %215 : vector<8x128xf32>
    %217 = arith.index_cast %185 : i32 to index
    %c0_61 = arith.constant 0 : index
    %218 = vector.load %arg10[%217, %c0_61] : memref<64x128xf32, #tpu.memory_space<vmem>>, vector<8x128xf32>
    tpu.vector_store %arg10[%217, %c0_61], %216 {strides = array<i32>} : memref<64x128xf32, #tpu.memory_space<vmem>>, vector<8x128xf32>,
    %c6_i32 = arith.constant 6 : i32
    %c8_i32_62 = arith.constant 8 : i32
    %219 = arith.muli %c6_i32, %c8_i32_62 : i32
    %220 = tpu.assume_multiple %219, 8 : i32
    %221 = arith.index_cast %220 : i32 to index
    %c0_63 = arith.constant 0 : index
    %222 = vector.load %arg9[%221, %c0_63] : memref<64x512xf32, #tpu.memory_space<vmem>>, vector<8x512xf32>
    %223 = arith.truncf %216 : vector<8x128xf32> to vector<8x128xbf16>
    %c0_64 = arith.constant 0 : index
    %c0_65 = arith.constant 0 : index
    %224 = vector.load %arg2[%c0_64, %c0_65] : memref<128x512xbf16, #tpu.memory_space<vmem>>, vector<128x512xbf16>
    %cst_66 = arith.constant dense<0.000000e+00> : vector<8x512xf32>
    %225 = tpu.matmul %223, %224, %cst_66 {dimension_numbers = #tpu.dot_dimension_numbers<[1], [0], [0], [1], [0, 0, 1, 1], [], []>} : vector<8x128xbf16>, vector<128x512xbf16>, vector<8x512xf32> -> vector<8x512xf32>
    %226 = arith.addf %222, %225 : vector<8x512xf32>
    %227 = vector.extract_strided_slice %226 {offsets = [0, 0], sizes = [8, 128], strides = [1, 1]} : vector<8x512xf32> to vector<8x128xf32>
    %228 = arith.negf %227 : vector<8x128xf32>
    %229 = math.exp %228 : vector<8x128xf32>
    %cst_67 = arith.constant 1.000000e+00 : f32
    %230 = vector.broadcast %cst_67 : f32 to vector<8x128xf32>
    %231 = arith.addf %230, %229 : vector<8x128xf32>
    %232 = arith.divf %230, %231 : vector<8x128xf32>
    %233 = vector.extract_strided_slice %226 {offsets = [0, 128], sizes = [8, 128], strides = [1, 1]} : vector<8x512xf32> to vector<8x128xf32>
    %234 = arith.negf %233 : vector<8x128xf32>
    %235 = math.exp %234 : vector<8x128xf32>
    %cst_68 = arith.constant 1.000000e+00 : f32
    %236 = vector.broadcast %cst_68 : f32 to vector<8x128xf32>
    %237 = arith.addf %236, %235 : vector<8x128xf32>
    %238 = arith.divf %236, %237 : vector<8x128xf32>
    %239 = vector.extract_strided_slice %226 {offsets = [0, 256], sizes = [8, 128], strides = [1, 1]} : vector<8x512xf32> to vector<8x128xf32>
    %240 = math.tanh %239 : vector<8x128xf32>
    %241 = vector.extract_strided_slice %226 {offsets = [0, 384], sizes = [8, 128], strides = [1, 1]} : vector<8x512xf32> to vector<8x128xf32>
    %242 = arith.negf %241 : vector<8x128xf32>
    %243 = math.exp %242 : vector<8x128xf32>
    %cst_69 = arith.constant 1.000000e+00 : f32
    %244 = vector.broadcast %cst_69 : f32 to vector<8x128xf32>
    %245 = arith.addf %244, %243 : vector<8x128xf32>
    %246 = arith.divf %244, %245 : vector<8x128xf32>
    %247 = arith.mulf %238, %214 : vector<8x128xf32>
    %248 = arith.mulf %232, %240 : vector<8x128xf32>
    %249 = arith.addf %247, %248 : vector<8x128xf32>
    %250 = math.tanh %249 : vector<8x128xf32>
    %251 = arith.mulf %246, %250 : vector<8x128xf32>
    %252 = arith.index_cast %220 : i32 to index
    %c0_70 = arith.constant 0 : index
    %253 = vector.load %arg10[%252, %c0_70] : memref<64x128xf32, #tpu.memory_space<vmem>>, vector<8x128xf32>
    tpu.vector_store %arg10[%252, %c0_70], %251 {strides = array<i32>} : memref<64x128xf32, #tpu.memory_space<vmem>>, vector<8x128xf32>,
    %c7_i32 = arith.constant 7 : i32
    %c8_i32_71 = arith.constant 8 : i32
    %254 = arith.muli %c7_i32, %c8_i32_71 : i32
    %255 = tpu.assume_multiple %254, 8 : i32
    %256 = arith.index_cast %255 : i32 to index
    %c0_72 = arith.constant 0 : index
    %257 = vector.load %arg9[%256, %c0_72] : memref<64x512xf32, #tpu.memory_space<vmem>>, vector<8x512xf32>
    %258 = arith.truncf %251 : vector<8x128xf32> to vector<8x128xbf16>
    %c0_73 = arith.constant 0 : index
    %c0_74 = arith.constant 0 : index
    %259 = vector.load %arg2[%c0_73, %c0_74] : memref<128x512xbf16, #tpu.memory_space<vmem>>, vector<128x512xbf16>
    %cst_75 = arith.constant dense<0.000000e+00> : vector<8x512xf32>
    %260 = tpu.matmul %258, %259, %cst_75 {dimension_numbers = #tpu.dot_dimension_numbers<[1], [0], [0], [1], [0, 0, 1, 1], [], []>} : vector<8x128xbf16>, vector<128x512xbf16>, vector<8x512xf32> -> vector<8x512xf32>
    %261 = arith.addf %257, %260 : vector<8x512xf32>
    %262 = vector.extract_strided_slice %261 {offsets = [0, 0], sizes = [8, 128], strides = [1, 1]} : vector<8x512xf32> to vector<8x128xf32>
    %263 = arith.negf %262 : vector<8x128xf32>
    %264 = math.exp %263 : vector<8x128xf32>
    %cst_76 = arith.constant 1.000000e+00 : f32
    %265 = vector.broadcast %cst_76 : f32 to vector<8x128xf32>
    %266 = arith.addf %265, %264 : vector<8x128xf32>
    %267 = arith.divf %265, %266 : vector<8x128xf32>
    %268 = vector.extract_strided_slice %261 {offsets = [0, 128], sizes = [8, 128], strides = [1, 1]} : vector<8x512xf32> to vector<8x128xf32>
    %269 = arith.negf %268 : vector<8x128xf32>
    %270 = math.exp %269 : vector<8x128xf32>
    %cst_77 = arith.constant 1.000000e+00 : f32
    %271 = vector.broadcast %cst_77 : f32 to vector<8x128xf32>
    %272 = arith.addf %271, %270 : vector<8x128xf32>
    %273 = arith.divf %271, %272 : vector<8x128xf32>
    %274 = vector.extract_strided_slice %261 {offsets = [0, 256], sizes = [8, 128], strides = [1, 1]} : vector<8x512xf32> to vector<8x128xf32>
    %275 = math.tanh %274 : vector<8x128xf32>
    %276 = vector.extract_strided_slice %261 {offsets = [0, 384], sizes = [8, 128], strides = [1, 1]} : vector<8x512xf32> to vector<8x128xf32>
    %277 = arith.negf %276 : vector<8x128xf32>
    %278 = math.exp %277 : vector<8x128xf32>
    %cst_78 = arith.constant 1.000000e+00 : f32
    %279 = vector.broadcast %cst_78 : f32 to vector<8x128xf32>
    %280 = arith.addf %279, %278 : vector<8x128xf32>
    %281 = arith.divf %279, %280 : vector<8x128xf32>
    %282 = arith.mulf %273, %249 : vector<8x128xf32>
    %283 = arith.mulf %267, %275 : vector<8x128xf32>
    %284 = arith.addf %282, %283 : vector<8x128xf32>
    %285 = math.tanh %284 : vector<8x128xf32>
    %286 = arith.mulf %281, %285 : vector<8x128xf32>
    %287 = arith.index_cast %255 : i32 to index
    %c0_79 = arith.constant 0 : index
    %288 = vector.load %arg10[%287, %c0_79] : memref<64x128xf32, #tpu.memory_space<vmem>>, vector<8x128xf32>
    tpu.vector_store %arg10[%287, %c0_79], %286 {strides = array<i32>} : memref<64x128xf32, #tpu.memory_space<vmem>>, vector<8x128xf32>,
    %c8_i32_80 = arith.constant 8 : i32
    %c0_81 = arith.constant 0 : index
    %c0_82 = arith.constant 0 : index
    %c0_83 = arith.constant 0 : index
    %289 = vector.load %arg7[%c0_81, %c0_82, %c0_83] : memref<2x8x128xf32, #tpu.memory_space<vmem>>, vector<1x8x128xf32>
    %290 = vector.shape_cast %289 : vector<1x8x128xf32> to vector<8x128xf32>
    %291 = vector.shape_cast %286 : vector<8x128xf32> to vector<1x8x128xf32>
    tpu.vector_store %arg7[%c0_81, %c0_82, %c0_83], %291 {strides = array<i32>} : memref<2x8x128xf32, #tpu.memory_space<vmem>>, vector<1x8x128xf32>,
    %c0_84 = arith.constant 0 : index
    %c0_85 = arith.constant 0 : index
    %c0_86 = arith.constant 0 : index
    %292 = vector.load %arg8[%c0_84, %c0_85, %c0_86] : memref<2x8x128xf32, #tpu.memory_space<vmem>>, vector<1x8x128xf32>
    %293 = vector.shape_cast %292 : vector<1x8x128xf32> to vector<8x128xf32>
    %294 = vector.shape_cast %284 : vector<8x128xf32> to vector<1x8x128xf32>
    tpu.vector_store %arg8[%c0_84, %c0_85, %c0_86], %294 {strides = array<i32>} : memref<2x8x128xf32, #tpu.memory_space<vmem>>, vector<1x8x128xf32>,
    %c0_87 = arith.constant 0 : index
    %c0_88 = arith.constant 0 : index
    %295 = vector.load %arg10[%c0_87, %c0_88] : memref<64x128xf32, #tpu.memory_space<vmem>>, vector<64x128xf32>
    %296 = arith.truncf %295 : vector<64x128xf32> to vector<64x128xbf16>
    %c0_89 = arith.constant 0 : index
    %c0_90 = arith.constant 0 : index
    %297 = vector.load %arg4[%c0_89, %c0_90] : memref<128x512xbf16, #tpu.memory_space<vmem>>, vector<128x512xbf16>
    %cst_91 = arith.constant dense<0.000000e+00> : vector<64x512xf32>
    %298 = tpu.matmul %296, %297, %cst_91 {dimension_numbers = #tpu.dot_dimension_numbers<[1], [0], [0], [1], [0, 0, 1, 1], [], []>} : vector<64x128xbf16>, vector<128x512xbf16>, vector<64x512xf32> -> vector<64x512xf32>
    %c0_92 = arith.constant 0 : index
    %c0_93 = arith.constant 0 : index
    %299 = vector.load %arg6[%c0_92, %c0_93] : memref<1x512xf32, #tpu.memory_space<vmem>>, vector<1x512xf32>
    %300 = vector.broadcast %299 : vector<1x512xf32> to vector<64x512xf32>
    %301 = arith.addf %298, %300 : vector<64x512xf32>
    %c0_94 = arith.constant 0 : index
    %c0_95 = arith.constant 0 : index
    %302 = vector.load %arg9[%c0_94, %c0_95] : memref<64x512xf32, #tpu.memory_space<vmem>>, vector<64x512xf32>
    tpu.vector_store %arg9[%c0_94, %c0_95], %301 {strides = array<i32>} : memref<64x512xf32, #tpu.memory_space<vmem>>, vector<64x512xf32>,
    %cst_96 = arith.constant 0.000000e+00 : f32
    %303 = vector.broadcast %cst_96 : f32 to vector<8x128xf32>
    %cst_97 = arith.constant 0.000000e+00 : f32
    %304 = vector.broadcast %cst_97 : f32 to vector<8x128xf32>
    %c0_i32_98 = arith.constant 0 : i32
    %c8_i32_99 = arith.constant 8 : i32
    %305 = arith.muli %c0_i32_98, %c8_i32_99 : i32
    %306 = tpu.assume_multiple %305, 8 : i32
    %307 = arith.index_cast %306 : i32 to index
    %c0_100 = arith.constant 0 : index
    %308 = vector.load %arg9[%307, %c0_100] : memref<64x512xf32, #tpu.memory_space<vmem>>, vector<8x512xf32>
    %309 = arith.truncf %303 : vector<8x128xf32> to vector<8x128xbf16>
    %c0_101 = arith.constant 0 : index
    %c0_102 = arith.constant 0 : index
    %310 = vector.load %arg5[%c0_101, %c0_102] : memref<128x512xbf16, #tpu.memory_space<vmem>>, vector<128x512xbf16>
    %cst_103 = arith.constant dense<0.000000e+00> : vector<8x512xf32>
    %311 = tpu.matmul %309, %310, %cst_103 {dimension_numbers = #tpu.dot_dimension_numbers<[1], [0], [0], [1], [0, 0, 1, 1], [], []>} : vector<8x128xbf16>, vector<128x512xbf16>, vector<8x512xf32> -> vector<8x512xf32>
    %312 = arith.addf %308, %311 : vector<8x512xf32>
    %313 = vector.extract_strided_slice %312 {offsets = [0, 0], sizes = [8, 128], strides = [1, 1]} : vector<8x512xf32> to vector<8x128xf32>
    %314 = arith.negf %313 : vector<8x128xf32>
    %315 = math.exp %314 : vector<8x128xf32>
    %cst_104 = arith.constant 1.000000e+00 : f32
    %316 = vector.broadcast %cst_104 : f32 to vector<8x128xf32>
    %317 = arith.addf %316, %315 : vector<8x128xf32>
    %318 = arith.divf %316, %317 : vector<8x128xf32>
    %319 = vector.extract_strided_slice %312 {offsets = [0, 128], sizes = [8, 128], strides = [1, 1]} : vector<8x512xf32> to vector<8x128xf32>
    %320 = arith.negf %319 : vector<8x128xf32>
    %321 = math.exp %320 : vector<8x128xf32>
    %cst_105 = arith.constant 1.000000e+00 : f32
    %322 = vector.broadcast %cst_105 : f32 to vector<8x128xf32>
    %323 = arith.addf %322, %321 : vector<8x128xf32>
    %324 = arith.divf %322, %323 : vector<8x128xf32>
    %325 = vector.extract_strided_slice %312 {offsets = [0, 256], sizes = [8, 128], strides = [1, 1]} : vector<8x512xf32> to vector<8x128xf32>
    %326 = math.tanh %325 : vector<8x128xf32>
    %327 = vector.extract_strided_slice %312 {offsets = [0, 384], sizes = [8, 128], strides = [1, 1]} : vector<8x512xf32> to vector<8x128xf32>
    %328 = arith.negf %327 : vector<8x128xf32>
    %329 = math.exp %328 : vector<8x128xf32>
    %cst_106 = arith.constant 1.000000e+00 : f32
    %330 = vector.broadcast %cst_106 : f32 to vector<8x128xf32>
    %331 = arith.addf %330, %329 : vector<8x128xf32>
    %332 = arith.divf %330, %331 : vector<8x128xf32>
    %333 = arith.mulf %324, %304 : vector<8x128xf32>
    %334 = arith.mulf %318, %326 : vector<8x128xf32>
    %335 = arith.addf %333, %334 : vector<8x128xf32>
    %336 = math.tanh %335 : vector<8x128xf32>
    %337 = arith.mulf %332, %336 : vector<8x128xf32>
    %338 = arith.index_cast %306 : i32 to index
    %c0_107 = arith.constant 0 : index
    %339 = vector.load %arg10[%338, %c0_107] : memref<64x128xf32, #tpu.memory_space<vmem>>, vector<8x128xf32>
    tpu.vector_store %arg10[%338, %c0_107], %337 {strides = array<i32>} : memref<64x128xf32, #tpu.memory_space<vmem>>, vector<8x128xf32>,
    %c1_i32_108 = arith.constant 1 : i32
    %c8_i32_109 = arith.constant 8 : i32
    %340 = arith.muli %c1_i32_108, %c8_i32_109 : i32
    %341 = tpu.assume_multiple %340, 8 : i32
    %342 = arith.index_cast %341 : i32 to index
    %c0_110 = arith.constant 0 : index
    %343 = vector.load %arg9[%342, %c0_110] : memref<64x512xf32, #tpu.memory_space<vmem>>, vector<8x512xf32>
    %344 = arith.truncf %337 : vector<8x128xf32> to vector<8x128xbf16>
    %c0_111 = arith.constant 0 : index
    %c0_112 = arith.constant 0 : index
    %345 = vector.load %arg5[%c0_111, %c0_112] : memref<128x512xbf16, #tpu.memory_space<vmem>>, vector<128x512xbf16>
    %cst_113 = arith.constant dense<0.000000e+00> : vector<8x512xf32>
    %346 = tpu.matmul %344, %345, %cst_113 {dimension_numbers = #tpu.dot_dimension_numbers<[1], [0], [0], [1], [0, 0, 1, 1], [], []>} : vector<8x128xbf16>, vector<128x512xbf16>, vector<8x512xf32> -> vector<8x512xf32>
    %347 = arith.addf %343, %346 : vector<8x512xf32>
    %348 = vector.extract_strided_slice %347 {offsets = [0, 0], sizes = [8, 128], strides = [1, 1]} : vector<8x512xf32> to vector<8x128xf32>
    %349 = arith.negf %348 : vector<8x128xf32>
    %350 = math.exp %349 : vector<8x128xf32>
    %cst_114 = arith.constant 1.000000e+00 : f32
    %351 = vector.broadcast %cst_114 : f32 to vector<8x128xf32>
    %352 = arith.addf %351, %350 : vector<8x128xf32>
    %353 = arith.divf %351, %352 : vector<8x128xf32>
    %354 = vector.extract_strided_slice %347 {offsets = [0, 128], sizes = [8, 128], strides = [1, 1]} : vector<8x512xf32> to vector<8x128xf32>
    %355 = arith.negf %354 : vector<8x128xf32>
    %356 = math.exp %355 : vector<8x128xf32>
    %cst_115 = arith.constant 1.000000e+00 : f32
    %357 = vector.broadcast %cst_115 : f32 to vector<8x128xf32>
    %358 = arith.addf %357, %356 : vector<8x128xf32>
    %359 = arith.divf %357, %358 : vector<8x128xf32>
    %360 = vector.extract_strided_slice %347 {offsets = [0, 256], sizes = [8, 128], strides = [1, 1]} : vector<8x512xf32> to vector<8x128xf32>
    %361 = math.tanh %360 : vector<8x128xf32>
    %362 = vector.extract_strided_slice %347 {offsets = [0, 384], sizes = [8, 128], strides = [1, 1]} : vector<8x512xf32> to vector<8x128xf32>
    %363 = arith.negf %362 : vector<8x128xf32>
    %364 = math.exp %363 : vector<8x128xf32>
    %cst_116 = arith.constant 1.000000e+00 : f32
    %365 = vector.broadcast %cst_116 : f32 to vector<8x128xf32>
    %366 = arith.addf %365, %364 : vector<8x128xf32>
    %367 = arith.divf %365, %366 : vector<8x128xf32>
    %368 = arith.mulf %359, %335 : vector<8x128xf32>
    %369 = arith.mulf %353, %361 : vector<8x128xf32>
    %370 = arith.addf %368, %369 : vector<8x128xf32>
    %371 = math.tanh %370 : vector<8x128xf32>
    %372 = arith.mulf %367, %371 : vector<8x128xf32>
    %373 = arith.index_cast %341 : i32 to index
    %c0_117 = arith.constant 0 : index
    %374 = vector.load %arg10[%373, %c0_117] : memref<64x128xf32, #tpu.memory_space<vmem>>, vector<8x128xf32>
    tpu.vector_store %arg10[%373, %c0_117], %372 {strides = array<i32>} : memref<64x128xf32, #tpu.memory_space<vmem>>, vector<8x128xf32>,
    %c2_i32_118 = arith.constant 2 : i32
    %c8_i32_119 = arith.constant 8 : i32
    %375 = arith.muli %c2_i32_118, %c8_i32_119 : i32
    %376 = tpu.assume_multiple %375, 8 : i32
    %377 = arith.index_cast %376 : i32 to index
    %c0_120 = arith.constant 0 : index
    %378 = vector.load %arg9[%377, %c0_120] : memref<64x512xf32, #tpu.memory_space<vmem>>, vector<8x512xf32>
    %379 = arith.truncf %372 : vector<8x128xf32> to vector<8x128xbf16>
    %c0_121 = arith.constant 0 : index
    %c0_122 = arith.constant 0 : index
    %380 = vector.load %arg5[%c0_121, %c0_122] : memref<128x512xbf16, #tpu.memory_space<vmem>>, vector<128x512xbf16>
    %cst_123 = arith.constant dense<0.000000e+00> : vector<8x512xf32>
    %381 = tpu.matmul %379, %380, %cst_123 {dimension_numbers = #tpu.dot_dimension_numbers<[1], [0], [0], [1], [0, 0, 1, 1], [], []>} : vector<8x128xbf16>, vector<128x512xbf16>, vector<8x512xf32> -> vector<8x512xf32>
    %382 = arith.addf %378, %381 : vector<8x512xf32>
    %383 = vector.extract_strided_slice %382 {offsets = [0, 0], sizes = [8, 128], strides = [1, 1]} : vector<8x512xf32> to vector<8x128xf32>
    %384 = arith.negf %383 : vector<8x128xf32>
    %385 = math.exp %384 : vector<8x128xf32>
    %cst_124 = arith.constant 1.000000e+00 : f32
    %386 = vector.broadcast %cst_124 : f32 to vector<8x128xf32>
    %387 = arith.addf %386, %385 : vector<8x128xf32>
    %388 = arith.divf %386, %387 : vector<8x128xf32>
    %389 = vector.extract_strided_slice %382 {offsets = [0, 128], sizes = [8, 128], strides = [1, 1]} : vector<8x512xf32> to vector<8x128xf32>
    %390 = arith.negf %389 : vector<8x128xf32>
    %391 = math.exp %390 : vector<8x128xf32>
    %cst_125 = arith.constant 1.000000e+00 : f32
    %392 = vector.broadcast %cst_125 : f32 to vector<8x128xf32>
    %393 = arith.addf %392, %391 : vector<8x128xf32>
    %394 = arith.divf %392, %393 : vector<8x128xf32>
    %395 = vector.extract_strided_slice %382 {offsets = [0, 256], sizes = [8, 128], strides = [1, 1]} : vector<8x512xf32> to vector<8x128xf32>
    %396 = math.tanh %395 : vector<8x128xf32>
    %397 = vector.extract_strided_slice %382 {offsets = [0, 384], sizes = [8, 128], strides = [1, 1]} : vector<8x512xf32> to vector<8x128xf32>
    %398 = arith.negf %397 : vector<8x128xf32>
    %399 = math.exp %398 : vector<8x128xf32>
    %cst_126 = arith.constant 1.000000e+00 : f32
    %400 = vector.broadcast %cst_126 : f32 to vector<8x128xf32>
    %401 = arith.addf %400, %399 : vector<8x128xf32>
    %402 = arith.divf %400, %401 : vector<8x128xf32>
    %403 = arith.mulf %394, %370 : vector<8x128xf32>
    %404 = arith.mulf %388, %396 : vector<8x128xf32>
    %405 = arith.addf %403, %404 : vector<8x128xf32>
    %406 = math.tanh %405 : vector<8x128xf32>
    %407 = arith.mulf %402, %406 : vector<8x128xf32>
    %408 = arith.index_cast %376 : i32 to index
    %c0_127 = arith.constant 0 : index
    %409 = vector.load %arg10[%408, %c0_127] : memref<64x128xf32, #tpu.memory_space<vmem>>, vector<8x128xf32>
    tpu.vector_store %arg10[%408, %c0_127], %407 {strides = array<i32>} : memref<64x128xf32, #tpu.memory_space<vmem>>, vector<8x128xf32>,
    %c3_i32_128 = arith.constant 3 : i32
    %c8_i32_129 = arith.constant 8 : i32
    %410 = arith.muli %c3_i32_128, %c8_i32_129 : i32
    %411 = tpu.assume_multiple %410, 8 : i32
    %412 = arith.index_cast %411 : i32 to index
    %c0_130 = arith.constant 0 : index
    %413 = vector.load %arg9[%412, %c0_130] : memref<64x512xf32, #tpu.memory_space<vmem>>, vector<8x512xf32>
    %414 = arith.truncf %407 : vector<8x128xf32> to vector<8x128xbf16>
    %c0_131 = arith.constant 0 : index
    %c0_132 = arith.constant 0 : index
    %415 = vector.load %arg5[%c0_131, %c0_132] : memref<128x512xbf16, #tpu.memory_space<vmem>>, vector<128x512xbf16>
    %cst_133 = arith.constant dense<0.000000e+00> : vector<8x512xf32>
    %416 = tpu.matmul %414, %415, %cst_133 {dimension_numbers = #tpu.dot_dimension_numbers<[1], [0], [0], [1], [0, 0, 1, 1], [], []>} : vector<8x128xbf16>, vector<128x512xbf16>, vector<8x512xf32> -> vector<8x512xf32>
    %417 = arith.addf %413, %416 : vector<8x512xf32>
    %418 = vector.extract_strided_slice %417 {offsets = [0, 0], sizes = [8, 128], strides = [1, 1]} : vector<8x512xf32> to vector<8x128xf32>
    %419 = arith.negf %418 : vector<8x128xf32>
    %420 = math.exp %419 : vector<8x128xf32>
    %cst_134 = arith.constant 1.000000e+00 : f32
    %421 = vector.broadcast %cst_134 : f32 to vector<8x128xf32>
    %422 = arith.addf %421, %420 : vector<8x128xf32>
    %423 = arith.divf %421, %422 : vector<8x128xf32>
    %424 = vector.extract_strided_slice %417 {offsets = [0, 128], sizes = [8, 128], strides = [1, 1]} : vector<8x512xf32> to vector<8x128xf32>
    %425 = arith.negf %424 : vector<8x128xf32>
    %426 = math.exp %425 : vector<8x128xf32>
    %cst_135 = arith.constant 1.000000e+00 : f32
    %427 = vector.broadcast %cst_135 : f32 to vector<8x128xf32>
    %428 = arith.addf %427, %426 : vector<8x128xf32>
    %429 = arith.divf %427, %428 : vector<8x128xf32>
    %430 = vector.extract_strided_slice %417 {offsets = [0, 256], sizes = [8, 128], strides = [1, 1]} : vector<8x512xf32> to vector<8x128xf32>
    %431 = math.tanh %430 : vector<8x128xf32>
    %432 = vector.extract_strided_slice %417 {offsets = [0, 384], sizes = [8, 128], strides = [1, 1]} : vector<8x512xf32> to vector<8x128xf32>
    %433 = arith.negf %432 : vector<8x128xf32>
    %434 = math.exp %433 : vector<8x128xf32>
    %cst_136 = arith.constant 1.000000e+00 : f32
    %435 = vector.broadcast %cst_136 : f32 to vector<8x128xf32>
    %436 = arith.addf %435, %434 : vector<8x128xf32>
    %437 = arith.divf %435, %436 : vector<8x128xf32>
    %438 = arith.mulf %429, %405 : vector<8x128xf32>
    %439 = arith.mulf %423, %431 : vector<8x128xf32>
    %440 = arith.addf %438, %439 : vector<8x128xf32>
    %441 = math.tanh %440 : vector<8x128xf32>
    %442 = arith.mulf %437, %441 : vector<8x128xf32>
    %443 = arith.index_cast %411 : i32 to index
    %c0_137 = arith.constant 0 : index
    %444 = vector.load %arg10[%443, %c0_137] : memref<64x128xf32, #tpu.memory_space<vmem>>, vector<8x128xf32>
    tpu.vector_store %arg10[%443, %c0_137], %442 {strides = array<i32>} : memref<64x128xf32, #tpu.memory_space<vmem>>, vector<8x128xf32>,
    %c4_i32_138 = arith.constant 4 : i32
    %c8_i32_139 = arith.constant 8 : i32
    %445 = arith.muli %c4_i32_138, %c8_i32_139 : i32
    %446 = tpu.assume_multiple %445, 8 : i32
    %447 = arith.index_cast %446 : i32 to index
    %c0_140 = arith.constant 0 : index
    %448 = vector.load %arg9[%447, %c0_140] : memref<64x512xf32, #tpu.memory_space<vmem>>, vector<8x512xf32>
    %449 = arith.truncf %442 : vector<8x128xf32> to vector<8x128xbf16>
    %c0_141 = arith.constant 0 : index
    %c0_142 = arith.constant 0 : index
    %450 = vector.load %arg5[%c0_141, %c0_142] : memref<128x512xbf16, #tpu.memory_space<vmem>>, vector<128x512xbf16>
    %cst_143 = arith.constant dense<0.000000e+00> : vector<8x512xf32>
    %451 = tpu.matmul %449, %450, %cst_143 {dimension_numbers = #tpu.dot_dimension_numbers<[1], [0], [0], [1], [0, 0, 1, 1], [], []>} : vector<8x128xbf16>, vector<128x512xbf16>, vector<8x512xf32> -> vector<8x512xf32>
    %452 = arith.addf %448, %451 : vector<8x512xf32>
    %453 = vector.extract_strided_slice %452 {offsets = [0, 0], sizes = [8, 128], strides = [1, 1]} : vector<8x512xf32> to vector<8x128xf32>
    %454 = arith.negf %453 : vector<8x128xf32>
    %455 = math.exp %454 : vector<8x128xf32>
    %cst_144 = arith.constant 1.000000e+00 : f32
    %456 = vector.broadcast %cst_144 : f32 to vector<8x128xf32>
    %457 = arith.addf %456, %455 : vector<8x128xf32>
    %458 = arith.divf %456, %457 : vector<8x128xf32>
    %459 = vector.extract_strided_slice %452 {offsets = [0, 128], sizes = [8, 128], strides = [1, 1]} : vector<8x512xf32> to vector<8x128xf32>
    %460 = arith.negf %459 : vector<8x128xf32>
    %461 = math.exp %460 : vector<8x128xf32>
    %cst_145 = arith.constant 1.000000e+00 : f32
    %462 = vector.broadcast %cst_145 : f32 to vector<8x128xf32>
    %463 = arith.addf %462, %461 : vector<8x128xf32>
    %464 = arith.divf %462, %463 : vector<8x128xf32>
    %465 = vector.extract_strided_slice %452 {offsets = [0, 256], sizes = [8, 128], strides = [1, 1]} : vector<8x512xf32> to vector<8x128xf32>
    %466 = math.tanh %465 : vector<8x128xf32>
    %467 = vector.extract_strided_slice %452 {offsets = [0, 384], sizes = [8, 128], strides = [1, 1]} : vector<8x512xf32> to vector<8x128xf32>
    %468 = arith.negf %467 : vector<8x128xf32>
    %469 = math.exp %468 : vector<8x128xf32>
    %cst_146 = arith.constant 1.000000e+00 : f32
    %470 = vector.broadcast %cst_146 : f32 to vector<8x128xf32>
    %471 = arith.addf %470, %469 : vector<8x128xf32>
    %472 = arith.divf %470, %471 : vector<8x128xf32>
    %473 = arith.mulf %464, %440 : vector<8x128xf32>
    %474 = arith.mulf %458, %466 : vector<8x128xf32>
    %475 = arith.addf %473, %474 : vector<8x128xf32>
    %476 = math.tanh %475 : vector<8x128xf32>
    %477 = arith.mulf %472, %476 : vector<8x128xf32>
    %478 = arith.index_cast %446 : i32 to index
    %c0_147 = arith.constant 0 : index
    %479 = vector.load %arg10[%478, %c0_147] : memref<64x128xf32, #tpu.memory_space<vmem>>, vector<8x128xf32>
    tpu.vector_store %arg10[%478, %c0_147], %477 {strides = array<i32>} : memref<64x128xf32, #tpu.memory_space<vmem>>, vector<8x128xf32>,
    %c5_i32_148 = arith.constant 5 : i32
    %c8_i32_149 = arith.constant 8 : i32
    %480 = arith.muli %c5_i32_148, %c8_i32_149 : i32
    %481 = tpu.assume_multiple %480, 8 : i32
    %482 = arith.index_cast %481 : i32 to index
    %c0_150 = arith.constant 0 : index
    %483 = vector.load %arg9[%482, %c0_150] : memref<64x512xf32, #tpu.memory_space<vmem>>, vector<8x512xf32>
    %484 = arith.truncf %477 : vector<8x128xf32> to vector<8x128xbf16>
    %c0_151 = arith.constant 0 : index
    %c0_152 = arith.constant 0 : index
    %485 = vector.load %arg5[%c0_151, %c0_152] : memref<128x512xbf16, #tpu.memory_space<vmem>>, vector<128x512xbf16>
    %cst_153 = arith.constant dense<0.000000e+00> : vector<8x512xf32>
    %486 = tpu.matmul %484, %485, %cst_153 {dimension_numbers = #tpu.dot_dimension_numbers<[1], [0], [0], [1], [0, 0, 1, 1], [], []>} : vector<8x128xbf16>, vector<128x512xbf16>, vector<8x512xf32> -> vector<8x512xf32>
    %487 = arith.addf %483, %486 : vector<8x512xf32>
    %488 = vector.extract_strided_slice %487 {offsets = [0, 0], sizes = [8, 128], strides = [1, 1]} : vector<8x512xf32> to vector<8x128xf32>
    %489 = arith.negf %488 : vector<8x128xf32>
    %490 = math.exp %489 : vector<8x128xf32>
    %cst_154 = arith.constant 1.000000e+00 : f32
    %491 = vector.broadcast %cst_154 : f32 to vector<8x128xf32>
    %492 = arith.addf %491, %490 : vector<8x128xf32>
    %493 = arith.divf %491, %492 : vector<8x128xf32>
    %494 = vector.extract_strided_slice %487 {offsets = [0, 128], sizes = [8, 128], strides = [1, 1]} : vector<8x512xf32> to vector<8x128xf32>
    %495 = arith.negf %494 : vector<8x128xf32>
    %496 = math.exp %495 : vector<8x128xf32>
    %cst_155 = arith.constant 1.000000e+00 : f32
    %497 = vector.broadcast %cst_155 : f32 to vector<8x128xf32>
    %498 = arith.addf %497, %496 : vector<8x128xf32>
    %499 = arith.divf %497, %498 : vector<8x128xf32>
    %500 = vector.extract_strided_slice %487 {offsets = [0, 256], sizes = [8, 128], strides = [1, 1]} : vector<8x512xf32> to vector<8x128xf32>
    %501 = math.tanh %500 : vector<8x128xf32>
    %502 = vector.extract_strided_slice %487 {offsets = [0, 384], sizes = [8, 128], strides = [1, 1]} : vector<8x512xf32> to vector<8x128xf32>
    %503 = arith.negf %502 : vector<8x128xf32>
    %504 = math.exp %503 : vector<8x128xf32>
    %cst_156 = arith.constant 1.000000e+00 : f32
    %505 = vector.broadcast %cst_156 : f32 to vector<8x128xf32>
    %506 = arith.addf %505, %504 : vector<8x128xf32>
    %507 = arith.divf %505, %506 : vector<8x128xf32>
    %508 = arith.mulf %499, %475 : vector<8x128xf32>
    %509 = arith.mulf %493, %501 : vector<8x128xf32>
    %510 = arith.addf %508, %509 : vector<8x128xf32>
    %511 = math.tanh %510 : vector<8x128xf32>
    %512 = arith.mulf %507, %511 : vector<8x128xf32>
    %513 = arith.index_cast %481 : i32 to index
    %c0_157 = arith.constant 0 : index
    %514 = vector.load %arg10[%513, %c0_157] : memref<64x128xf32, #tpu.memory_space<vmem>>, vector<8x128xf32>
    tpu.vector_store %arg10[%513, %c0_157], %512 {strides = array<i32>} : memref<64x128xf32, #tpu.memory_space<vmem>>, vector<8x128xf32>,
    %c6_i32_158 = arith.constant 6 : i32
    %c8_i32_159 = arith.constant 8 : i32
    %515 = arith.muli %c6_i32_158, %c8_i32_159 : i32
    %516 = tpu.assume_multiple %515, 8 : i32
    %517 = arith.index_cast %516 : i32 to index
    %c0_160 = arith.constant 0 : index
    %518 = vector.load %arg9[%517, %c0_160] : memref<64x512xf32, #tpu.memory_space<vmem>>, vector<8x512xf32>
    %519 = arith.truncf %512 : vector<8x128xf32> to vector<8x128xbf16>
    %c0_161 = arith.constant 0 : index
    %c0_162 = arith.constant 0 : index
    %520 = vector.load %arg5[%c0_161, %c0_162] : memref<128x512xbf16, #tpu.memory_space<vmem>>, vector<128x512xbf16>
    %cst_163 = arith.constant dense<0.000000e+00> : vector<8x512xf32>
    %521 = tpu.matmul %519, %520, %cst_163 {dimension_numbers = #tpu.dot_dimension_numbers<[1], [0], [0], [1], [0, 0, 1, 1], [], []>} : vector<8x128xbf16>, vector<128x512xbf16>, vector<8x512xf32> -> vector<8x512xf32>
    %522 = arith.addf %518, %521 : vector<8x512xf32>
    %523 = vector.extract_strided_slice %522 {offsets = [0, 0], sizes = [8, 128], strides = [1, 1]} : vector<8x512xf32> to vector<8x128xf32>
    %524 = arith.negf %523 : vector<8x128xf32>
    %525 = math.exp %524 : vector<8x128xf32>
    %cst_164 = arith.constant 1.000000e+00 : f32
    %526 = vector.broadcast %cst_164 : f32 to vector<8x128xf32>
    %527 = arith.addf %526, %525 : vector<8x128xf32>
    %528 = arith.divf %526, %527 : vector<8x128xf32>
    %529 = vector.extract_strided_slice %522 {offsets = [0, 128], sizes = [8, 128], strides = [1, 1]} : vector<8x512xf32> to vector<8x128xf32>
    %530 = arith.negf %529 : vector<8x128xf32>
    %531 = math.exp %530 : vector<8x128xf32>
    %cst_165 = arith.constant 1.000000e+00 : f32
    %532 = vector.broadcast %cst_165 : f32 to vector<8x128xf32>
    %533 = arith.addf %532, %531 : vector<8x128xf32>
    %534 = arith.divf %532, %533 : vector<8x128xf32>
    %535 = vector.extract_strided_slice %522 {offsets = [0, 256], sizes = [8, 128], strides = [1, 1]} : vector<8x512xf32> to vector<8x128xf32>
    %536 = math.tanh %535 : vector<8x128xf32>
    %537 = vector.extract_strided_slice %522 {offsets = [0, 384], sizes = [8, 128], strides = [1, 1]} : vector<8x512xf32> to vector<8x128xf32>
    %538 = arith.negf %537 : vector<8x128xf32>
    %539 = math.exp %538 : vector<8x128xf32>
    %cst_166 = arith.constant 1.000000e+00 : f32
    %540 = vector.broadcast %cst_166 : f32 to vector<8x128xf32>
    %541 = arith.addf %540, %539 : vector<8x128xf32>
    %542 = arith.divf %540, %541 : vector<8x128xf32>
    %543 = arith.mulf %534, %510 : vector<8x128xf32>
    %544 = arith.mulf %528, %536 : vector<8x128xf32>
    %545 = arith.addf %543, %544 : vector<8x128xf32>
    %546 = math.tanh %545 : vector<8x128xf32>
    %547 = arith.mulf %542, %546 : vector<8x128xf32>
    %548 = arith.index_cast %516 : i32 to index
    %c0_167 = arith.constant 0 : index
    %549 = vector.load %arg10[%548, %c0_167] : memref<64x128xf32, #tpu.memory_space<vmem>>, vector<8x128xf32>
    tpu.vector_store %arg10[%548, %c0_167], %547 {strides = array<i32>} : memref<64x128xf32, #tpu.memory_space<vmem>>, vector<8x128xf32>,
    %c7_i32_168 = arith.constant 7 : i32
    %c8_i32_169 = arith.constant 8 : i32
    %550 = arith.muli %c7_i32_168, %c8_i32_169 : i32
    %551 = tpu.assume_multiple %550, 8 : i32
    %552 = arith.index_cast %551 : i32 to index
    %c0_170 = arith.constant 0 : index
    %553 = vector.load %arg9[%552, %c0_170] : memref<64x512xf32, #tpu.memory_space<vmem>>, vector<8x512xf32>
    %554 = arith.truncf %547 : vector<8x128xf32> to vector<8x128xbf16>
    %c0_171 = arith.constant 0 : index
    %c0_172 = arith.constant 0 : index
    %555 = vector.load %arg5[%c0_171, %c0_172] : memref<128x512xbf16, #tpu.memory_space<vmem>>, vector<128x512xbf16>
    %cst_173 = arith.constant dense<0.000000e+00> : vector<8x512xf32>
    %556 = tpu.matmul %554, %555, %cst_173 {dimension_numbers = #tpu.dot_dimension_numbers<[1], [0], [0], [1], [0, 0, 1, 1], [], []>} : vector<8x128xbf16>, vector<128x512xbf16>, vector<8x512xf32> -> vector<8x512xf32>
    %557 = arith.addf %553, %556 : vector<8x512xf32>
    %558 = vector.extract_strided_slice %557 {offsets = [0, 0], sizes = [8, 128], strides = [1, 1]} : vector<8x512xf32> to vector<8x128xf32>
    %559 = arith.negf %558 : vector<8x128xf32>
    %560 = math.exp %559 : vector<8x128xf32>
    %cst_174 = arith.constant 1.000000e+00 : f32
    %561 = vector.broadcast %cst_174 : f32 to vector<8x128xf32>
    %562 = arith.addf %561, %560 : vector<8x128xf32>
    %563 = arith.divf %561, %562 : vector<8x128xf32>
    %564 = vector.extract_strided_slice %557 {offsets = [0, 128], sizes = [8, 128], strides = [1, 1]} : vector<8x512xf32> to vector<8x128xf32>
    %565 = arith.negf %564 : vector<8x128xf32>
    %566 = math.exp %565 : vector<8x128xf32>
    %cst_175 = arith.constant 1.000000e+00 : f32
    %567 = vector.broadcast %cst_175 : f32 to vector<8x128xf32>
    %568 = arith.addf %567, %566 : vector<8x128xf32>
    %569 = arith.divf %567, %568 : vector<8x128xf32>
    %570 = vector.extract_strided_slice %557 {offsets = [0, 256], sizes = [8, 128], strides = [1, 1]} : vector<8x512xf32> to vector<8x128xf32>
    %571 = math.tanh %570 : vector<8x128xf32>
    %572 = vector.extract_strided_slice %557 {offsets = [0, 384], sizes = [8, 128], strides = [1, 1]} : vector<8x512xf32> to vector<8x128xf32>
    %573 = arith.negf %572 : vector<8x128xf32>
    %574 = math.exp %573 : vector<8x128xf32>
    %cst_176 = arith.constant 1.000000e+00 : f32
    %575 = vector.broadcast %cst_176 : f32 to vector<8x128xf32>
    %576 = arith.addf %575, %574 : vector<8x128xf32>
    %577 = arith.divf %575, %576 : vector<8x128xf32>
    %578 = arith.mulf %569, %545 : vector<8x128xf32>
    %579 = arith.mulf %563, %571 : vector<8x128xf32>
    %580 = arith.addf %578, %579 : vector<8x128xf32>
    %581 = math.tanh %580 : vector<8x128xf32>
    %582 = arith.mulf %577, %581 : vector<8x128xf32>
    %583 = arith.index_cast %551 : i32 to index
    %c0_177 = arith.constant 0 : index
    %584 = vector.load %arg10[%583, %c0_177] : memref<64x128xf32, #tpu.memory_space<vmem>>, vector<8x128xf32>
    tpu.vector_store %arg10[%583, %c0_177], %582 {strides = array<i32>} : memref<64x128xf32, #tpu.memory_space<vmem>>, vector<8x128xf32>,
    %c8_i32_178 = arith.constant 8 : i32
    %c1 = arith.constant 1 : index
    %c0_179 = arith.constant 0 : index
    %c0_180 = arith.constant 0 : index
    %585 = vector.load %arg7[%c1, %c0_179, %c0_180] : memref<2x8x128xf32, #tpu.memory_space<vmem>>, vector<1x8x128xf32>
    %586 = vector.shape_cast %585 : vector<1x8x128xf32> to vector<8x128xf32>
    %587 = vector.shape_cast %582 : vector<8x128xf32> to vector<1x8x128xf32>
    tpu.vector_store %arg7[%c1, %c0_179, %c0_180], %587 {strides = array<i32>} : memref<2x8x128xf32, #tpu.memory_space<vmem>>, vector<1x8x128xf32>,
    %c1_181 = arith.constant 1 : index
    %c0_182 = arith.constant 0 : index
    %c0_183 = arith.constant 0 : index
    %588 = vector.load %arg8[%c1_181, %c0_182, %c0_183] : memref<2x8x128xf32, #tpu.memory_space<vmem>>, vector<1x8x128xf32>
    %589 = vector.shape_cast %588 : vector<1x8x128xf32> to vector<8x128xf32>
    %590 = vector.shape_cast %580 : vector<8x128xf32> to vector<1x8x128xf32>
    tpu.vector_store %arg8[%c1_181, %c0_182, %c0_183], %590 {strides = array<i32>} : memref<2x8x128xf32, #tpu.memory_space<vmem>>, vector<1x8x128xf32>,
    return
  }
}

</mosaic_0001>

<llo_original>
// kernel: tpu_custom_call.1
$region0: #{tpu_custom_call.1}
  #allocation0 [shape = 'u32[]', space=smem, size = 0x4, offset = 0x4, fixed_abs, tag = 'smem constant byte address 0x4 - core index']
  #allocation1 [shape = 'u32[144,128]{1,0:T(1,128)}', space=vmem, size = 0x12000, scoped, tag = 'internal scratch']
  #allocation2 [shape = 'f32[64,512]{1,0:T(8,128)}', space=vmem, size = 0x20000, scoped, tag = 'scratch operand']
  #allocation3 [shape = 'f32[64,128]{1,0:T(8,128)}', space=vmem, size = 0x8000, scoped, tag = 'scratch operand']
  %s0 = inlined_call_operand.hbm [shape: bf16[64,128], index: 0, kind: input, shape index: {}]
  %s1 = inlined_call_operand.hbm [shape: bf16[128,512], index: 1, kind: input, shape index: {}]
  %s2 = inlined_call_operand.hbm [shape: bf16[128,512], index: 2, kind: input, shape index: {}]
  %s3 = inlined_call_operand.vmem [shape: f32[1,512], index: 3, kind: input, shape index: {}]
  %s4 = inlined_call_operand.hbm [shape: bf16[128,512], index: 4, kind: input, shape index: {}]
  %s5 = inlined_call_operand.hbm [shape: bf16[128,512], index: 5, kind: input, shape index: {}]
  %s6 = inlined_call_operand.vmem [shape: f32[1,512], index: 6, kind: input, shape index: {}]
  %s7 = inlined_call_operand.hbm [shape: f32[2,8,128], index: 7, kind: output, shape index: {0}]
  %s8 = inlined_call_operand.hbm [shape: f32[2,8,128], index: 8, kind: output, shape index: {1}]
  %9 = xla_tuple %s7, %s8
  %s10 = sld [smem:[#allocation0]]
  $region66: #{tpu_custom_call.1} parent=0
    _
  %s12 = ssub.s32 1, %s10
  %s13 = scalar_select 0, %s12, %s10
  $region1: #{tpu_custom_call.1} parent=0
    #allocation4 [shape = 'u8[16384]{0}', space=vmem, size = 0x4000, scoped, tag = 'input window, operand 0, single buffered']
    #allocation5 [shape = 's32[1]{0}', space=sflag, size = 0x4, scoped, tag = 'scoped memory for tpu_custom_call.1']
    #allocation6 [shape = 's32[1]{0}', space=sflag, size = 0x4, scoped, tag = 'scoped memory for tpu_custom_call.1']
    #allocation7 [shape = 'u8[131072]{0}', space=vmem, size = 0x20000, scoped, tag = 'input window, operand 1, single buffered']
    #allocation8 [shape = 's32[1]{0}', space=sflag, size = 0x4, scoped, tag = 'scoped memory for tpu_custom_call.1']
    #allocation9 [shape = 'u8[131072]{0}', space=vmem, size = 0x20000, scoped, tag = 'input window, operand 2, single buffered']
    #allocation10 [shape = 'u8[131072]{0}', space=vmem, size = 0x20000, scoped, tag = 'input window, operand 4, single buffered']
    #allocation11 [shape = 's32[1]{0}', space=sflag, size = 0x4, scoped, tag = 'scoped memory for tpu_custom_call.1']
    #allocation12 [shape = 'u8[131072]{0}', space=vmem, size = 0x20000, scoped, tag = 'input window, operand 5, single buffered']
    #allocation13 [shape = 'u8[8192]{0}', space=vmem, size = 0x2000, scoped, tag = 'output window, operand 0, single buffered']
    #allocation14 [shape = 'u8[8192]{0}', space=vmem, size = 0x2000, scoped, tag = 'output window, operand 1, single buffered']
    #allocation15 [shape = 's32[1]{0}', space=sflag, size = 0x4, scoped, tag = 'scoped memory for tpu_custom_call.1']
    %14 = vsyncpa [#allocation5], 0
    %15 = vsyncpa [#allocation8], 0
    %16 = vsyncpa [#allocation11], 0
    %17 = vsyncpa [#allocation6], 0
    %18 = vsyncpa [#allocation15], 0
    // Predicated region
    $region2: #{tpu_custom_call.1} parent=1 // pred_check
      _
    $region3: #{tpu_custom_call.1} parent=1 // pred_check_branch
      %20 = sbr.rel (0) target = $region5
    $region4: #{tpu_custom_call.1} parent=1 // pred_region
      %s22 = ssub.s32 512, 512
      %23 = vsyncadd [#allocation5], %s22
      %s24 = sshll.u32 [#allocation4], 4
      %s25 = int_to_ptr.vmem [resolvable:$true] %s24
      %30 = dma.hbm_to_vmem [thread:$0]  %s0, 512, %s25, [#allocation5], 64, 64, 4
    $region5: #{tpu_custom_call.1} parent=1 // pred_fallthru
      _
    // Predicated region
    $region6: #{tpu_custom_call.1} parent=1 // pred_check
      _
    $region7: #{tpu_custom_call.1} parent=1 // pred_check_branch
      %32 = sbr.rel (0) target = $region9
    $region8: #{tpu_custom_call.1} parent=1 // pred_region
      %s34 = ssub.s32 4096, 4096
      %35 = vsyncadd [#allocation8], %s34
      %s36 = sshll.u32 [#allocation7], 4
      %s37 = int_to_ptr.vmem [resolvable:$true] %s36
      %42 = dma.hbm_to_vmem [thread:$0]  %s1, 4096, %s37, [#allocation8], 256, 256, 16
    $region9: #{tpu_custom_call.1} parent=1 // pred_fallthru
      _
    // Predicated region
    $region10: #{tpu_custom_call.1} parent=1 // pred_check
      _
    $region11: #{tpu_custom_call.1} parent=1 // pred_check_branch
      %44 = sbr.rel (0) target = $region13
    $region12: #{tpu_custom_call.1} parent=1 // pred_region
      %s46 = ssub.s32 4096, 4096
      %47 = vsyncadd [#allocation8], %s46
      %s48 = sshll.u32 [#allocation9], 4
      %s49 = int_to_ptr.vmem [resolvable:$true] %s48
      %54 = dma.hbm_to_vmem [thread:$0]  %s2, 4096, %s49, [#allocation8], 256, 256, 16
    $region13: #{tpu_custom_call.1} parent=1 // pred_fallthru
      _
    // Predicated region
    $region14: #{tpu_custom_call.1} parent=1 // pred_check
      _
    $region15: #{tpu_custom_call.1} parent=1 // pred_check_branch
      %56 = sbr.rel (0) target = $region17
    $region16: #{tpu_custom_call.1} parent=1 // pred_region
      _
    $region17: #{tpu_custom_call.1} parent=1 // pred_fallthru
      _
    // Predicated region
    $region18: #{tpu_custom_call.1} parent=1 // pred_check
      _
    $region19: #{tpu_custom_call.1} parent=1 // pred_check_branch
      %58 = sbr.rel (0) target = $region21
    $region20: #{tpu_custom_call.1} parent=1 // pred_region
      %s60 = ssub.s32 4096, 4096
      %61 = vsyncadd [#allocation11], %s60
      %s62 = sshll.u32 [#allocation10], 4
      %s63 = int_to_ptr.vmem [resolvable:$true] %s62
      %68 = dma.hbm_to_vmem [thread:$0]  %s4, 4096, %s63, [#allocation11], 256, 256, 16
    $region21: #{tpu_custom_call.1} parent=1 // pred_fallthru
      _
    // Predicated region
    $region22: #{tpu_custom_call.1} parent=1 // pred_check
      _
    $region23: #{tpu_custom_call.1} parent=1 // pred_check_branch
      %70 = sbr.rel (0) target = $region25
    $region24: #{tpu_custom_call.1} parent=1 // pred_region
      %s72 = ssub.s32 4096, 4096
      %73 = vsyncadd [#allocation11], %s72
      %s74 = sshll.u32 [#allocation12], 4
      %s75 = int_to_ptr.vmem [resolvable:$true] %s74
      %80 = dma.hbm_to_vmem [thread:$0]  %s5, 4096, %s75, [#allocation11], 256, 256, 16
    $region25: #{tpu_custom_call.1} parent=1 // pred_fallthru
      _
    // Predicated region
    $region26: #{tpu_custom_call.1} parent=1 // pred_check
      _
    $region27: #{tpu_custom_call.1} parent=1 // pred_check_branch
      %82 = sbr.rel (0) target = $region29
    $region28: #{tpu_custom_call.1} parent=1 // pred_region
      _
    $region29: #{tpu_custom_call.1} parent=1 // pred_fallthru
      _
    // Predicated region
    $region30: #{tpu_custom_call.1} parent=1 // pred_check
      _
    $region31: #{tpu_custom_call.1} parent=1 // pred_check_branch
      %84 = sbr.rel (0) target = $region33
    $region32: #{tpu_custom_call.1} parent=1 // pred_region
      %85 = dma.done [#allocation5], 512
    $region33: #{tpu_custom_call.1} parent=1 // pred_fallthru
      _
    // Predicated region
    $region34: #{tpu_custom_call.1} parent=1 // pred_check
      _
    $region35: #{tpu_custom_call.1} parent=1 // pred_check_branch
      %87 = sbr.rel (0) target = $region37
    $region36: #{tpu_custom_call.1} parent=1 // pred_region
      %88 = dma.done [#allocation8], 4096
    $region37: #{tpu_custom_call.1} parent=1 // pred_fallthru
      _
    // Predicated region
    $region38: #{tpu_custom_call.1} parent=1 // pred_check
      _
    $region39: #{tpu_custom_call.1} parent=1 // pred_check_branch
      %90 = sbr.rel (0) target = $region41
    $region40: #{tpu_custom_call.1} parent=1 // pred_region
      %91 = dma.done [#allocation8], 4096
    $region41: #{tpu_custom_call.1} parent=1 // pred_fallthru
      _
    // Predicated region
    $region42: #{tpu_custom_call.1} parent=1 // pred_check
      _
    $region43: #{tpu_custom_call.1} parent=1 // pred_check_branch
      %93 = sbr.rel (0) target = $region45
    $region44: #{tpu_custom_call.1} parent=1 // pred_region
      %94 = dma.done [#allocation11], 4096
    $region45: #{tpu_custom_call.1} parent=1 // pred_fallthru
      _
    // Predicated region
    $region46: #{tpu_custom_call.1} parent=1 // pred_check
      _
    $region47: #{tpu_custom_call.1} parent=1 // pred_check_branch
      %96 = sbr.rel (0) target = $region49
    $region48: #{tpu_custom_call.1} parent=1 // pred_region
      %97 = dma.done [#allocation11], 4096
    $region49: #{tpu_custom_call.1} parent=1 // pred_fallthru
      _
    %v99 = vld [vmem:[#allocation4] sm:$0xf]
    %v100 = vld [vmem:[#allocation4 + $0x4] sm:$0xf]
    %v101 = vld [vmem:[#allocation4 + $0x8] sm:$0xf]
    %v102 = vld [vmem:[#allocation4 + $0xc] sm:$0xf]
    %v103 = vld [vmem:[#allocation4 + $0x10] sm:$0xf]
    %v104 = vld [vmem:[#allocation4 + $0x14] sm:$0xf]
    %v105 = vld [vmem:[#allocation4 + $0x18] sm:$0xf]
    %v106 = vld [vmem:[#allocation4 + $0x1c] sm:$0xf]
    %v107 = vld [vmem:[#allocation7] sm:$0xff]
    %v108 = vld [vmem:[#allocation7 + $0x8] sm:$0xff]
    %v109 = vld [vmem:[#allocation7 + $0x10] sm:$0xff]
    %v110 = vld [vmem:[#allocation7 + $0x18] sm:$0xff]
    %v111 = vld [vmem:[#allocation7 + $0x20] sm:$0xff]
    %v112 = vld [vmem:[#allocation7 + $0x28] sm:$0xff]
    %v113 = vld [vmem:[#allocation7 + $0x30] sm:$0xff]
    %v114 = vld [vmem:[#allocation7 + $0x38] sm:$0xff]
    %v115 = vld [vmem:[#allocation7 + $0x40] sm:$0xff]
    %v116 = vld [vmem:[#allocation7 + $0x48] sm:$0xff]
    %v117 = vld [vmem:[#allocation7 + $0x50] sm:$0xff]
    %v118 = vld [vmem:[#allocation7 + $0x58] sm:$0xff]
    %v119 = vld [vmem:[#allocation7 + $0x60] sm:$0xff]
    %v120 = vld [vmem:[#allocation7 + $0x68] sm:$0xff]
    %v121 = vld [vmem:[#allocation7 + $0x70] sm:$0xff]
    %v122 = vld [vmem:[#allocation7 + $0x78] sm:$0xff]
    %v123 = vld [vmem:[#allocation7 + $0x80] sm:$0xff]
    %v124 = vld [vmem:[#allocation7 + $0x88] sm:$0xff]
    %v125 = vld [vmem:[#allocation7 + $0x90] sm:$0xff]
    %v126 = vld [vmem:[#allocation7 + $0x98] sm:$0xff]
    %v127 = vld [vmem:[#allocation7 + $0xa0] sm:$0xff]
    %v128 = vld [vmem:[#allocation7 + $0xa8] sm:$0xff]
    %v129 = vld [vmem:[#allocation7 + $0xb0] sm:$0xff]
    %v130 = vld [vmem:[#allocation7 + $0xb8] sm:$0xff]
    %v131 = vld [vmem:[#allocation7 + $0xc0] sm:$0xff]
    %v132 = vld [vmem:[#allocation7 + $0xc8] sm:$0xff]
    %v133 = vld [vmem:[#allocation7 + $0xd0] sm:$0xff]
    %v134 = vld [vmem:[#allocation7 + $0xd8] sm:$0xff]
    %v135 = vld [vmem:[#allocation7 + $0xe0] sm:$0xff]
    %v136 = vld [vmem:[#allocation7 + $0xe8] sm:$0xff]
    %v137 = vld [vmem:[#allocation7 + $0xf0] sm:$0xff]
    %v138 = vld [vmem:[#allocation7 + $0xf8] sm:$0xff]
    %v139 = vld [vmem:[%s3] sm:$0xf]
    %v141 = vlaneseq
    %v142 = vshrl.u32 %v141, 7
    %v143 = vsub.s32 0, %v142
    %v144 = vrot.slane %v139, %v143
    %v145 = vlaneseq
    %v146 = vshrl.u32 %v145, 7
    %v147 = vsub.s32 1, %v146
    %v148 = vrot.slane %v139, %v147
    %v149 = vlaneseq
    %v150 = vshrl.u32 %v149, 7
    %v151 = vsub.s32 2, %v150
    %v152 = vrot.slane %v139, %v151
    %v153 = vlaneseq
    %v154 = vshrl.u32 %v153, 7
    %v155 = vsub.s32 3, %v154
    %v156 = vrot.slane %v139, %v155
    %v169 = vunpack.c.l.b16 %v99
    %v170 = vunpack.c.l.b16 %v100
    %v171 = vunpack.c.l.b16 %v101
    %v172 = vunpack.c.l.b16 %v102
    %v173 = vunpack.c.l.b16 %v103
    %v174 = vunpack.c.l.b16 %v104
    %v175 = vunpack.c.l.b16 %v105
    %v176 = vunpack.c.l.b16 %v106
    %v177 = vpack.c.b16 %v170, %v169
    %v178 = vpack.c.b16 %v172, %v171
    %v179 = vpack.c.b16 %v174, %v173
    %v180 = vpack.c.b16 %v176, %v175
    %v217 = vunpack.c.l.b16 %v107
    %v218 = vunpack.c.h.b16 %v107
    %v219 = vunpack.c.l.b16 %v108
    %v220 = vunpack.c.h.b16 %v108
    %v221 = vunpack.c.l.b16 %v109
    %v222 = vunpack.c.h.b16 %v109
    %v223 = vunpack.c.l.b16 %v110
    %v224 = vunpack.c.h.b16 %v110
    %v225 = vunpack.c.l.b16 %v111
    %v226 = vunpack.c.h.b16 %v111
    %v227 = vunpack.c.l.b16 %v112
    %v228 = vunpack.c.h.b16 %v112
    %v229 = vunpack.c.l.b16 %v113
    %v230 = vunpack.c.h.b16 %v113
    %v231 = vunpack.c.l.b16 %v114
    %v232 = vunpack.c.h.b16 %v114
    %v233 = vunpack.c.l.b16 %v115
    %v234 = vunpack.c.h.b16 %v115
    %v235 = vunpack.c.l.b16 %v116
    %v236 = vunpack.c.h.b16 %v116
    %v237 = vunpack.c.l.b16 %v117
    %v238 = vunpack.c.h.b16 %v117
    %v239 = vunpack.c.l.b16 %v118
    %v240 = vunpack.c.h.b16 %v118
    %v241 = vunpack.c.l.b16 %v119
    %v242 = vunpack.c.h.b16 %v119
    %v243 = vunpack.c.l.b16 %v120
    %v244 = vunpack.c.h.b16 %v120
    %v245 = vunpack.c.l.b16 %v121
    %v246 = vunpack.c.h.b16 %v121
    %v247 = vunpack.c.l.b16 %v122
    %v248 = vunpack.c.h.b16 %v122
    %v249 = vunpack.c.l.b16 %v123
    %v250 = vunpack.c.h.b16 %v123
    %v251 = vunpack.c.l.b16 %v124
    %v252 = vunpack.c.h.b16 %v124
    %v253 = vunpack.c.l.b16 %v125
    %v254 = vunpack.c.h.b16 %v125
    %v255 = vunpack.c.l.b16 %v126
    %v256 = vunpack.c.h.b16 %v126
    %v257 = vunpack.c.l.b16 %v127
    %v258 = vunpack.c.h.b16 %v127
    %v259 = vunpack.c.l.b16 %v128
    %v260 = vunpack.c.h.b16 %v128
    %v261 = vunpack.c.l.b16 %v129
    %v262 = vunpack.c.h.b16 %v129
    %v263 = vunpack.c.l.b16 %v130
    %v264 = vunpack.c.h.b16 %v130
    %v265 = vunpack.c.l.b16 %v131
    %v266 = vunpack.c.h.b16 %v131
    %v267 = vunpack.c.l.b16 %v132
    %v268 = vunpack.c.h.b16 %v132
    %v269 = vunpack.c.l.b16 %v133
    %v270 = vunpack.c.h.b16 %v133
    %v271 = vunpack.c.l.b16 %v134
    %v272 = vunpack.c.h.b16 %v134
    %v273 = vunpack.c.l.b16 %v135
    %v274 = vunpack.c.h.b16 %v135
    %v275 = vunpack.c.l.b16 %v136
    %v276 = vunpack.c.h.b16 %v136
    %v277 = vunpack.c.l.b16 %v137
    %v278 = vunpack.c.h.b16 %v137
    %v279 = vunpack.c.l.b16 %v138
    %v280 = vunpack.c.h.b16 %v138
    %v281 = vpack.c.b16 %v221, %v217
    %v282 = vpack.c.b16 %v222, %v218
    %v283 = vpack.c.b16 %v223, %v219
    %v284 = vpack.c.b16 %v224, %v220
    %v285 = vpack.c.b16 %v229, %v225
    %v286 = vpack.c.b16 %v230, %v226
    %v287 = vpack.c.b16 %v231, %v227
    %v288 = vpack.c.b16 %v232, %v228
    %v289 = vpack.c.b16 %v237, %v233
    %v290 = vpack.c.b16 %v238, %v234
    %v291 = vpack.c.b16 %v239, %v235
    %v292 = vpack.c.b16 %v240, %v236
    %v293 = vpack.c.b16 %v245, %v241
    %v294 = vpack.c.b16 %v246, %v242
    %v295 = vpack.c.b16 %v247, %v243
    %v296 = vpack.c.b16 %v248, %v244
    %v297 = vpack.c.b16 %v253, %v249
    %v298 = vpack.c.b16 %v254, %v250
    %v299 = vpack.c.b16 %v255, %v251
    %v300 = vpack.c.b16 %v256, %v252
    %v301 = vpack.c.b16 %v261, %v257
    %v302 = vpack.c.b16 %v262, %v258
    %v303 = vpack.c.b16 %v263, %v259
    %v304 = vpack.c.b16 %v264, %v260
    %v305 = vpack.c.b16 %v269, %v265
    %v306 = vpack.c.b16 %v270, %v266
    %v307 = vpack.c.b16 %v271, %v267
    %v308 = vpack.c.b16 %v272, %v268
    %v309 = vpack.c.b16 %v277, %v273
    %v310 = vpack.c.b16 %v278, %v274
    %v311 = vpack.c.b16 %v279, %v275
    %v312 = vpack.c.b16 %v280, %v276
    %345 = vmatprep.subr.bf16.mxu0 %v310
    %346 = vmatpush1.bf16.msra.mxu0 %v309
    %347 = vmatprep.subr.bf16.mxu0 %v306
    %348 = vmatpush1.bf16.msra.mxu0 %v305
    %349 = vmatprep.subr.bf16.mxu0 %v302
    %350 = vmatpush1.bf16.msra.mxu0 %v301
    %351 = vmatprep.subr.bf16.mxu0 %v298
    %352 = vmatpush1.bf16.msra.mxu0 %v297
    %353 = vmatprep.subr.bf16.mxu0 %v294
    %354 = vmatpush1.bf16.msra.mxu0 %v293
    %355 = vmatprep.subr.bf16.mxu0 %v290
    %356 = vmatpush1.bf16.msra.mxu0 %v289
    %357 = vmatprep.subr.bf16.mxu0 %v286
    %358 = vmatpush1.bf16.msra.mxu0 %v285
    %359 = vmatprep.subr.bf16.mxu0 %v282
    %360 = vmatpush1.bf16.msra.mxu0 %v281
    %361 = vmatprep.subr.bf16.mxu0 0
    %362 = vmatpush2.bf16.msra.mxu0 0
    %363 = vmatprep.subr.bf16.mxu0 0
    %364 = vmatpush2.bf16.msra.mxu0 0
    %365 = vmatprep.subr.bf16.mxu0 0
    %366 = vmatpush2.bf16.msra.mxu0 0
    %367 = vmatprep.subr.bf16.mxu0 0
    %368 = vmatpush2.bf16.msra.mxu0 0
    %369 = vmatprep.subr.bf16.mxu0 0
    %370 = vmatpush2.bf16.msra.mxu0 0
    %371 = vmatprep.subr.bf16.mxu0 0
    %372 = vmatpush2.bf16.msra.mxu0 0
    %373 = vmatprep.subr.bf16.mxu0 0
    %374 = vmatpush2.bf16.msra.mxu0 0
    %375 = vmatprep.subr.bf16.mxu0 0
    %376 = vmatpush2.bf16.msra.mxu0 0
    %377 = vmatprep.mubr.bf16.mxu0 0
    %378 = vmatmul.mubr.bf16.gmra.mxu0 %v177
    %v379 = vpop.f32.mrf.mxu0
    %v380 = vadd.f32 %v144, %v379
    %v381 = vpop.f32.mrf.mxu0
    %v382 = vadd.f32 %v148, %v381
    %v383 = vpop.f32.mrf.mxu0
    %v384 = vadd.f32 %v144, %v383
    %v385 = vpop.f32.mrf.mxu0
    %v386 = vadd.f32 %v148, %v385
    %387 = vmatprep.mubr.bf16.mxu0 0
    %388 = vmatmul.mubr.bf16.gmra.mxu0 %v178
    %v389 = vpop.f32.mrf.mxu0
    %v390 = vadd.f32 %v144, %v389
    %v391 = vpop.f32.mrf.mxu0
    %v392 = vadd.f32 %v148, %v391
    %v393 = vpop.f32.mrf.mxu0
    %v394 = vadd.f32 %v144, %v393
    %v395 = vpop.f32.mrf.mxu0
    %v396 = vadd.f32 %v148, %v395
    %397 = vmatprep.mubr.bf16.mxu0 0
    %398 = vmatmul.mubr.bf16.gmra.mxu0 %v179
    %v399 = vpop.f32.mrf.mxu0
    %v400 = vadd.f32 %v144, %v399
    %v401 = vpop.f32.mrf.mxu0
    %v402 = vadd.f32 %v148, %v401
    %v403 = vpop.f32.mrf.mxu0
    %v404 = vadd.f32 %v144, %v403
    %v405 = vpop.f32.mrf.mxu0
    %v406 = vadd.f32 %v148, %v405
    %407 = vmatprep.mubr.bf16.mxu0 0
    %408 = vmatmul.mubr.bf16.gmra.mxu0 %v180
    %v409 = vpop.f32.mrf.mxu0
    %v410 = vadd.f32 %v144, %v409
    %v411 = vpop.f32.mrf.mxu0
    %v412 = vadd.f32 %v148, %v411
    %v413 = vpop.f32.mrf.mxu0
    %v414 = vadd.f32 %v144, %v413
    %v415 = vpop.f32.mrf.mxu0
    %v416 = vadd.f32 %v148, %v415
    %417 = vdwg.mxu0
    %418 = vmatprep.subr.bf16.mxu0 %v312
    %419 = vmatpush1.bf16.msra.mxu0 %v311
    %420 = vmatprep.subr.bf16.mxu0 %v308
    %421 = vmatpush1.bf16.msra.mxu0 %v307
    %422 = vmatprep.subr.bf16.mxu0 %v304
    %423 = vmatpush1.bf16.msra.mxu0 %v303
    %424 = vmatprep.subr.bf16.mxu0 %v300
    %425 = vmatpush1.bf16.msra.mxu0 %v299
    %426 = vmatprep.subr.bf16.mxu0 %v296
    %427 = vmatpush1.bf16.msra.mxu0 %v295
    %428 = vmatprep.subr.bf16.mxu0 %v292
    %429 = vmatpush1.bf16.msra.mxu0 %v291
    %430 = vmatprep.subr.bf16.mxu0 %v288
    %431 = vmatpush1.bf16.msra.mxu0 %v287
    %432 = vmatprep.subr.bf16.mxu0 %v284
    %433 = vmatpush1.bf16.msra.mxu0 %v283
    %434 = vmatprep.subr.bf16.mxu0 0
    %435 = vmatpush2.bf16.msra.mxu0 0
    %436 = vmatprep.subr.bf16.mxu0 0
    %437 = vmatpush2.bf16.msra.mxu0 0
    %438 = vmatprep.subr.bf16.mxu0 0
    %439 = vmatpush2.bf16.msra.mxu0 0
    %440 = vmatprep.subr.bf16.mxu0 0
    %441 = vmatpush2.bf16.msra.mxu0 0
    %442 = vmatprep.subr.bf16.mxu0 0
    %443 = vmatpush2.bf16.msra.mxu0 0
    %444 = vmatprep.subr.bf16.mxu0 0
    %445 = vmatpush2.bf16.msra.mxu0 0
    %446 = vmatprep.subr.bf16.mxu0 0
    %447 = vmatpush2.bf16.msra.mxu0 0
    %448 = vmatprep.subr.bf16.mxu0 0
    %449 = vmatpush2.bf16.msra.mxu0 0
    %450 = vmatprep.mubr.bf16.mxu0 0
    %451 = vmatmul.mubr.bf16.gmra.mxu0 %v177
    %v452 = vpop.f32.mrf.mxu0
    %v453 = vadd.f32 %v152, %v452
    %v454 = vpop.f32.mrf.mxu0
    %v455 = vadd.f32 %v156, %v454
    %v456 = vpop.f32.mrf.mxu0
    %v457 = vadd.f32 %v152, %v456
    %v458 = vpop.f32.mrf.mxu0
    %v459 = vadd.f32 %v156, %v458
    %460 = vmatprep.mubr.bf16.mxu0 0
    %461 = vmatmul.mubr.bf16.gmra.mxu0 %v178
    %v462 = vpop.f32.mrf.mxu0
    %v463 = vadd.f32 %v152, %v462
    %v464 = vpop.f32.mrf.mxu0
    %v465 = vadd.f32 %v156, %v464
    %v466 = vpop.f32.mrf.mxu0
    %v467 = vadd.f32 %v152, %v466
    %v468 = vpop.f32.mrf.mxu0
    %v469 = vadd.f32 %v156, %v468
    %470 = vmatprep.mubr.bf16.mxu0 0
    %471 = vmatmul.mubr.bf16.gmra.mxu0 %v179
    %v472 = vpop.f32.mrf.mxu0
    %v473 = vadd.f32 %v152, %v472
    %v474 = vpop.f32.mrf.mxu0
    %v475 = vadd.f32 %v156, %v474
    %v476 = vpop.f32.mrf.mxu0
    %v477 = vadd.f32 %v152, %v476
    %v478 = vpop.f32.mrf.mxu0
    %v479 = vadd.f32 %v156, %v478
    %480 = vmatprep.mubr.bf16.mxu0 0
    %481 = vmatmul.mubr.bf16.gmra.mxu0 %v180
    %v482 = vpop.f32.mrf.mxu0
    %v483 = vadd.f32 %v152, %v482
    %v484 = vpop.f32.mrf.mxu0
    %v485 = vadd.f32 %v156, %v484
    %v486 = vpop.f32.mrf.mxu0
    %v487 = vadd.f32 %v152, %v486
    %v488 = vpop.f32.mrf.mxu0
    %v489 = vadd.f32 %v156, %v488
    %490 = vdwg.mxu0
    %491 = vst [vmem:[#allocation2] sm:$0xff] %v380
    %492 = vst [vmem:[#allocation2 + $0x8] sm:$0xff] %v382
    %493 = vst [vmem:[#allocation2 + $0x10] sm:$0xff] %v453
    %494 = vst [vmem:[#allocation2 + $0x18] sm:$0xff] %v455
    %495 = vst [vmem:[#allocation2 + $0x20] sm:$0xff] %v384
    %496 = vst [vmem:[#allocation2 + $0x28] sm:$0xff] %v386
    %497 = vst [vmem:[#allocation2 + $0x30] sm:$0xff] %v457
    %498 = vst [vmem:[#allocation2 + $0x38] sm:$0xff] %v459
    %499 = vst [vmem:[#allocation2 + $0x40] sm:$0xff] %v390
    %500 = vst [vmem:[#allocation2 + $0x48] sm:$0xff] %v392
    %501 = vst [vmem:[#allocation2 + $0x50] sm:$0xff] %v463
    %502 = vst [vmem:[#allocation2 + $0x58] sm:$0xff] %v465
    %503 = vst [vmem:[#allocation2 + $0x60] sm:$0xff] %v394
    %504 = vst [vmem:[#allocation2 + $0x68] sm:$0xff] %v396
    %505 = vst [vmem:[#allocation2 + $0x70] sm:$0xff] %v467
    %506 = vst [vmem:[#allocation2 + $0x78] sm:$0xff] %v469
    %507 = vst [vmem:[#allocation2 + $0x80] sm:$0xff] %v400
    %508 = vst [vmem:[#allocation2 + $0x88] sm:$0xff] %v402
    %509 = vst [vmem:[#allocation2 + $0x90] sm:$0xff] %v473
    %510 = vst [vmem:[#allocation2 + $0x98] sm:$0xff] %v475
    %511 = vst [vmem:[#allocation2 + $0xa0] sm:$0xff] %v404
    %512 = vst [vmem:[#allocation2 + $0xa8] sm:$0xff] %v406
    %513 = vst [vmem:[#allocation2 + $0xb0] sm:$0xff] %v477
    %514 = vst [vmem:[#allocation2 + $0xb8] sm:$0xff] %v479
    %515 = vst [vmem:[#allocation2 + $0xc0] sm:$0xff] %v410
    %516 = vst [vmem:[#allocation2 + $0xc8] sm:$0xff] %v412
    %517 = vst [vmem:[#allocation2 + $0xd0] sm:$0xff] %v483
    %518 = vst [vmem:[#allocation2 + $0xd8] sm:$0xff] %v485
    %519 = vst [vmem:[#allocation2 + $0xe0] sm:$0xff] %v414
    %520 = vst [vmem:[#allocation2 + $0xe8] sm:$0xff] %v416
    %521 = vst [vmem:[#allocation2 + $0xf0] sm:$0xff] %v487
    %522 = vst [vmem:[#allocation2 + $0xf8] sm:$0xff] %v489
    %s523 = smul.u32 0, 4
    %s524 = smul.addr %s523, 8
    %s525 = scalar_lea.vmem [#allocation2], %s524
    %v526 = vld [vmem:[%s525] sm:$0xff]
    %v527 = vld [vmem:[%s525 + $0x8] sm:$0xff]
    %v528 = vld [vmem:[%s525 + $0x10] sm:$0xff]
    %v529 = vld [vmem:[%s525 + $0x18] sm:$0xff]
    %v530 = vld [vmem:[#allocation9] sm:$0xff]
    %v531 = vld [vmem:[#allocation9 + $0x8] sm:$0xff]
    %v532 = vld [vmem:[#allocation9 + $0x10] sm:$0xff]
    %v533 = vld [vmem:[#allocation9 + $0x18] sm:$0xff]
    %v534 = vld [vmem:[#allocation9 + $0x20] sm:$0xff]
    %v535 = vld [vmem:[#allocation9 + $0x28] sm:$0xff]
    %v536 = vld [vmem:[#allocation9 + $0x30] sm:$0xff]
    %v537 = vld [vmem:[#allocation9 + $0x38] sm:$0xff]
    %v538 = vld [vmem:[#allocation9 + $0x40] sm:$0xff]
    %v539 = vld [vmem:[#allocation9 + $0x48] sm:$0xff]
    %v540 = vld [vmem:[#allocation9 + $0x50] sm:$0xff]
    %v541 = vld [vmem:[#allocation9 + $0x58] sm:$0xff]
    %v542 = vld [vmem:[#allocation9 + $0x60] sm:$0xff]
    %v543 = vld [vmem:[#allocation9 + $0x68] sm:$0xff]
    %v544 = vld [vmem:[#allocation9 + $0x70] sm:$0xff]
    %v545 = vld [vmem:[#allocation9 + $0x78] sm:$0xff]
    %v546 = vld [vmem:[#allocation9 + $0x80] sm:$0xff]
    %v547 = vld [vmem:[#allocation9 + $0x88] sm:$0xff]
    %v548 = vld [vmem:[#allocation9 + $0x90] sm:$0xff]
    %v549 = vld [vmem:[#allocation9 + $0x98] sm:$0xff]
    %v550 = vld [vmem:[#allocation9 + $0xa0] sm:$0xff]
    %v551 = vld [vmem:[#allocation9 + $0xa8] sm:$0xff]
    %v552 = vld [vmem:[#allocation9 + $0xb0] sm:$0xff]
    %v553 = vld [vmem:[#allocation9 + $0xb8] sm:$0xff]
    %v554 = vld [vmem:[#allocation9 + $0xc0] sm:$0xff]
    %v555 = vld [vmem:[#allocation9 + $0xc8] sm:$0xff]
    %v556 = vld [vmem:[#allocation9 + $0xd0] sm:$0xff]
    %v557 = vld [vmem:[#allocation9 + $0xd8] sm:$0xff]
    %v558 = vld [vmem:[#allocation9 + $0xe0] sm:$0xff]
    %v559 = vld [vmem:[#allocation9 + $0xe8] sm:$0xff]
    %v560 = vld [vmem:[#allocation9 + $0xf0] sm:$0xff]
    %v561 = vld [vmem:[#allocation9 + $0xf8] sm:$0xff]
    %v594 = vunpack.c.l.b16 %v530
    %v595 = vunpack.c.h.b16 %v530
    %v596 = vunpack.c.l.b16 %v531
    %v597 = vunpack.c.h.b16 %v531
    %v598 = vunpack.c.l.b16 %v532
    %v599 = vunpack.c.h.b16 %v532
    %v600 = vunpack.c.l.b16 %v533
    %v601 = vunpack.c.h.b16 %v533
    %v602 = vunpack.c.l.b16 %v534
    %v603 = vunpack.c.h.b16 %v534
    %v604 = vunpack.c.l.b16 %v535
    %v605 = vunpack.c.h.b16 %v535
    %v606 = vunpack.c.l.b16 %v536
    %v607 = vunpack.c.h.b16 %v536
    %v608 = vunpack.c.l.b16 %v537
    %v609 = vunpack.c.h.b16 %v537
    %v610 = vunpack.c.l.b16 %v538
    %v611 = vunpack.c.h.b16 %v538
    %v612 = vunpack.c.l.b16 %v539
    %v613 = vunpack.c.h.b16 %v539
    %v614 = vunpack.c.l.b16 %v540
    %v615 = vunpack.c.h.b16 %v540
    %v616 = vunpack.c.l.b16 %v541
    %v617 = vunpack.c.h.b16 %v541
    %v618 = vunpack.c.l.b16 %v542
    %v619 = vunpack.c.h.b16 %v542
    %v620 = vunpack.c.l.b16 %v543
    %v621 = vunpack.c.h.b16 %v543
    %v622 = vunpack.c.l.b16 %v544
    %v623 = vunpack.c.h.b16 %v544
    %v624 = vunpack.c.l.b16 %v545
    %v625 = vunpack.c.h.b16 %v545
    %v626 = vunpack.c.l.b16 %v546
    %v627 = vunpack.c.h.b16 %v546
    %v628 = vunpack.c.l.b16 %v547
    %v629 = vunpack.c.h.b16 %v547
    %v630 = vunpack.c.l.b16 %v548
    %v631 = vunpack.c.h.b16 %v548
    %v632 = vunpack.c.l.b16 %v549
    %v633 = vunpack.c.h.b16 %v549
    %v634 = vunpack.c.l.b16 %v550
    %v635 = vunpack.c.h.b16 %v550
    %v636 = vunpack.c.l.b16 %v551
    %v637 = vunpack.c.h.b16 %v551
    %v638 = vunpack.c.l.b16 %v552
    %v639 = vunpack.c.h.b16 %v552
    %v640 = vunpack.c.l.b16 %v553
    %v641 = vunpack.c.h.b16 %v553
    %v642 = vunpack.c.l.b16 %v554
    %v643 = vunpack.c.h.b16 %v554
    %v644 = vunpack.c.l.b16 %v555
    %v645 = vunpack.c.h.b16 %v555
    %v646 = vunpack.c.l.b16 %v556
    %v647 = vunpack.c.h.b16 %v556
    %v648 = vunpack.c.l.b16 %v557
    %v649 = vunpack.c.h.b16 %v557
    %v650 = vunpack.c.l.b16 %v558
    %v651 = vunpack.c.h.b16 %v558
    %v652 = vunpack.c.l.b16 %v559
    %v653 = vunpack.c.h.b16 %v559
    %v654 = vunpack.c.l.b16 %v560
    %v655 = vunpack.c.h.b16 %v560
    %v656 = vunpack.c.l.b16 %v561
    %v657 = vunpack.c.h.b16 %v561
    %v658 = vpack.c.b16 %v598, %v594
    %v659 = vpack.c.b16 %v599, %v595
    %v660 = vpack.c.b16 %v600, %v596
    %v661 = vpack.c.b16 %v601, %v597
    %v662 = vpack.c.b16 %v606, %v602
    %v663 = vpack.c.b16 %v607, %v603
    %v664 = vpack.c.b16 %v608, %v604
    %v665 = vpack.c.b16 %v609, %v605
    %v666 = vpack.c.b16 %v614, %v610
    %v667 = vpack.c.b16 %v615, %v611
    %v668 = vpack.c.b16 %v616, %v612
    %v669 = vpack.c.b16 %v617, %v613
    %v670 = vpack.c.b16 %v622, %v618
    %v671 = vpack.c.b16 %v623, %v619
    %v672 = vpack.c.b16 %v624, %v620
    %v673 = vpack.c.b16 %v625, %v621
    %v674 = vpack.c.b16 %v630, %v626
    %v675 = vpack.c.b16 %v631, %v627
    %v676 = vpack.c.b16 %v632, %v628
    %v677 = vpack.c.b16 %v633, %v629
    %v678 = vpack.c.b16 %v638, %v634
    %v679 = vpack.c.b16 %v639, %v635
    %v680 = vpack.c.b16 %v640, %v636
    %v681 = vpack.c.b16 %v641, %v637
    %v682 = vpack.c.b16 %v646, %v642
    %v683 = vpack.c.b16 %v647, %v643
    %v684 = vpack.c.b16 %v648, %v644
    %v685 = vpack.c.b16 %v649, %v645
    %v686 = vpack.c.b16 %v654, %v650
    %v687 = vpack.c.b16 %v655, %v651
    %v688 = vpack.c.b16 %v656, %v652
    %v689 = vpack.c.b16 %v657, %v653
    %722 = vmatprep.subr.bf16.mxu0 %v687
    %723 = vmatpush1.bf16.msra.mxu0 %v686
    %724 = vmatprep.subr.bf16.mxu0 %v683
    %725 = vmatpush1.bf16.msra.mxu0 %v682
    %726 = vmatprep.subr.bf16.mxu0 %v679
    %727 = vmatpush1.bf16.msra.mxu0 %v678
    %728 = vmatprep.subr.bf16.mxu0 %v675
    %729 = vmatpush1.bf16.msra.mxu0 %v674
    %730 = vmatprep.subr.bf16.mxu0 %v671
    %731 = vmatpush1.bf16.msra.mxu0 %v670
    %732 = vmatprep.subr.bf16.mxu0 %v667
    %733 = vmatpush1.bf16.msra.mxu0 %v666
    %734 = vmatprep.subr.bf16.mxu0 %v663
    %735 = vmatpush1.bf16.msra.mxu0 %v662
    %736 = vmatprep.subr.bf16.mxu0 %v659
    %737 = vmatpush1.bf16.msra.mxu0 %v658
    %738 = vmatprep.subr.bf16.mxu0 0
    %739 = vmatpush2.bf16.msra.mxu0 0
    %740 = vmatprep.subr.bf16.mxu0 0
    %741 = vmatpush2.bf16.msra.mxu0 0
    %742 = vmatprep.subr.bf16.mxu0 0
    %743 = vmatpush2.bf16.msra.mxu0 0
    %744 = vmatprep.subr.bf16.mxu0 0
    %745 = vmatpush2.bf16.msra.mxu0 0
    %746 = vmatprep.subr.bf16.mxu0 0
    %747 = vmatpush2.bf16.msra.mxu0 0
    %748 = vmatprep.subr.bf16.mxu0 0
    %749 = vmatpush2.bf16.msra.mxu0 0
    %750 = vmatprep.subr.bf16.mxu0 0
    %751 = vmatpush2.bf16.msra.mxu0 0
    %752 = vmatprep.subr.bf16.mxu0 0
    %753 = vmatpush2.bf16.msra.mxu0 0
    %754 = vmatprep.mubr.bf16.mxu0 0
    %755 = vmatmul.mubr.bf16.gmra.mxu0 0
    %v756 = vpop.f32.mrf.mxu0
    %v757 = vadd.f32 0.0, %v756
    %v758 = vpop.f32.mrf.mxu0
    %v759 = vadd.f32 0.0, %v758
    %v760 = vpop.f32.mrf.mxu0
    %v761 = vpop.f32.mrf.mxu0
    %762 = vdwg.mxu0
    %763 = vmatprep.subr.bf16.mxu0 %v689
    %764 = vmatpush1.bf16.msra.mxu0 %v688
    %765 = vmatprep.subr.bf16.mxu0 %v685
    %766 = vmatpush1.bf16.msra.mxu0 %v684
    %767 = vmatprep.subr.bf16.mxu0 %v681
    %768 = vmatpush1.bf16.msra.mxu0 %v680
    %769 = vmatprep.subr.bf16.mxu0 %v677
    %770 = vmatpush1.bf16.msra.mxu0 %v676
    %771 = vmatprep.subr.bf16.mxu0 %v673
    %772 = vmatpush1.bf16.msra.mxu0 %v672
    %773 = vmatprep.subr.bf16.mxu0 %v669
    %774 = vmatpush1.bf16.msra.mxu0 %v668
    %775 = vmatprep.subr.bf16.mxu0 %v665
    %776 = vmatpush1.bf16.msra.mxu0 %v664
    %777 = vmatprep.subr.bf16.mxu0 %v661
    %778 = vmatpush1.bf16.msra.mxu0 %v660
    %779 = vmatprep.subr.bf16.mxu0 0
    %780 = vmatpush2.bf16.msra.mxu0 0
    %781 = vmatprep.subr.bf16.mxu0 0
    %782 = vmatpush2.bf16.msra.mxu0 0
    %783 = vmatprep.subr.bf16.mxu0 0
    %784 = vmatpush2.bf16.msra.mxu0 0
    %785 = vmatprep.subr.bf16.mxu0 0
    %786 = vmatpush2.bf16.msra.mxu0 0
    %787 = vmatprep.subr.bf16.mxu0 0
    %788 = vmatpush2.bf16.msra.mxu0 0
    %789 = vmatprep.subr.bf16.mxu0 0
    %790 = vmatpush2.bf16.msra.mxu0 0
    %791 = vmatprep.subr.bf16.mxu0 0
    %792 = vmatpush2.bf16.msra.mxu0 0
    %793 = vmatprep.subr.bf16.mxu0 0
    %794 = vmatpush2.bf16.msra.mxu0 0
    %795 = vmatprep.mubr.bf16.mxu0 0
    %796 = vmatmul.mubr.bf16.gmra.mxu0 0
    %v797 = vpop.f32.mrf.mxu0
    %v798 = vadd.f32 0.0, %v797
    %v799 = vpop.f32.mrf.mxu0
    %v800 = vadd.f32 0.0, %v799
    %v801 = vpop.f32.mrf.mxu0
    %v802 = vpop.f32.mrf.mxu0
    %803 = vdwg.mxu0
    %v804 = vadd.f32 %v526, %v757
    %v805 = vadd.f32 %v527, %v759
    %v806 = vadd.f32 %v528, %v798
    %v807 = vadd.f32 %v529, %v800
    %v808 = vxor.u32 %v804, 2147483648
    %v809 = vmul.f32 %v808, 1.442695
    %v810 = vpow.pop %v809
    %v811 = vadd.f32 %v810, 1.0
    %v812 = vrcp.pop %v811
    %v813 = vmul.f32 1.0, %v812
    %v814 = vxor.u32 %v805, 2147483648
    %v815 = vmul.f32 %v814, 1.442695
    %v816 = vpow.pop %v815
    %v817 = vadd.f32 %v816, 1.0
    %v818 = vrcp.pop %v817
    %v819 = vmul.f32 1.0, %v818
    %v820 = vtanh.pop %v806
    %v821 = vxor.u32 %v807, 2147483648
    %v822 = vmul.f32 %v821, 1.442695
    %v823 = vpow.pop %v822
    %v824 = vadd.f32 %v823, 1.0
    %v825 = vrcp.pop %v824
    %v826 = vmul.f32 1.0, %v825
    %v827 = vmul.f32 %v819, 0.0
    %v828 = vmul.f32 %v813, %v820
    %v829 = vadd.f32 %v827, %v828
    %v830 = vtanh.pop %v829
    %v831 = vmul.f32 %v826, %v830
    %832 = vst [vmem:[#allocation3] sm:$0xff] %v831
    %s833 = smul.u32 1, 4
    %s834 = smul.addr %s833, 8
    %s835 = scalar_lea.vmem [#allocation2], %s834
    %v836 = vld [vmem:[%s835] sm:$0xff]
    %v837 = vld [vmem:[%s835 + $0x8] sm:$0xff]
    %v838 = vld [vmem:[%s835 + $0x10] sm:$0xff]
    %v839 = vld [vmem:[%s835 + $0x18] sm:$0xff]
    %v840 = vpack.c.bf16 %v831, %v831
    %v841 = vld [vmem:[#allocation9] sm:$0xff]
    %v842 = vld [vmem:[#allocation9 + $0x8] sm:$0xff]
    %v843 = vld [vmem:[#allocation9 + $0x10] sm:$0xff]
    %v844 = vld [vmem:[#allocation9 + $0x18] sm:$0xff]
    %v845 = vld [vmem:[#allocation9 + $0x20] sm:$0xff]
    %v846 = vld [vmem:[#allocation9 + $0x28] sm:$0xff]
    %v847 = vld [vmem:[#allocation9 + $0x30] sm:$0xff]
    %v848 = vld [vmem:[#allocation9 + $0x38] sm:$0xff]
    %v849 = vld [vmem:[#allocation9 + $0x40] sm:$0xff]
    %v850 = vld [vmem:[#allocation9 + $0x48] sm:$0xff]
    %v851 = vld [vmem:[#allocation9 + $0x50] sm:$0xff]
    %v852 = vld [vmem:[#allocation9 + $0x58] sm:$0xff]
    %v853 = vld [vmem:[#allocation9 + $0x60] sm:$0xff]
    %v854 = vld [vmem:[#allocation9 + $0x68] sm:$0xff]
    %v855 = vld [vmem:[#allocation9 + $0x70] sm:$0xff]
    %v856 = vld [vmem:[#allocation9 + $0x78] sm:$0xff]
    %v857 = vld [vmem:[#allocation9 + $0x80] sm:$0xff]
    %v858 = vld [vmem:[#allocation9 + $0x88] sm:$0xff]
    %v859 = vld [vmem:[#allocation9 + $0x90] sm:$0xff]
    %v860 = vld [vmem:[#allocation9 + $0x98] sm:$0xff]
    %v861 = vld [vmem:[#allocation9 + $0xa0] sm:$0xff]
    %v862 = vld [vmem:[#allocation9 + $0xa8] sm:$0xff]
    %v863 = vld [vmem:[#allocation9 + $0xb0] sm:$0xff]
    %v864 = vld [vmem:[#allocation9 + $0xb8] sm:$0xff]
    %v865 = vld [vmem:[#allocation9 + $0xc0] sm:$0xff]
    %v866 = vld [vmem:[#allocation9 + $0xc8] sm:$0xff]
    %v867 = vld [vmem:[#allocation9 + $0xd0] sm:$0xff]
    %v868 = vld [vmem:[#allocation9 + $0xd8] sm:$0xff]
    %v869 = vld [vmem:[#allocation9 + $0xe0] sm:$0xff]
    %v870 = vld [vmem:[#allocation9 + $0xe8] sm:$0xff]
    %v871 = vld [vmem:[#allocation9 + $0xf0] sm:$0xff]
    %v872 = vld [vmem:[#allocation9 + $0xf8] sm:$0xff]
    %v905 = vunpack.c.l.b16 %v841
    %v906 = vunpack.c.h.b16 %v841
    %v907 = vunpack.c.l.b16 %v842
    %v908 = vunpack.c.h.b16 %v842
    %v909 = vunpack.c.l.b16 %v843
    %v910 = vunpack.c.h.b16 %v843
    %v911 = vunpack.c.l.b16 %v844
    %v912 = vunpack.c.h.b16 %v844
    %v913 = vunpack.c.l.b16 %v845
    %v914 = vunpack.c.h.b16 %v845
    %v915 = vunpack.c.l.b16 %v846
    %v916 = vunpack.c.h.b16 %v846
    %v917 = vunpack.c.l.b16 %v847
    %v918 = vunpack.c.h.b16 %v847
    %v919 = vunpack.c.l.b16 %v848
    %v920 = vunpack.c.h.b16 %v848
    %v921 = vunpack.c.l.b16 %v849
    %v922 = vunpack.c.h.b16 %v849
    %v923 = vunpack.c.l.b16 %v850
    %v924 = vunpack.c.h.b16 %v850
    %v925 = vunpack.c.l.b16 %v851
    %v926 = vunpack.c.h.b16 %v851
    %v927 = vunpack.c.l.b16 %v852
    %v928 = vunpack.c.h.b16 %v852
    %v929 = vunpack.c.l.b16 %v853
    %v930 = vunpack.c.h.b16 %v853
    %v931 = vunpack.c.l.b16 %v854
    %v932 = vunpack.c.h.b16 %v854
    %v933 = vunpack.c.l.b16 %v855
    %v934 = vunpack.c.h.b16 %v855
    %v935 = vunpack.c.l.b16 %v856
    %v936 = vunpack.c.h.b16 %v856
    %v937 = vunpack.c.l.b16 %v857
    %v938 = vunpack.c.h.b16 %v857
    %v939 = vunpack.c.l.b16 %v858
    %v940 = vunpack.c.h.b16 %v858
    %v941 = vunpack.c.l.b16 %v859
    %v942 = vunpack.c.h.b16 %v859
    %v943 = vunpack.c.l.b16 %v860
    %v944 = vunpack.c.h.b16 %v860
    %v945 = vunpack.c.l.b16 %v861
    %v946 = vunpack.c.h.b16 %v861
    %v947 = vunpack.c.l.b16 %v862
    %v948 = vunpack.c.h.b16 %v862
    %v949 = vunpack.c.l.b16 %v863
    %v950 = vunpack.c.h.b16 %v863
    %v951 = vunpack.c.l.b16 %v864
    %v952 = vunpack.c.h.b16 %v864
    %v953 = vunpack.c.l.b16 %v865
    %v954 = vunpack.c.h.b16 %v865
    %v955 = vunpack.c.l.b16 %v866
    %v956 = vunpack.c.h.b16 %v866
    %v957 = vunpack.c.l.b16 %v867
    %v958 = vunpack.c.h.b16 %v867
    %v959 = vunpack.c.l.b16 %v868
    %v960 = vunpack.c.h.b16 %v868
    %v961 = vunpack.c.l.b16 %v869
    %v962 = vunpack.c.h.b16 %v869
    %v963 = vunpack.c.l.b16 %v870
    %v964 = vunpack.c.h.b16 %v870
    %v965 = vunpack.c.l.b16 %v871
    %v966 = vunpack.c.h.b16 %v871
    %v967 = vunpack.c.l.b16 %v872
    %v968 = vunpack.c.h.b16 %v872
    %v969 = vpack.c.b16 %v909, %v905
    %v970 = vpack.c.b16 %v910, %v906
    %v971 = vpack.c.b16 %v911, %v907
    %v972 = vpack.c.b16 %v912, %v908
    %v973 = vpack.c.b16 %v917, %v913
    %v974 = vpack.c.b16 %v918, %v914
    %v975 = vpack.c.b16 %v919, %v915
    %v976 = vpack.c.b16 %v920, %v916
    %v977 = vpack.c.b16 %v925, %v921
    %v978 = vpack.c.b16 %v926, %v922
    %v979 = vpack.c.b16 %v927, %v923
    %v980 = vpack.c.b16 %v928, %v924
    %v981 = vpack.c.b16 %v933, %v929
    %v982 = vpack.c.b16 %v934, %v930
    %v983 = vpack.c.b16 %v935, %v931
    %v984 = vpack.c.b16 %v936, %v932
    %v985 = vpack.c.b16 %v941, %v937
    %v986 = vpack.c.b16 %v942, %v938
    %v987 = vpack.c.b16 %v943, %v939
    %v988 = vpack.c.b16 %v944, %v940
    %v989 = vpack.c.b16 %v949, %v945
    %v990 = vpack.c.b16 %v950, %v946
    %v991 = vpack.c.b16 %v951, %v947
    %v992 = vpack.c.b16 %v952, %v948
    %v993 = vpack.c.b16 %v957, %v953
    %v994 = vpack.c.b16 %v958, %v954
    %v995 = vpack.c.b16 %v959, %v955
    %v996 = vpack.c.b16 %v960, %v956
    %v997 = vpack.c.b16 %v965, %v961
    %v998 = vpack.c.b16 %v966, %v962
    %v999 = vpack.c.b16 %v967, %v963
    %v1000 = vpack.c.b16 %v968, %v964
    %1033 = vmatprep.subr.bf16.mxu0 %v998
    %1034 = vmatpush1.bf16.msra.mxu0 %v997
    %1035 = vmatprep.subr.bf16.mxu0 %v994
    %1036 = vmatpush1.bf16.msra.mxu0 %v993
    %1037 = vmatprep.subr.bf16.mxu0 %v990
    %1038 = vmatpush1.bf16.msra.mxu0 %v989
    %1039 = vmatprep.subr.bf16.mxu0 %v986
    %1040 = vmatpush1.bf16.msra.mxu0 %v985
    %1041 = vmatprep.subr.bf16.mxu0 %v982
    %1042 = vmatpush1.bf16.msra.mxu0 %v981
    %1043 = vmatprep.subr.bf16.mxu0 %v978
    %1044 = vmatpush1.bf16.msra.mxu0 %v977
    %1045 = vmatprep.subr.bf16.mxu0 %v974
    %1046 = vmatpush1.bf16.msra.mxu0 %v973
    %1047 = vmatprep.subr.bf16.mxu0 %v970
    %1048 = vmatpush1.bf16.msra.mxu0 %v969
    %1049 = vmatprep.subr.bf16.mxu0 0
    %1050 = vmatpush2.bf16.msra.mxu0 0
    %1051 = vmatprep.subr.bf16.mxu0 0
    %1052 = vmatpush2.bf16.msra.mxu0 0
    %1053 = vmatprep.subr.bf16.mxu0 0
    %1054 = vmatpush2.bf16.msra.mxu0 0
    %1055 = vmatprep.subr.bf16.mxu0 0
    %1056 = vmatpush2.bf16.msra.mxu0 0
    %1057 = vmatprep.subr.bf16.mxu0 0
    %1058 = vmatpush2.bf16.msra.mxu0 0
    %1059 = vmatprep.subr.bf16.mxu0 0
    %1060 = vmatpush2.bf16.msra.mxu0 0
    %1061 = vmatprep.subr.bf16.mxu0 0
    %1062 = vmatpush2.bf16.msra.mxu0 0
    %1063 = vmatprep.subr.bf16.mxu0 0
    %1064 = vmatpush2.bf16.msra.mxu0 0
    %1065 = vmatprep.mubr.bf16.mxu0 0
    %1066 = vmatmul.mubr.bf16.gmra.mxu0 %v840
    %v1067 = vpop.f32.mrf.mxu0
    %v1068 = vadd.f32 0.0, %v1067
    %v1069 = vpop.f32.mrf.mxu0
    %v1070 = vadd.f32 0.0, %v1069
    %v1071 = vpop.f32.mrf.mxu0
    %v1072 = vpop.f32.mrf.mxu0
    %1073 = vdwg.mxu0
    %1074 = vmatprep.subr.bf16.mxu0 %v1000
    %1075 = vmatpush1.bf16.msra.mxu0 %v999
    %1076 = vmatprep.subr.bf16.mxu0 %v996
    %1077 = vmatpush1.bf16.msra.mxu0 %v995
    %1078 = vmatprep.subr.bf16.mxu0 %v992
    %1079 = vmatpush1.bf16.msra.mxu0 %v991
    %1080 = vmatprep.subr.bf16.mxu0 %v988
    %1081 = vmatpush1.bf16.msra.mxu0 %v987
    %1082 = vmatprep.subr.bf16.mxu0 %v984
    %1083 = vmatpush1.bf16.msra.mxu0 %v983
    %1084 = vmatprep.subr.bf16.mxu0 %v980
    %1085 = vmatpush1.bf16.msra.mxu0 %v979
    %1086 = vmatprep.subr.bf16.mxu0 %v976
    %1087 = vmatpush1.bf16.msra.mxu0 %v975
    %1088 = vmatprep.subr.bf16.mxu0 %v972
    %1089 = vmatpush1.bf16.msra.mxu0 %v971
    %1090 = vmatprep.subr.bf16.mxu0 0
    %1091 = vmatpush2.bf16.msra.mxu0 0
    %1092 = vmatprep.subr.bf16.mxu0 0
    %1093 = vmatpush2.bf16.msra.mxu0 0
    %1094 = vmatprep.subr.bf16.mxu0 0
    %1095 = vmatpush2.bf16.msra.mxu0 0
    %1096 = vmatprep.subr.bf16.mxu0 0
    %1097 = vmatpush2.bf16.msra.mxu0 0
    %1098 = vmatprep.subr.bf16.mxu0 0
    %1099 = vmatpush2.bf16.msra.mxu0 0
    %1100 = vmatprep.subr.bf16.mxu0 0
    %1101 = vmatpush2.bf16.msra.mxu0 0
    %1102 = vmatprep.subr.bf16.mxu0 0
    %1103 = vmatpush2.bf16.msra.mxu0 0
    %1104 = vmatprep.subr.bf16.mxu0 0
    %1105 = vmatpush2.bf16.msra.mxu0 0
    %1106 = vmatprep.mubr.bf16.mxu0 0
    %1107 = vmatmul.mubr.bf16.gmra.mxu0 %v840
    %v1108 = vpop.f32.mrf.mxu0
    %v1109 = vadd.f32 0.0, %v1108
    %v1110 = vpop.f32.mrf.mxu0
    %v1111 = vadd.f32 0.0, %v1110
    %v1112 = vpop.f32.mrf.mxu0
    %v1113 = vpop.f32.mrf.mxu0
    %1114 = vdwg.mxu0
    %v1115 = vadd.f32 %v836, %v1068
    %v1116 = vadd.f32 %v837, %v1070
    %v1117 = vadd.f32 %v838, %v1109
    %v1118 = vadd.f32 %v839, %v1111
    %v1119 = vxor.u32 %v1115, 2147483648
    %v1120 = vmul.f32 %v1119, 1.442695
    %v1121 = vpow.pop %v1120
    %v1122 = vadd.f32 %v1121, 1.0
    %v1123 = vrcp.pop %v1122
    %v1124 = vmul.f32 1.0, %v1123
    %v1125 = vxor.u32 %v1116, 2147483648
    %v1126 = vmul.f32 %v1125, 1.442695
    %v1127 = vpow.pop %v1126
    %v1128 = vadd.f32 %v1127, 1.0
    %v1129 = vrcp.pop %v1128
    %v1130 = vmul.f32 1.0, %v1129
    %v1131 = vtanh.pop %v1117
    %v1132 = vxor.u32 %v1118, 2147483648
    %v1133 = vmul.f32 %v1132, 1.442695
    %v1134 = vpow.pop %v1133
    %v1135 = vadd.f32 %v1134, 1.0
    %v1136 = vrcp.pop %v1135
    %v1137 = vmul.f32 1.0, %v1136
    %v1138 = vmul.f32 %v1130, %v829
    %v1139 = vmul.f32 %v1124, %v1131
    %v1140 = vadd.f32 %v1138, %v1139
    %v1141 = vtanh.pop %v1140
    %v1142 = vmul.f32 %v1137, %v1141
    %s1143 = scalar_lea.vmem [#allocation3], 8
    %1144 = vst [vmem:[%s1143] sm:$0xff] %v1142
    %s1145 = smul.u32 2, 4
    %s1146 = smul.addr %s1145, 8
    %s1147 = scalar_lea.vmem [#allocation2], %s1146
    %v1148 = vld [vmem:[%s1147] sm:$0xff]
    %v1149 = vld [vmem:[%s1147 + $0x8] sm:$0xff]
    %v1150 = vld [vmem:[%s1147 + $0x10] sm:$0xff]
    %v1151 = vld [vmem:[%s1147 + $0x18] sm:$0xff]
    %v1152 = vpack.c.bf16 %v1142, %v1142
    %v1153 = vld [vmem:[#allocation9] sm:$0xff]
    %v1154 = vld [vmem:[#allocation9 + $0x8] sm:$0xff]
    %v1155 = vld [vmem:[#allocation9 + $0x10] sm:$0xff]
    %v1156 = vld [vmem:[#allocation9 + $0x18] sm:$0xff]
    %v1157 = vld [vmem:[#allocation9 + $0x20] sm:$0xff]
    %v1158 = vld [vmem:[#allocation9 + $0x28] sm:$0xff]
    %v1159 = vld [vmem:[#allocation9 + $0x30] sm:$0xff]
    %v1160 = vld [vmem:[#allocation9 + $0x38] sm:$0xff]
    %v1161 = vld [vmem:[#allocation9 + $0x40] sm:$0xff]
    %v1162 = vld [vmem:[#allocation9 + $0x48] sm:$0xff]
    %v1163 = vld [vmem:[#allocation9 + $0x50] sm:$0xff]
    %v1164 = vld [vmem:[#allocation9 + $0x58] sm:$0xff]
    %v1165 = vld [vmem:[#allocation9 + $0x60] sm:$0xff]
    %v1166 = vld [vmem:[#allocation9 + $0x68] sm:$0xff]
    %v1167 = vld [vmem:[#allocation9 + $0x70] sm:$0xff]
    %v1168 = vld [vmem:[#allocation9 + $0x78] sm:$0xff]
    %v1169 = vld [vmem:[#allocation9 + $0x80] sm:$0xff]
    %v1170 = vld [vmem:[#allocation9 + $0x88] sm:$0xff]
    %v1171 = vld [vmem:[#allocation9 + $0x90] sm:$0xff]
    %v1172 = vld [vmem:[#allocation9 + $0x98] sm:$0xff]
    %v1173 = vld [vmem:[#allocation9 + $0xa0] sm:$0xff]
    %v1174 = vld [vmem:[#allocation9 + $0xa8] sm:$0xff]
    %v1175 = vld [vmem:[#allocation9 + $0xb0] sm:$0xff]
    %v1176 = vld [vmem:[#allocation9 + $0xb8] sm:$0xff]
    %v1177 = vld [vmem:[#allocation9 + $0xc0] sm:$0xff]
    %v1178 = vld [vmem:[#allocation9 + $0xc8] sm:$0xff]
    %v1179 = vld [vmem:[#allocation9 + $0xd0] sm:$0xff]
    %v1180 = vld [vmem:[#allocation9 + $0xd8] sm:$0xff]
    %v1181 = vld [vmem:[#allocation9 + $0xe0] sm:$0xff]
    %v1182 = vld [vmem:[#allocation9 + $0xe8] sm:$0xff]
    %v1183 = vld [vmem:[#allocation9 + $0xf0] sm:$0xff]
    %v1184 = vld [vmem:[#allocation9 + $0xf8] sm:$0xff]
    %v1217 = vunpack.c.l.b16 %v1153
    %v1218 = vunpack.c.h.b16 %v1153
    %v1219 = vunpack.c.l.b16 %v1154
    %v1220 = vunpack.c.h.b16 %v1154
    %v1221 = vunpack.c.l.b16 %v1155
    %v1222 = vunpack.c.h.b16 %v1155
    %v1223 = vunpack.c.l.b16 %v1156
    %v1224 = vunpack.c.h.b16 %v1156
    %v1225 = vunpack.c.l.b16 %v1157
    %v1226 = vunpack.c.h.b16 %v1157
    %v1227 = vunpack.c.l.b16 %v1158
    %v1228 = vunpack.c.h.b16 %v1158
    %v1229 = vunpack.c.l.b16 %v1159
    %v1230 = vunpack.c.h.b16 %v1159
    %v1231 = vunpack.c.l.b16 %v1160
    %v1232 = vunpack.c.h.b16 %v1160
    %v1233 = vunpack.c.l.b16 %v1161
    %v1234 = vunpack.c.h.b16 %v1161
    %v1235 = vunpack.c.l.b16 %v1162
    %v1236 = vunpack.c.h.b16 %v1162
    %v1237 = vunpack.c.l.b16 %v1163
    %v1238 = vunpack.c.h.b16 %v1163
    %v1239 = vunpack.c.l.b16 %v1164
    %v1240 = vunpack.c.h.b16 %v1164
    %v1241 = vunpack.c.l.b16 %v1165
    %v1242 = vunpack.c.h.b16 %v1165
    %v1243 = vunpack.c.l.b16 %v1166
    %v1244 = vunpack.c.h.b16 %v1166
    %v1245 = vunpack.c.l.b16 %v1167
    %v1246 = vunpack.c.h.b16 %v1167
    %v1247 = vunpack.c.l.b16 %v1168
    %v1248 = vunpack.c.h.b16 %v1168
    %v1249 = vunpack.c.l.b16 %v1169
    %v1250 = vunpack.c.h.b16 %v1169
    %v1251 = vunpack.c.l.b16 %v1170
    %v1252 = vunpack.c.h.b16 %v1170
    %v1253 = vunpack.c.l.b16 %v1171
    %v1254 = vunpack.c.h.b16 %v1171
    %v1255 = vunpack.c.l.b16 %v1172
    %v1256 = vunpack.c.h.b16 %v1172
    %v1257 = vunpack.c.l.b16 %v1173
    %v1258 = vunpack.c.h.b16 %v1173
    %v1259 = vunpack.c.l.b16 %v1174
    %v1260 = vunpack.c.h.b16 %v1174
    %v1261 = vunpack.c.l.b16 %v1175
    %v1262 = vunpack.c.h.b16 %v1175
    %v1263 = vunpack.c.l.b16 %v1176
    %v1264 = vunpack.c.h.b16 %v1176
    %v1265 = vunpack.c.l.b16 %v1177
    %v1266 = vunpack.c.h.b16 %v1177
    %v1267 = vunpack.c.l.b16 %v1178
    %v1268 = vunpack.c.h.b16 %v1178
    %v1269 = vunpack.c.l.b16 %v1179
    %v1270 = vunpack.c.h.b16 %v1179
    %v1271 = vunpack.c.l.b16 %v1180
    %v1272 = vunpack.c.h.b16 %v1180
    %v1273 = vunpack.c.l.b16 %v1181
    %v1274 = vunpack.c.h.b16 %v1181
    %v1275 = vunpack.c.l.b16 %v1182
    %v1276 = vunpack.c.h.b16 %v1182
    %v1277 = vunpack.c.l.b16 %v1183
    %v1278 = vunpack.c.h.b16 %v1183
    %v1279 = vunpack.c.l.b16 %v1184
    %v1280 = vunpack.c.h.b16 %v1184
    %v1281 = vpack.c.b16 %v1221, %v1217
    %v1282 = vpack.c.b16 %v1222, %v1218
    %v1283 = vpack.c.b16 %v1223, %v1219
    %v1284 = vpack.c.b16 %v1224, %v1220
    %v1285 = vpack.c.b16 %v1229, %v1225
    %v1286 = vpack.c.b16 %v1230, %v1226
    %v1287 = vpack.c.b16 %v1231, %v1227
    %v1288 = vpack.c.b16 %v1232, %v1228
    %v1289 = vpack.c.b16 %v1237, %v1233
    %v1290 = vpack.c.b16 %v1238, %v1234
    %v1291 = vpack.c.b16 %v1239, %v1235
    %v1292 = vpack.c.b16 %v1240, %v1236
    %v1293 = vpack.c.b16 %v1245, %v1241
    %v1294 = vpack.c.b16 %v1246, %v1242
    %v1295 = vpack.c.b16 %v1247, %v1243
    %v1296 = vpack.c.b16 %v1248, %v1244
    %v1297 = vpack.c.b16 %v1253, %v1249
    %v1298 = vpack.c.b16 %v1254, %v1250
    %v1299 = vpack.c.b16 %v1255, %v1251
    %v1300 = vpack.c.b16 %v1256, %v1252
    %v1301 = vpack.c.b16 %v1261, %v1257
    %v1302 = vpack.c.b16 %v1262, %v1258
    %v1303 = vpack.c.b16 %v1263, %v1259
    %v1304 = vpack.c.b16 %v1264, %v1260
    %v1305 = vpack.c.b16 %v1269, %v1265
    %v1306 = vpack.c.b16 %v1270, %v1266
    %v1307 = vpack.c.b16 %v1271, %v1267
    %v1308 = vpack.c.b16 %v1272, %v1268
    %v1309 = vpack.c.b16 %v1277, %v1273
    %v1310 = vpack.c.b16 %v1278, %v1274
    %v1311 = vpack.c.b16 %v1279, %v1275
    %v1312 = vpack.c.b16 %v1280, %v1276
    %1345 = vmatprep.subr.bf16.mxu0 %v1310
    %1346 = vmatpush1.bf16.msra.mxu0 %v1309
    %1347 = vmatprep.subr.bf16.mxu0 %v1306
    %1348 = vmatpush1.bf16.msra.mxu0 %v1305
    %1349 = vmatprep.subr.bf16.mxu0 %v1302
    %1350 = vmatpush1.bf16.msra.mxu0 %v1301
    %1351 = vmatprep.subr.bf16.mxu0 %v1298
    %1352 = vmatpush1.bf16.msra.mxu0 %v1297
    %1353 = vmatprep.subr.bf16.mxu0 %v1294
    %1354 = vmatpush1.bf16.msra.mxu0 %v1293
    %1355 = vmatprep.subr.bf16.mxu0 %v1290
    %1356 = vmatpush1.bf16.msra.mxu0 %v1289
    %1357 = vmatprep.subr.bf16.mxu0 %v1286
    %1358 = vmatpush1.bf16.msra.mxu0 %v1285
    %1359 = vmatprep.subr.bf16.mxu0 %v1282
    %1360 = vmatpush1.bf16.msra.mxu0 %v1281
    %1361 = vmatprep.subr.bf16.mxu0 0
    %1362 = vmatpush2.bf16.msra.mxu0 0
    %1363 = vmatprep.subr.bf16.mxu0 0
    %1364 = vmatpush2.bf16.msra.mxu0 0
    %1365 = vmatprep.subr.bf16.mxu0 0
    %1366 = vmatpush2.bf16.msra.mxu0 0
    %1367 = vmatprep.subr.bf16.mxu0 0
    %1368 = vmatpush2.bf16.msra.mxu0 0
    %1369 = vmatprep.subr.bf16.mxu0 0
    %1370 = vmatpush2.bf16.msra.mxu0 0
    %1371 = vmatprep.subr.bf16.mxu0 0
    %1372 = vmatpush2.bf16.msra.mxu0 0
    %1373 = vmatprep.subr.bf16.mxu0 0
    %1374 = vmatpush2.bf16.msra.mxu0 0
    %1375 = vmatprep.subr.bf16.mxu0 0
    %1376 = vmatpush2.bf16.msra.mxu0 0
    %1377 = vmatprep.mubr.bf16.mxu0 0
    %1378 = vmatmul.mubr.bf16.gmra.mxu0 %v1152
    %v1379 = vpop.f32.mrf.mxu0
    %v1380 = vadd.f32 0.0, %v1379
    %v1381 = vpop.f32.mrf.mxu0
    %v1382 = vadd.f32 0.0, %v1381
    %v1383 = vpop.f32.mrf.mxu0
    %v1384 = vpop.f32.mrf.mxu0
    %1385 = vdwg.mxu0
    %1386 = vmatprep.subr.bf16.mxu0 %v1312
    %1387 = vmatpush1.bf16.msra.mxu0 %v1311
    %1388 = vmatprep.subr.bf16.mxu0 %v1308
    %1389 = vmatpush1.bf16.msra.mxu0 %v1307
    %1390 = vmatprep.subr.bf16.mxu0 %v1304
    %1391 = vmatpush1.bf16.msra.mxu0 %v1303
    %1392 = vmatprep.subr.bf16.mxu0 %v1300
    %1393 = vmatpush1.bf16.msra.mxu0 %v1299
    %1394 = vmatprep.subr.bf16.mxu0 %v1296
    %1395 = vmatpush1.bf16.msra.mxu0 %v1295
    %1396 = vmatprep.subr.bf16.mxu0 %v1292
    %1397 = vmatpush1.bf16.msra.mxu0 %v1291
    %1398 = vmatprep.subr.bf16.mxu0 %v1288
    %1399 = vmatpush1.bf16.msra.mxu0 %v1287
    %1400 = vmatprep.subr.bf16.mxu0 %v1284
    %1401 = vmatpush1.bf16.msra.mxu0 %v1283
    %1402 = vmatprep.subr.bf16.mxu0 0
    %1403 = vmatpush2.bf16.msra.mxu0 0
    %1404 = vmatprep.subr.bf16.mxu0 0
    %1405 = vmatpush2.bf16.msra.mxu0 0
    %1406 = vmatprep.subr.bf16.mxu0 0
    %1407 = vmatpush2.bf16.msra.mxu0 0
    %1408 = vmatprep.subr.bf16.mxu0 0
    %1409 = vmatpush2.bf16.msra.mxu0 0
    %1410 = vmatprep.subr.bf16.mxu0 0
    %1411 = vmatpush2.bf16.msra.mxu0 0
    %1412 = vmatprep.subr.bf16.mxu0 0
    %1413 = vmatpush2.bf16.msra.mxu0 0
    %1414 = vmatprep.subr.bf16.mxu0 0
    %1415 = vmatpush2.bf16.msra.mxu0 0
    %1416 = vmatprep.subr.bf16.mxu0 0
    %1417 = vmatpush2.bf16.msra.mxu0 0
    %1418 = vmatprep.mubr.bf16.mxu0 0
    %1419 = vmatmul.mubr.bf16.gmra.mxu0 %v1152
    %v1420 = vpop.f32.mrf.mxu0
    %v1421 = vadd.f32 0.0, %v1420
    %v1422 = vpop.f32.mrf.mxu0
    %v1423 = vadd.f32 0.0, %v1422
    %v1424 = vpop.f32.mrf.mxu0
    %v1425 = vpop.f32.mrf.mxu0
    %1426 = vdwg.mxu0
    %v1427 = vadd.f32 %v1148, %v1380
    %v1428 = vadd.f32 %v1149, %v1382
    %v1429 = vadd.f32 %v1150, %v1421
    %v1430 = vadd.f32 %v1151, %v1423
    %v1431 = vxor.u32 %v1427, 2147483648
    %v1432 = vmul.f32 %v1431, 1.442695
    %v1433 = vpow.pop %v1432
    %v1434 = vadd.f32 %v1433, 1.0
    %v1435 = vrcp.pop %v1434
    %v1436 = vmul.f32 1.0, %v1435
    %v1437 = vxor.u32 %v1428, 2147483648
    %v1438 = vmul.f32 %v1437, 1.442695
    %v1439 = vpow.pop %v1438
    %v1440 = vadd.f32 %v1439, 1.0
    %v1441 = vrcp.pop %v1440
    %v1442 = vmul.f32 1.0, %v1441
    %v1443 = vtanh.pop %v1429
    %v1444 = vxor.u32 %v1430, 2147483648
    %v1445 = vmul.f32 %v1444, 1.442695
    %v1446 = vpow.pop %v1445
    %v1447 = vadd.f32 %v1446, 1.0
    %v1448 = vrcp.pop %v1447
    %v1449 = vmul.f32 1.0, %v1448
    %v1450 = vmul.f32 %v1442, %v1140
    %v1451 = vmul.f32 %v1436, %v1443
    %v1452 = vadd.f32 %v1450, %v1451
    %v1453 = vtanh.pop %v1452
    %v1454 = vmul.f32 %v1449, %v1453
    %s1455 = scalar_lea.vmem [#allocation3], 16
    %1456 = vst [vmem:[%s1455] sm:$0xff] %v1454
    %s1457 = smul.u32 3, 4
    %s1458 = smul.addr %s1457, 8
    %s1459 = scalar_lea.vmem [#allocation2], %s1458
    %v1460 = vld [vmem:[%s1459] sm:$0xff]
    %v1461 = vld [vmem:[%s1459 + $0x8] sm:$0xff]
    %v1462 = vld [vmem:[%s1459 + $0x10] sm:$0xff]
    %v1463 = vld [vmem:[%s1459 + $0x18] sm:$0xff]
    %v1464 = vpack.c.bf16 %v1454, %v1454
    %v1465 = vld [vmem:[#allocation9] sm:$0xff]
    %v1466 = vld [vmem:[#allocation9 + $0x8] sm:$0xff]
    %v1467 = vld [vmem:[#allocation9 + $0x10] sm:$0xff]
    %v1468 = vld [vmem:[#allocation9 + $0x18] sm:$0xff]
    %v1469 = vld [vmem:[#allocation9 + $0x20] sm:$0xff]
    %v1470 = vld [vmem:[#allocation9 + $0x28] sm:$0xff]
    %v1471 = vld [vmem:[#allocation9 + $0x30] sm:$0xff]
    %v1472 = vld [vmem:[#allocation9 + $0x38] sm:$0xff]
    %v1473 = vld [vmem:[#allocation9 + $0x40] sm:$0xff]
    %v1474 = vld [vmem:[#allocation9 + $0x48] sm:$0xff]
    %v1475 = vld [vmem:[#allocation9 + $0x50] sm:$0xff]
    %v1476 = vld [vmem:[#allocation9 + $0x58] sm:$0xff]
    %v1477 = vld [vmem:[#allocation9 + $0x60] sm:$0xff]
    %v1478 = vld [vmem:[#allocation9 + $0x68] sm:$0xff]
    %v1479 = vld [vmem:[#allocation9 + $0x70] sm:$0xff]
    %v1480 = vld [vmem:[#allocation9 + $0x78] sm:$0xff]
    %v1481 = vld [vmem:[#allocation9 + $0x80] sm:$0xff]
    %v1482 = vld [vmem:[#allocation9 + $0x88] sm:$0xff]
    %v1483 = vld [vmem:[#allocation9 + $0x90] sm:$0xff]
    %v1484 = vld [vmem:[#allocation9 + $0x98] sm:$0xff]
    %v1485 = vld [vmem:[#allocation9 + $0xa0] sm:$0xff]
    %v1486 = vld [vmem:[#allocation9 + $0xa8] sm:$0xff]
    %v1487 = vld [vmem:[#allocation9 + $0xb0] sm:$0xff]
    %v1488 = vld [vmem:[#allocation9 + $0xb8] sm:$0xff]
    %v1489 = vld [vmem:[#allocation9 + $0xc0] sm:$0xff]
    %v1490 = vld [vmem:[#allocation9 + $0xc8] sm:$0xff]
    %v1491 = vld [vmem:[#allocation9 + $0xd0] sm:$0xff]
    %v1492 = vld [vmem:[#allocation9 + $0xd8] sm:$0xff]
    %v1493 = vld [vmem:[#allocation9 + $0xe0] sm:$0xff]
    %v1494 = vld [vmem:[#allocation9 + $0xe8] sm:$0xff]
    %v1495 = vld [vmem:[#allocation9 + $0xf0] sm:$0xff]
    %v1496 = vld [vmem:[#allocation9 + $0xf8] sm:$0xff]
    %v1529 = vunpack.c.l.b16 %v1465
    %v1530 = vunpack.c.h.b16 %v1465
    %v1531 = vunpack.c.l.b16 %v1466
    %v1532 = vunpack.c.h.b16 %v1466
    %v1533 = vunpack.c.l.b16 %v1467
    %v1534 = vunpack.c.h.b16 %v1467
    %v1535 = vunpack.c.l.b16 %v1468
    %v1536 = vunpack.c.h.b16 %v1468
    %v1537 = vunpack.c.l.b16 %v1469
    %v1538 = vunpack.c.h.b16 %v1469
    %v1539 = vunpack.c.l.b16 %v1470
    %v1540 = vunpack.c.h.b16 %v1470
    %v1541 = vunpack.c.l.b16 %v1471
    %v1542 = vunpack.c.h.b16 %v1471
    %v1543 = vunpack.c.l.b16 %v1472
    %v1544 = vunpack.c.h.b16 %v1472
    %v1545 = vunpack.c.l.b16 %v1473
    %v1546 = vunpack.c.h.b16 %v1473
    %v1547 = vunpack.c.l.b16 %v1474
    %v1548 = vunpack.c.h.b16 %v1474
    %v1549 = vunpack.c.l.b16 %v1475
    %v1550 = vunpack.c.h.b16 %v1475
    %v1551 = vunpack.c.l.b16 %v1476
    %v1552 = vunpack.c.h.b16 %v1476
    %v1553 = vunpack.c.l.b16 %v1477
    %v1554 = vunpack.c.h.b16 %v1477
    %v1555 = vunpack.c.l.b16 %v1478
    %v1556 = vunpack.c.h.b16 %v1478
    %v1557 = vunpack.c.l.b16 %v1479
    %v1558 = vunpack.c.h.b16 %v1479
    %v1559 = vunpack.c.l.b16 %v1480
    %v1560 = vunpack.c.h.b16 %v1480
    %v1561 = vunpack.c.l.b16 %v1481
    %v1562 = vunpack.c.h.b16 %v1481
    %v1563 = vunpack.c.l.b16 %v1482
    %v1564 = vunpack.c.h.b16 %v1482
    %v1565 = vunpack.c.l.b16 %v1483
    %v1566 = vunpack.c.h.b16 %v1483
    %v1567 = vunpack.c.l.b16 %v1484
    %v1568 = vunpack.c.h.b16 %v1484
    %v1569 = vunpack.c.l.b16 %v1485
    %v1570 = vunpack.c.h.b16 %v1485
    %v1571 = vunpack.c.l.b16 %v1486
    %v1572 = vunpack.c.h.b16 %v1486
    %v1573 = vunpack.c.l.b16 %v1487
    %v1574 = vunpack.c.h.b16 %v1487
    %v1575 = vunpack.c.l.b16 %v1488
    %v1576 = vunpack.c.h.b16 %v1488
    %v1577 = vunpack.c.l.b16 %v1489
    %v1578 = vunpack.c.h.b16 %v1489
    %v1579 = vunpack.c.l.b16 %v1490
    %v1580 = vunpack.c.h.b16 %v1490
    %v1581 = vunpack.c.l.b16 %v1491
    %v1582 = vunpack.c.h.b16 %v1491
    %v1583 = vunpack.c.l.b16 %v1492
    %v1584 = vunpack.c.h.b16 %v1492
    %v1585 = vunpack.c.l.b16 %v1493
    %v1586 = vunpack.c.h.b16 %v1493
    %v1587 = vunpack.c.l.b16 %v1494
    %v1588 = vunpack.c.h.b16 %v1494
    %v1589 = vunpack.c.l.b16 %v1495
    %v1590 = vunpack.c.h.b16 %v1495
    %v1591 = vunpack.c.l.b16 %v1496
    %v1592 = vunpack.c.h.b16 %v1496
    %v1593 = vpack.c.b16 %v1533, %v1529
    %v1594 = vpack.c.b16 %v1534, %v1530
    %v1595 = vpack.c.b16 %v1535, %v1531
    %v1596 = vpack.c.b16 %v1536, %v1532
    %v1597 = vpack.c.b16 %v1541, %v1537
    %v1598 = vpack.c.b16 %v1542, %v1538
    %v1599 = vpack.c.b16 %v1543, %v1539
    %v1600 = vpack.c.b16 %v1544, %v1540
    %v1601 = vpack.c.b16 %v1549, %v1545
    %v1602 = vpack.c.b16 %v1550, %v1546
    %v1603 = vpack.c.b16 %v1551, %v1547
    %v1604 = vpack.c.b16 %v1552, %v1548
    %v1605 = vpack.c.b16 %v1557, %v1553
    %v1606 = vpack.c.b16 %v1558, %v1554
    %v1607 = vpack.c.b16 %v1559, %v1555
    %v1608 = vpack.c.b16 %v1560, %v1556
    %v1609 = vpack.c.b16 %v1565, %v1561
    %v1610 = vpack.c.b16 %v1566, %v1562
    %v1611 = vpack.c.b16 %v1567, %v1563
    %v1612 = vpack.c.b16 %v1568, %v1564
    %v1613 = vpack.c.b16 %v1573, %v1569
    %v1614 = vpack.c.b16 %v1574, %v1570
    %v1615 = vpack.c.b16 %v1575, %v1571
    %v1616 = vpack.c.b16 %v1576, %v1572
    %v1617 = vpack.c.b16 %v1581, %v1577
    %v1618 = vpack.c.b16 %v1582, %v1578
    %v1619 = vpack.c.b16 %v1583, %v1579
    %v1620 = vpack.c.b16 %v1584, %v1580
    %v1621 = vpack.c.b16 %v1589, %v1585
    %v1622 = vpack.c.b16 %v1590, %v1586
    %v1623 = vpack.c.b16 %v1591, %v1587
    %v1624 = vpack.c.b16 %v1592, %v1588
    %1657 = vmatprep.subr.bf16.mxu0 %v1622
    %1658 = vmatpush1.bf16.msra.mxu0 %v1621
    %1659 = vmatprep.subr.bf16.mxu0 %v1618
    %1660 = vmatpush1.bf16.msra.mxu0 %v1617
    %1661 = vmatprep.subr.bf16.mxu0 %v1614
    %1662 = vmatpush1.bf16.msra.mxu0 %v1613
    %1663 = vmatprep.subr.bf16.mxu0 %v1610
    %1664 = vmatpush1.bf16.msra.mxu0 %v1609
    %1665 = vmatprep.subr.bf16.mxu0 %v1606
    %1666 = vmatpush1.bf16.msra.mxu0 %v1605
    %1667 = vmatprep.subr.bf16.mxu0 %v1602
    %1668 = vmatpush1.bf16.msra.mxu0 %v1601
    %1669 = vmatprep.subr.bf16.mxu0 %v1598
    %1670 = vmatpush1.bf16.msra.mxu0 %v1597
    %1671 = vmatprep.subr.bf16.mxu0 %v1594
    %1672 = vmatpush1.bf16.msra.mxu0 %v1593
    %1673 = vmatprep.subr.bf16.mxu0 0
    %1674 = vmatpush2.bf16.msra.mxu0 0
    %1675 = vmatprep.subr.bf16.mxu0 0
    %1676 = vmatpush2.bf16.msra.mxu0 0
    %1677 = vmatprep.subr.bf16.mxu0 0
    %1678 = vmatpush2.bf16.msra.mxu0 0
    %1679 = vmatprep.subr.bf16.mxu0 0
    %1680 = vmatpush2.bf16.msra.mxu0 0
    %1681 = vmatprep.subr.bf16.mxu0 0
    %1682 = vmatpush2.bf16.msra.mxu0 0
    %1683 = vmatprep.subr.bf16.mxu0 0
    %1684 = vmatpush2.bf16.msra.mxu0 0
    %1685 = vmatprep.subr.bf16.mxu0 0
    %1686 = vmatpush2.bf16.msra.mxu0 0
    %1687 = vmatprep.subr.bf16.mxu0 0
    %1688 = vmatpush2.bf16.msra.mxu0 0
    %1689 = vmatprep.mubr.bf16.mxu0 0
    %1690 = vmatmul.mubr.bf16.gmra.mxu0 %v1464
    %v1691 = vpop.f32.mrf.mxu0
    %v1692 = vadd.f32 0.0, %v1691
    %v1693 = vpop.f32.mrf.mxu0
    %v1694 = vadd.f32 0.0, %v1693
    %v1695 = vpop.f32.mrf.mxu0
    %v1696 = vpop.f32.mrf.mxu0
    %1697 = vdwg.mxu0
    %1698 = vmatprep.subr.bf16.mxu0 %v1624
    %1699 = vmatpush1.bf16.msra.mxu0 %v1623
    %1700 = vmatprep.subr.bf16.mxu0 %v1620
    %1701 = vmatpush1.bf16.msra.mxu0 %v1619
    %1702 = vmatprep.subr.bf16.mxu0 %v1616
    %1703 = vmatpush1.bf16.msra.mxu0 %v1615
    %1704 = vmatprep.subr.bf16.mxu0 %v1612
    %1705 = vmatpush1.bf16.msra.mxu0 %v1611
    %1706 = vmatprep.subr.bf16.mxu0 %v1608
    %1707 = vmatpush1.bf16.msra.mxu0 %v1607
    %1708 = vmatprep.subr.bf16.mxu0 %v1604
    %1709 = vmatpush1.bf16.msra.mxu0 %v1603
    %1710 = vmatprep.subr.bf16.mxu0 %v1600
    %1711 = vmatpush1.bf16.msra.mxu0 %v1599
    %1712 = vmatprep.subr.bf16.mxu0 %v1596
    %1713 = vmatpush1.bf16.msra.mxu0 %v1595
    %1714 = vmatprep.subr.bf16.mxu0 0
    %1715 = vmatpush2.bf16.msra.mxu0 0
    %1716 = vmatprep.subr.bf16.mxu0 0
    %1717 = vmatpush2.bf16.msra.mxu0 0
    %1718 = vmatprep.subr.bf16.mxu0 0
    %1719 = vmatpush2.bf16.msra.mxu0 0
    %1720 = vmatprep.subr.bf16.mxu0 0
    %1721 = vmatpush2.bf16.msra.mxu0 0
    %1722 = vmatprep.subr.bf16.mxu0 0
    %1723 = vmatpush2.bf16.msra.mxu0 0
    %1724 = vmatprep.subr.bf16.mxu0 0
    %1725 = vmatpush2.bf16.msra.mxu0 0
    %1726 = vmatprep.subr.bf16.mxu0 0
    %1727 = vmatpush2.bf16.msra.mxu0 0
    %1728 = vmatprep.subr.bf16.mxu0 0
    %1729 = vmatpush2.bf16.msra.mxu0 0
    %1730 = vmatprep.mubr.bf16.mxu0 0
    %1731 = vmatmul.mubr.bf16.gmra.mxu0 %v1464
    %v1732 = vpop.f32.mrf.mxu0
    %v1733 = vadd.f32 0.0, %v1732
    %v1734 = vpop.f32.mrf.mxu0
    %v1735 = vadd.f32 0.0, %v1734
    %v1736 = vpop.f32.mrf.mxu0
    %v1737 = vpop.f32.mrf.mxu0
    %1738 = vdwg.mxu0
    %v1739 = vadd.f32 %v1460, %v1692
    %v1740 = vadd.f32 %v1461, %v1694
    %v1741 = vadd.f32 %v1462, %v1733
    %v1742 = vadd.f32 %v1463, %v1735
    %v1743 = vxor.u32 %v1739, 2147483648
    %v1744 = vmul.f32 %v1743, 1.442695
    %v1745 = vpow.pop %v1744
    %v1746 = vadd.f32 %v1745, 1.0
    %v1747 = vrcp.pop %v1746
    %v1748 = vmul.f32 1.0, %v1747
    %v1749 = vxor.u32 %v1740, 2147483648
    %v1750 = vmul.f32 %v1749, 1.442695
    %v1751 = vpow.pop %v1750
    %v1752 = vadd.f32 %v1751, 1.0
    %v1753 = vrcp.pop %v1752
    %v1754 = vmul.f32 1.0, %v1753
    %v1755 = vtanh.pop %v1741
    %v1756 = vxor.u32 %v1742, 2147483648
    %v1757 = vmul.f32 %v1756, 1.442695
    %v1758 = vpow.pop %v1757
    %v1759 = vadd.f32 %v1758, 1.0
    %v1760 = vrcp.pop %v1759
    %v1761 = vmul.f32 1.0, %v1760
    %v1762 = vmul.f32 %v1754, %v1452
    %v1763 = vmul.f32 %v1748, %v1755
    %v1764 = vadd.f32 %v1762, %v1763
    %v1765 = vtanh.pop %v1764
    %v1766 = vmul.f32 %v1761, %v1765
    %s1767 = scalar_lea.vmem [#allocation3], 24
    %1768 = vst [vmem:[%s1767] sm:$0xff] %v1766
    %s1769 = smul.u32 4, 4
    %s1770 = smul.addr %s1769, 8
    %s1771 = scalar_lea.vmem [#allocation2], %s1770
    %v1772 = vld [vmem:[%s1771] sm:$0xff]
    %v1773 = vld [vmem:[%s1771 + $0x8] sm:$0xff]
    %v1774 = vld [vmem:[%s1771 + $0x10] sm:$0xff]
    %v1775 = vld [vmem:[%s1771 + $0x18] sm:$0xff]
    %v1776 = vpack.c.bf16 %v1766, %v1766
    %v1777 = vld [vmem:[#allocation9] sm:$0xff]
    %v1778 = vld [vmem:[#allocation9 + $0x8] sm:$0xff]
    %v1779 = vld [vmem:[#allocation9 + $0x10] sm:$0xff]
    %v1780 = vld [vmem:[#allocation9 + $0x18] sm:$0xff]
    %v1781 = vld [vmem:[#allocation9 + $0x20] sm:$0xff]
    %v1782 = vld [vmem:[#allocation9 + $0x28] sm:$0xff]
    %v1783 = vld [vmem:[#allocation9 + $0x30] sm:$0xff]
    %v1784 = vld [vmem:[#allocation9 + $0x38] sm:$0xff]
    %v1785 = vld [vmem:[#allocation9 + $0x40] sm:$0xff]
    %v1786 = vld [vmem:[#allocation9 + $0x48] sm:$0xff]
    %v1787 = vld [vmem:[#allocation9 + $0x50] sm:$0xff]
    %v1788 = vld [vmem:[#allocation9 + $0x58] sm:$0xff]
    %v1789 = vld [vmem:[#allocation9 + $0x60] sm:$0xff]
    %v1790 = vld [vmem:[#allocation9 + $0x68] sm:$0xff]
    %v1791 = vld [vmem:[#allocation9 + $0x70] sm:$0xff]
    %v1792 = vld [vmem:[#allocation9 + $0x78] sm:$0xff]
    %v1793 = vld [vmem:[#allocation9 + $0x80] sm:$0xff]
    %v1794 = vld [vmem:[#allocation9 + $0x88] sm:$0xff]
    %v1795 = vld [vmem:[#allocation9 + $0x90] sm:$0xff]
    %v1796 = vld [vmem:[#allocation9 + $0x98] sm:$0xff]
    %v1797 = vld [vmem:[#allocation9 + $0xa0] sm:$0xff]
    %v1798 = vld [vmem:[#allocation9 + $0xa8] sm:$0xff]
    %v1799 = vld [vmem:[#allocation9 + $0xb0] sm:$0xff]
    %v1800 = vld [vmem:[#allocation9 + $0xb8] sm:$0xff]
    %v1801 = vld [vmem:[#allocation9 + $0xc0] sm:$0xff]
    %v1802 = vld [vmem:[#allocation9 + $0xc8] sm:$0xff]
    %v1803 = vld [vmem:[#allocation9 + $0xd0] sm:$0xff]
    %v1804 = vld [vmem:[#allocation9 + $0xd8] sm:$0xff]
    %v1805 = vld [vmem:[#allocation9 + $0xe0] sm:$0xff]
    %v1806 = vld [vmem:[#allocation9 + $0xe8] sm:$0xff]
    %v1807 = vld [vmem:[#allocation9 + $0xf0] sm:$0xff]
    %v1808 = vld [vmem:[#allocation9 + $0xf8] sm:$0xff]
    %v1841 = vunpack.c.l.b16 %v1777
    %v1842 = vunpack.c.h.b16 %v1777
    %v1843 = vunpack.c.l.b16 %v1778
    %v1844 = vunpack.c.h.b16 %v1778
    %v1845 = vunpack.c.l.b16 %v1779
    %v1846 = vunpack.c.h.b16 %v1779
    %v1847 = vunpack.c.l.b16 %v1780
    %v1848 = vunpack.c.h.b16 %v1780
    %v1849 = vunpack.c.l.b16 %v1781
    %v1850 = vunpack.c.h.b16 %v1781
    %v1851 = vunpack.c.l.b16 %v1782
    %v1852 = vunpack.c.h.b16 %v1782
    %v1853 = vunpack.c.l.b16 %v1783
    %v1854 = vunpack.c.h.b16 %v1783
    %v1855 = vunpack.c.l.b16 %v1784
    %v1856 = vunpack.c.h.b16 %v1784
    %v1857 = vunpack.c.l.b16 %v1785
    %v1858 = vunpack.c.h.b16 %v1785
    %v1859 = vunpack.c.l.b16 %v1786
    %v1860 = vunpack.c.h.b16 %v1786
    %v1861 = vunpack.c.l.b16 %v1787
    %v1862 = vunpack.c.h.b16 %v1787
    %v1863 = vunpack.c.l.b16 %v1788
    %v1864 = vunpack.c.h.b16 %v1788
    %v1865 = vunpack.c.l.b16 %v1789
    %v1866 = vunpack.c.h.b16 %v1789
    %v1867 = vunpack.c.l.b16 %v1790
    %v1868 = vunpack.c.h.b16 %v1790
    %v1869 = vunpack.c.l.b16 %v1791
    %v1870 = vunpack.c.h.b16 %v1791
    %v1871 = vunpack.c.l.b16 %v1792
    %v1872 = vunpack.c.h.b16 %v1792
    %v1873 = vunpack.c.l.b16 %v1793
    %v1874 = vunpack.c.h.b16 %v1793
    %v1875 = vunpack.c.l.b16 %v1794
    %v1876 = vunpack.c.h.b16 %v1794
    %v1877 = vunpack.c.l.b16 %v1795
    %v1878 = vunpack.c.h.b16 %v1795
    %v1879 = vunpack.c.l.b16 %v1796
    %v1880 = vunpack.c.h.b16 %v1796
    %v1881 = vunpack.c.l.b16 %v1797
    %v1882 = vunpack.c.h.b16 %v1797
    %v1883 = vunpack.c.l.b16 %v1798
    %v1884 = vunpack.c.h.b16 %v1798
    %v1885 = vunpack.c.l.b16 %v1799
    %v1886 = vunpack.c.h.b16 %v1799
    %v1887 = vunpack.c.l.b16 %v1800
    %v1888 = vunpack.c.h.b16 %v1800
    %v1889 = vunpack.c.l.b16 %v1801
    %v1890 = vunpack.c.h.b16 %v1801
    %v1891 = vunpack.c.l.b16 %v1802
    %v1892 = vunpack.c.h.b16 %v1802
    %v1893 = vunpack.c.l.b16 %v1803
    %v1894 = vunpack.c.h.b16 %v1803
    %v1895 = vunpack.c.l.b16 %v1804
    %v1896 = vunpack.c.h.b16 %v1804
    %v1897 = vunpack.c.l.b16 %v1805
    %v1898 = vunpack.c.h.b16 %v1805
    %v1899 = vunpack.c.l.b16 %v1806
    %v1900 = vunpack.c.h.b16 %v1806
    %v1901 = vunpack.c.l.b16 %v1807
    %v1902 = vunpack.c.h.b16 %v1807
    %v1903 = vunpack.c.l.b16 %v1808
    %v1904 = vunpack.c.h.b16 %v1808
    %v1905 = vpack.c.b16 %v1845, %v1841
    %v1906 = vpack.c.b16 %v1846, %v1842
    %v1907 = vpack.c.b16 %v1847, %v1843
    %v1908 = vpack.c.b16 %v1848, %v1844
    %v1909 = vpack.c.b16 %v1853, %v1849
    %v1910 = vpack.c.b16 %v1854, %v1850
    %v1911 = vpack.c.b16 %v1855, %v1851
    %v1912 = vpack.c.b16 %v1856, %v1852
    %v1913 = vpack.c.b16 %v1861, %v1857
    %v1914 = vpack.c.b16 %v1862, %v1858
    %v1915 = vpack.c.b16 %v1863, %v1859
    %v1916 = vpack.c.b16 %v1864, %v1860
    %v1917 = vpack.c.b16 %v1869, %v1865
    %v1918 = vpack.c.b16 %v1870, %v1866
    %v1919 = vpack.c.b16 %v1871, %v1867
    %v1920 = vpack.c.b16 %v1872, %v1868
    %v1921 = vpack.c.b16 %v1877, %v1873
    %v1922 = vpack.c.b16 %v1878, %v1874
    %v1923 = vpack.c.b16 %v1879, %v1875
    %v1924 = vpack.c.b16 %v1880, %v1876
    %v1925 = vpack.c.b16 %v1885, %v1881
    %v1926 = vpack.c.b16 %v1886, %v1882
    %v1927 = vpack.c.b16 %v1887, %v1883
    %v1928 = vpack.c.b16 %v1888, %v1884
    %v1929 = vpack.c.b16 %v1893, %v1889
    %v1930 = vpack.c.b16 %v1894, %v1890
    %v1931 = vpack.c.b16 %v1895, %v1891
    %v1932 = vpack.c.b16 %v1896, %v1892
    %v1933 = vpack.c.b16 %v1901, %v1897
    %v1934 = vpack.c.b16 %v1902, %v1898
    %v1935 = vpack.c.b16 %v1903, %v1899
    %v1936 = vpack.c.b16 %v1904, %v1900
    %1969 = vmatprep.subr.bf16.mxu0 %v1934
    %1970 = vmatpush1.bf16.msra.mxu0 %v1933
    %1971 = vmatprep.subr.bf16.mxu0 %v1930
    %1972 = vmatpush1.bf16.msra.mxu0 %v1929
    %1973 = vmatprep.subr.bf16.mxu0 %v1926
    %1974 = vmatpush1.bf16.msra.mxu0 %v1925
    %1975 = vmatprep.subr.bf16.mxu0 %v1922
    %1976 = vmatpush1.bf16.msra.mxu0 %v1921
    %1977 = vmatprep.subr.bf16.mxu0 %v1918
    %1978 = vmatpush1.bf16.msra.mxu0 %v1917
    %1979 = vmatprep.subr.bf16.mxu0 %v1914
    %1980 = vmatpush1.bf16.msra.mxu0 %v1913
    %1981 = vmatprep.subr.bf16.mxu0 %v1910
    %1982 = vmatpush1.bf16.msra.mxu0 %v1909
    %1983 = vmatprep.subr.bf16.mxu0 %v1906
    %1984 = vmatpush1.bf16.msra.mxu0 %v1905
    %1985 = vmatprep.subr.bf16.mxu0 0
    %1986 = vmatpush2.bf16.msra.mxu0 0
    %1987 = vmatprep.subr.bf16.mxu0 0
    %1988 = vmatpush2.bf16.msra.mxu0 0
    %1989 = vmatprep.subr.bf16.mxu0 0
    %1990 = vmatpush2.bf16.msra.mxu0 0
    %1991 = vmatprep.subr.bf16.mxu0 0
    %1992 = vmatpush2.bf16.msra.mxu0 0
    %1993 = vmatprep.subr.bf16.mxu0 0
    %1994 = vmatpush2.bf16.msra.mxu0 0
    %1995 = vmatprep.subr.bf16.mxu0 0
    %1996 = vmatpush2.bf16.msra.mxu0 0
    %1997 = vmatprep.subr.bf16.mxu0 0
    %1998 = vmatpush2.bf16.msra.mxu0 0
    %1999 = vmatprep.subr.bf16.mxu0 0
    %2000 = vmatpush2.bf16.msra.mxu0 0
    %2001 = vmatprep.mubr.bf16.mxu0 0
    %2002 = vmatmul.mubr.bf16.gmra.mxu0 %v1776
    %v2003 = vpop.f32.mrf.mxu0
    %v2004 = vadd.f32 0.0, %v2003
    %v2005 = vpop.f32.mrf.mxu0
    %v2006 = vadd.f32 0.0, %v2005
    %v2007 = vpop.f32.mrf.mxu0
    %v2008 = vpop.f32.mrf.mxu0
    %2009 = vdwg.mxu0
    %2010 = vmatprep.subr.bf16.mxu0 %v1936
    %2011 = vmatpush1.bf16.msra.mxu0 %v1935
    %2012 = vmatprep.subr.bf16.mxu0 %v1932
    %2013 = vmatpush1.bf16.msra.mxu0 %v1931
    %2014 = vmatprep.subr.bf16.mxu0 %v1928
    %2015 = vmatpush1.bf16.msra.mxu0 %v1927
    %2016 = vmatprep.subr.bf16.mxu0 %v1924
    %2017 = vmatpush1.bf16.msra.mxu0 %v1923
    %2018 = vmatprep.subr.bf16.mxu0 %v1920
    %2019 = vmatpush1.bf16.msra.mxu0 %v1919
    %2020 = vmatprep.subr.bf16.mxu0 %v1916
    %2021 = vmatpush1.bf16.msra.mxu0 %v1915
    %2022 = vmatprep.subr.bf16.mxu0 %v1912
    %2023 = vmatpush1.bf16.msra.mxu0 %v1911
    %2024 = vmatprep.subr.bf16.mxu0 %v1908
    %2025 = vmatpush1.bf16.msra.mxu0 %v1907
    %2026 = vmatprep.subr.bf16.mxu0 0
    %2027 = vmatpush2.bf16.msra.mxu0 0
    %2028 = vmatprep.subr.bf16.mxu0 0
    %2029 = vmatpush2.bf16.msra.mxu0 0
    %2030 = vmatprep.subr.bf16.mxu0 0
    %2031 = vmatpush2.bf16.msra.mxu0 0
    %2032 = vmatprep.subr.bf16.mxu0 0
    %2033 = vmatpush2.bf16.msra.mxu0 0
    %2034 = vmatprep.subr.bf16.mxu0 0
    %2035 = vmatpush2.bf16.msra.mxu0 0
    %2036 = vmatprep.subr.bf16.mxu0 0
    %2037 = vmatpush2.bf16.msra.mxu0 0
    %2038 = vmatprep.subr.bf16.mxu0 0
    %2039 = vmatpush2.bf16.msra.mxu0 0
    %2040 = vmatprep.subr.bf16.mxu0 0
    %2041 = vmatpush2.bf16.msra.mxu0 0
    %2042 = vmatprep.mubr.bf16.mxu0 0
    %2043 = vmatmul.mubr.bf16.gmra.mxu0 %v1776
    %v2044 = vpop.f32.mrf.mxu0
    %v2045 = vadd.f32 0.0, %v2044
    %v2046 = vpop.f32.mrf.mxu0
    %v2047 = vadd.f32 0.0, %v2046
    %v2048 = vpop.f32.mrf.mxu0
    %v2049 = vpop.f32.mrf.mxu0
    %2050 = vdwg.mxu0
    %v2051 = vadd.f32 %v1772, %v2004
    %v2052 = vadd.f32 %v1773, %v2006
    %v2053 = vadd.f32 %v1774, %v2045
    %v2054 = vadd.f32 %v1775, %v2047
    %v2055 = vxor.u32 %v2051, 2147483648
    %v2056 = vmul.f32 %v2055, 1.442695
    %v2057 = vpow.pop %v2056
    %v2058 = vadd.f32 %v2057, 1.0
    %v2059 = vrcp.pop %v2058
    %v2060 = vmul.f32 1.0, %v2059
    %v2061 = vxor.u32 %v2052, 2147483648
    %v2062 = vmul.f32 %v2061, 1.442695
    %v2063 = vpow.pop %v2062
    %v2064 = vadd.f32 %v2063, 1.0
    %v2065 = vrcp.pop %v2064
    %v2066 = vmul.f32 1.0, %v2065
    %v2067 = vtanh.pop %v2053
    %v2068 = vxor.u32 %v2054, 2147483648
    %v2069 = vmul.f32 %v2068, 1.442695
    %v2070 = vpow.pop %v2069
    %v2071 = vadd.f32 %v2070, 1.0
    %v2072 = vrcp.pop %v2071
    %v2073 = vmul.f32 1.0, %v2072
    %v2074 = vmul.f32 %v2066, %v1764
    %v2075 = vmul.f32 %v2060, %v2067
    %v2076 = vadd.f32 %v2074, %v2075
    %v2077 = vtanh.pop %v2076
    %v2078 = vmul.f32 %v2073, %v2077
    %s2079 = scalar_lea.vmem [#allocation3], 32
    %2080 = vst [vmem:[%s2079] sm:$0xff] %v2078
    %s2081 = smul.u32 5, 4
    %s2082 = smul.addr %s2081, 8
    %s2083 = scalar_lea.vmem [#allocation2], %s2082
    %v2084 = vld [vmem:[%s2083] sm:$0xff]
    %v2085 = vld [vmem:[%s2083 + $0x8] sm:$0xff]
    %v2086 = vld [vmem:[%s2083 + $0x10] sm:$0xff]
    %v2087 = vld [vmem:[%s2083 + $0x18] sm:$0xff]
    %v2088 = vpack.c.bf16 %v2078, %v2078
    %v2089 = vld [vmem:[#allocation9] sm:$0xff]
    %v2090 = vld [vmem:[#allocation9 + $0x8] sm:$0xff]
    %v2091 = vld [vmem:[#allocation9 + $0x10] sm:$0xff]
    %v2092 = vld [vmem:[#allocation9 + $0x18] sm:$0xff]
    %v2093 = vld [vmem:[#allocation9 + $0x20] sm:$0xff]
    %v2094 = vld [vmem:[#allocation9 + $0x28] sm:$0xff]
    %v2095 = vld [vmem:[#allocation9 + $0x30] sm:$0xff]
    %v2096 = vld [vmem:[#allocation9 + $0x38] sm:$0xff]
    %v2097 = vld [vmem:[#allocation9 + $0x40] sm:$0xff]
    %v2098 = vld [vmem:[#allocation9 + $0x48] sm:$0xff]
    %v2099 = vld [vmem:[#allocation9 + $0x50] sm:$0xff]
    %v2100 = vld [vmem:[#allocation9 + $0x58] sm:$0xff]
    %v2101 = vld [vmem:[#allocation9 + $0x60] sm:$0xff]
    %v2102 = vld [vmem:[#allocation9 + $0x68] sm:$0xff]
    %v2103 = vld [vmem:[#allocation9 + $0x70] sm:$0xff]
    %v2104 = vld [vmem:[#allocation9 + $0x78] sm:$0xff]
    %v2105 = vld [vmem:[#allocation9 + $0x80] sm:$0xff]
    %v2106 = vld [vmem:[#allocation9 + $0x88] sm:$0xff]
    %v2107 = vld [vmem:[#allocation9 + $0x90] sm:$0xff]
    %v2108 = vld [vmem:[#allocation9 + $0x98] sm:$0xff]
    %v2109 = vld [vmem:[#allocation9 + $0xa0] sm:$0xff]
    %v2110 = vld [vmem:[#allocation9 + $0xa8] sm:$0xff]
    %v2111 = vld [vmem:[#allocation9 + $0xb0] sm:$0xff]
    %v2112 = vld [vmem:[#allocation9 + $0xb8] sm:$0xff]
    %v2113 = vld [vmem:[#allocation9 + $0xc0] sm:$0xff]
    %v2114 = vld [vmem:[#allocation9 + $0xc8] sm:$0xff]
    %v2115 = vld [vmem:[#allocation9 + $0xd0] sm:$0xff]
    %v2116 = vld [vmem:[#allocation9 + $0xd8] sm:$0xff]
    %v2117 = vld [vmem:[#allocation9 + $0xe0] sm:$0xff]
    %v2118 = vld [vmem:[#allocation9 + $0xe8] sm:$0xff]
    %v2119 = vld [vmem:[#allocation9 + $0xf0] sm:$0xff]
    %v2120 = vld [vmem:[#allocation9 + $0xf8] sm:$0xff]
    %v2153 = vunpack.c.l.b16 %v2089
    %v2154 = vunpack.c.h.b16 %v2089
    %v2155 = vunpack.c.l.b16 %v2090
    %v2156 = vunpack.c.h.b16 %v2090
    %v2157 = vunpack.c.l.b16 %v2091
    %v2158 = vunpack.c.h.b16 %v2091
    %v2159 = vunpack.c.l.b16 %v2092
    %v2160 = vunpack.c.h.b16 %v2092
    %v2161 = vunpack.c.l.b16 %v2093
    %v2162 = vunpack.c.h.b16 %v2093
    %v2163 = vunpack.c.l.b16 %v2094
    %v2164 = vunpack.c.h.b16 %v2094
    %v2165 = vunpack.c.l.b16 %v2095
    %v2166 = vunpack.c.h.b16 %v2095
    %v2167 = vunpack.c.l.b16 %v2096
    %v2168 = vunpack.c.h.b16 %v2096
    %v2169 = vunpack.c.l.b16 %v2097
    %v2170 = vunpack.c.h.b16 %v2097
    %v2171 = vunpack.c.l.b16 %v2098
    %v2172 = vunpack.c.h.b16 %v2098
    %v2173 = vunpack.c.l.b16 %v2099
    %v2174 = vunpack.c.h.b16 %v2099
    %v2175 = vunpack.c.l.b16 %v2100
    %v2176 = vunpack.c.h.b16 %v2100
    %v2177 = vunpack.c.l.b16 %v2101
    %v2178 = vunpack.c.h.b16 %v2101
    %v2179 = vunpack.c.l.b16 %v2102
    %v2180 = vunpack.c.h.b16 %v2102
    %v2181 = vunpack.c.l.b16 %v2103
    %v2182 = vunpack.c.h.b16 %v2103
    %v2183 = vunpack.c.l.b16 %v2104
    %v2184 = vunpack.c.h.b16 %v2104
    %v2185 = vunpack.c.l.b16 %v2105
    %v2186 = vunpack.c.h.b16 %v2105
    %v2187 = vunpack.c.l.b16 %v2106
    %v2188 = vunpack.c.h.b16 %v2106
    %v2189 = vunpack.c.l.b16 %v2107
    %v2190 = vunpack.c.h.b16 %v2107
    %v2191 = vunpack.c.l.b16 %v2108
    %v2192 = vunpack.c.h.b16 %v2108
    %v2193 = vunpack.c.l.b16 %v2109
    %v2194 = vunpack.c.h.b16 %v2109
    %v2195 = vunpack.c.l.b16 %v2110
    %v2196 = vunpack.c.h.b16 %v2110
    %v2197 = vunpack.c.l.b16 %v2111
    %v2198 = vunpack.c.h.b16 %v2111
    %v2199 = vunpack.c.l.b16 %v2112
    %v2200 = vunpack.c.h.b16 %v2112
    %v2201 = vunpack.c.l.b16 %v2113
    %v2202 = vunpack.c.h.b16 %v2113
    %v2203 = vunpack.c.l.b16 %v2114
    %v2204 = vunpack.c.h.b16 %v2114
    %v2205 = vunpack.c.l.b16 %v2115
    %v2206 = vunpack.c.h.b16 %v2115
    %v2207 = vunpack.c.l.b16 %v2116
    %v2208 = vunpack.c.h.b16 %v2116
    %v2209 = vunpack.c.l.b16 %v2117
    %v2210 = vunpack.c.h.b16 %v2117
    %v2211 = vunpack.c.l.b16 %v2118
    %v2212 = vunpack.c.h.b16 %v2118
    %v2213 = vunpack.c.l.b16 %v2119
    %v2214 = vunpack.c.h.b16 %v2119
    %v2215 = vunpack.c.l.b16 %v2120
    %v2216 = vunpack.c.h.b16 %v2120
    %v2217 = vpack.c.b16 %v2157, %v2153
    %v2218 = vpack.c.b16 %v2158, %v2154
    %v2219 = vpack.c.b16 %v2159, %v2155
    %v2220 = vpack.c.b16 %v2160, %v2156
    %v2221 = vpack.c.b16 %v2165, %v2161
    %v2222 = vpack.c.b16 %v2166, %v2162
    %v2223 = vpack.c.b16 %v2167, %v2163
    %v2224 = vpack.c.b16 %v2168, %v2164
    %v2225 = vpack.c.b16 %v2173, %v2169
    %v2226 = vpack.c.b16 %v2174, %v2170
    %v2227 = vpack.c.b16 %v2175, %v2171
    %v2228 = vpack.c.b16 %v2176, %v2172
    %v2229 = vpack.c.b16 %v2181, %v2177
    %v2230 = vpack.c.b16 %v2182, %v2178
    %v2231 = vpack.c.b16 %v2183, %v2179
    %v2232 = vpack.c.b16 %v2184, %v2180
    %v2233 = vpack.c.b16 %v2189, %v2185
    %v2234 = vpack.c.b16 %v2190, %v2186
    %v2235 = vpack.c.b16 %v2191, %v2187
    %v2236 = vpack.c.b16 %v2192, %v2188
    %v2237 = vpack.c.b16 %v2197, %v2193
    %v2238 = vpack.c.b16 %v2198, %v2194
    %v2239 = vpack.c.b16 %v2199, %v2195
    %v2240 = vpack.c.b16 %v2200, %v2196
    %v2241 = vpack.c.b16 %v2205, %v2201
    %v2242 = vpack.c.b16 %v2206, %v2202
    %v2243 = vpack.c.b16 %v2207, %v2203
    %v2244 = vpack.c.b16 %v2208, %v2204
    %v2245 = vpack.c.b16 %v2213, %v2209
    %v2246 = vpack.c.b16 %v2214, %v2210
    %v2247 = vpack.c.b16 %v2215, %v2211
    %v2248 = vpack.c.b16 %v2216, %v2212
    %2281 = vmatprep.subr.bf16.mxu0 %v2246
    %2282 = vmatpush1.bf16.msra.mxu0 %v2245
    %2283 = vmatprep.subr.bf16.mxu0 %v2242
    %2284 = vmatpush1.bf16.msra.mxu0 %v2241
    %2285 = vmatprep.subr.bf16.mxu0 %v2238
    %2286 = vmatpush1.bf16.msra.mxu0 %v2237
    %2287 = vmatprep.subr.bf16.mxu0 %v2234
    %2288 = vmatpush1.bf16.msra.mxu0 %v2233
    %2289 = vmatprep.subr.bf16.mxu0 %v2230
    %2290 = vmatpush1.bf16.msra.mxu0 %v2229
    %2291 = vmatprep.subr.bf16.mxu0 %v2226
    %2292 = vmatpush1.bf16.msra.mxu0 %v2225
    %2293 = vmatprep.subr.bf16.mxu0 %v2222
    %2294 = vmatpush1.bf16.msra.mxu0 %v2221
    %2295 = vmatprep.subr.bf16.mxu0 %v2218
    %2296 = vmatpush1.bf16.msra.mxu0 %v2217
    %2297 = vmatprep.subr.bf16.mxu0 0
    %2298 = vmatpush2.bf16.msra.mxu0 0
    %2299 = vmatprep.subr.bf16.mxu0 0
    %2300 = vmatpush2.bf16.msra.mxu0 0
    %2301 = vmatprep.subr.bf16.mxu0 0
    %2302 = vmatpush2.bf16.msra.mxu0 0
    %2303 = vmatprep.subr.bf16.mxu0 0
    %2304 = vmatpush2.bf16.msra.mxu0 0
    %2305 = vmatprep.subr.bf16.mxu0 0
    %2306 = vmatpush2.bf16.msra.mxu0 0
    %2307 = vmatprep.subr.bf16.mxu0 0
    %2308 = vmatpush2.bf16.msra.mxu0 0
    %2309 = vmatprep.subr.bf16.mxu0 0
    %2310 = vmatpush2.bf16.msra.mxu0 0
    %2311 = vmatprep.subr.bf16.mxu0 0
    %2312 = vmatpush2.bf16.msra.mxu0 0
    %2313 = vmatprep.mubr.bf16.mxu0 0
    %2314 = vmatmul.mubr.bf16.gmra.mxu0 %v2088
    %v2315 = vpop.f32.mrf.mxu0
    %v2316 = vadd.f32 0.0, %v2315
    %v2317 = vpop.f32.mrf.mxu0
    %v2318 = vadd.f32 0.0, %v2317
    %v2319 = vpop.f32.mrf.mxu0
    %v2320 = vpop.f32.mrf.mxu0
    %2321 = vdwg.mxu0
    %2322 = vmatprep.subr.bf16.mxu0 %v2248
    %2323 = vmatpush1.bf16.msra.mxu0 %v2247
    %2324 = vmatprep.subr.bf16.mxu0 %v2244
    %2325 = vmatpush1.bf16.msra.mxu0 %v2243
    %2326 = vmatprep.subr.bf16.mxu0 %v2240
    %2327 = vmatpush1.bf16.msra.mxu0 %v2239
    %2328 = vmatprep.subr.bf16.mxu0 %v2236
    %2329 = vmatpush1.bf16.msra.mxu0 %v2235
    %2330 = vmatprep.subr.bf16.mxu0 %v2232
    %2331 = vmatpush1.bf16.msra.mxu0 %v2231
    %2332 = vmatprep.subr.bf16.mxu0 %v2228
    %2333 = vmatpush1.bf16.msra.mxu0 %v2227
    %2334 = vmatprep.subr.bf16.mxu0 %v2224
    %2335 = vmatpush1.bf16.msra.mxu0 %v2223
    %2336 = vmatprep.subr.bf16.mxu0 %v2220
    %2337 = vmatpush1.bf16.msra.mxu0 %v2219
    %2338 = vmatprep.subr.bf16.mxu0 0
    %2339 = vmatpush2.bf16.msra.mxu0 0
    %2340 = vmatprep.subr.bf16.mxu0 0
    %2341 = vmatpush2.bf16.msra.mxu0 0
    %2342 = vmatprep.subr.bf16.mxu0 0
    %2343 = vmatpush2.bf16.msra.mxu0 0
    %2344 = vmatprep.subr.bf16.mxu0 0
    %2345 = vmatpush2.bf16.msra.mxu0 0
    %2346 = vmatprep.subr.bf16.mxu0 0
    %2347 = vmatpush2.bf16.msra.mxu0 0
    %2348 = vmatprep.subr.bf16.mxu0 0
    %2349 = vmatpush2.bf16.msra.mxu0 0
    %2350 = vmatprep.subr.bf16.mxu0 0
    %2351 = vmatpush2.bf16.msra.mxu0 0
    %2352 = vmatprep.subr.bf16.mxu0 0
    %2353 = vmatpush2.bf16.msra.mxu0 0
    %2354 = vmatprep.mubr.bf16.mxu0 0
    %2355 = vmatmul.mubr.bf16.gmra.mxu0 %v2088
    %v2356 = vpop.f32.mrf.mxu0
    %v2357 = vadd.f32 0.0, %v2356
    %v2358 = vpop.f32.mrf.mxu0
    %v2359 = vadd.f32 0.0, %v2358
    %v2360 = vpop.f32.mrf.mxu0
    %v2361 = vpop.f32.mrf.mxu0
    %2362 = vdwg.mxu0
    %v2363 = vadd.f32 %v2084, %v2316
    %v2364 = vadd.f32 %v2085, %v2318
    %v2365 = vadd.f32 %v2086, %v2357
    %v2366 = vadd.f32 %v2087, %v2359
    %v2367 = vxor.u32 %v2363, 2147483648
    %v2368 = vmul.f32 %v2367, 1.442695
    %v2369 = vpow.pop %v2368
    %v2370 = vadd.f32 %v2369, 1.0
    %v2371 = vrcp.pop %v2370
    %v2372 = vmul.f32 1.0, %v2371
    %v2373 = vxor.u32 %v2364, 2147483648
    %v2374 = vmul.f32 %v2373, 1.442695
    %v2375 = vpow.pop %v2374
    %v2376 = vadd.f32 %v2375, 1.0
    %v2377 = vrcp.pop %v2376
    %v2378 = vmul.f32 1.0, %v2377
    %v2379 = vtanh.pop %v2365
    %v2380 = vxor.u32 %v2366, 2147483648
    %v2381 = vmul.f32 %v2380, 1.442695
    %v2382 = vpow.pop %v2381
    %v2383 = vadd.f32 %v2382, 1.0
    %v2384 = vrcp.pop %v2383
    %v2385 = vmul.f32 1.0, %v2384
    %v2386 = vmul.f32 %v2378, %v2076
    %v2387 = vmul.f32 %v2372, %v2379
    %v2388 = vadd.f32 %v2386, %v2387
    %v2389 = vtanh.pop %v2388
    %v2390 = vmul.f32 %v2385, %v2389
    %s2391 = scalar_lea.vmem [#allocation3], 40
    %2392 = vst [vmem:[%s2391] sm:$0xff] %v2390
    %s2393 = smul.u32 6, 4
    %s2394 = smul.addr %s2393, 8
    %s2395 = scalar_lea.vmem [#allocation2], %s2394
    %v2396 = vld [vmem:[%s2395] sm:$0xff]
    %v2397 = vld [vmem:[%s2395 + $0x8] sm:$0xff]
    %v2398 = vld [vmem:[%s2395 + $0x10] sm:$0xff]
    %v2399 = vld [vmem:[%s2395 + $0x18] sm:$0xff]
    %v2400 = vpack.c.bf16 %v2390, %v2390
    %v2401 = vld [vmem:[#allocation9] sm:$0xff]
    %v2402 = vld [vmem:[#allocation9 + $0x8] sm:$0xff]
    %v2403 = vld [vmem:[#allocation9 + $0x10] sm:$0xff]
    %v2404 = vld [vmem:[#allocation9 + $0x18] sm:$0xff]
    %v2405 = vld [vmem:[#allocation9 + $0x20] sm:$0xff]
    %v2406 = vld [vmem:[#allocation9 + $0x28] sm:$0xff]
    %v2407 = vld [vmem:[#allocation9 + $0x30] sm:$0xff]
    %v2408 = vld [vmem:[#allocation9 + $0x38] sm:$0xff]
    %v2409 = vld [vmem:[#allocation9 + $0x40] sm:$0xff]
    %v2410 = vld [vmem:[#allocation9 + $0x48] sm:$0xff]
    %v2411 = vld [vmem:[#allocation9 + $0x50] sm:$0xff]
    %v2412 = vld [vmem:[#allocation9 + $0x58] sm:$0xff]
    %v2413 = vld [vmem:[#allocation9 + $0x60] sm:$0xff]
    %v2414 = vld [vmem:[#allocation9 + $0x68] sm:$0xff]
    %v2415 = vld [vmem:[#allocation9 + $0x70] sm:$0xff]
    %v2416 = vld [vmem:[#allocation9 + $0x78] sm:$0xff]
    %v2417 = vld [vmem:[#allocation9 + $0x80] sm:$0xff]
    %v2418 = vld [vmem:[#allocation9 + $0x88] sm:$0xff]
    %v2419 = vld [vmem:[#allocation9 + $0x90] sm:$0xff]
    %v2420 = vld [vmem:[#allocation9 + $0x98] sm:$0xff]
    %v2421 = vld [vmem:[#allocation9 + $0xa0] sm:$0xff]
    %v2422 = vld [vmem:[#allocation9 + $0xa8] sm:$0xff]
    %v2423 = vld [vmem:[#allocation9 + $0xb0] sm:$0xff]
    %v2424 = vld [vmem:[#allocation9 + $0xb8] sm:$0xff]
    %v2425 = vld [vmem:[#allocation9 + $0xc0] sm:$0xff]
    %v2426 = vld [vmem:[#allocation9 + $0xc8] sm:$0xff]
    %v2427 = vld [vmem:[#allocation9 + $0xd0] sm:$0xff]
    %v2428 = vld [vmem:[#allocation9 + $0xd8] sm:$0xff]
    %v2429 = vld [vmem:[#allocation9 + $0xe0] sm:$0xff]
    %v2430 = vld [vmem:[#allocation9 + $0xe8] sm:$0xff]
    %v2431 = vld [vmem:[#allocation9 + $0xf0] sm:$0xff]
    %v2432 = vld [vmem:[#allocation9 + $0xf8] sm:$0xff]
    %v2465 = vunpack.c.l.b16 %v2401
    %v2466 = vunpack.c.h.b16 %v2401
    %v2467 = vunpack.c.l.b16 %v2402
    %v2468 = vunpack.c.h.b16 %v2402
    %v2469 = vunpack.c.l.b16 %v2403
    %v2470 = vunpack.c.h.b16 %v2403
    %v2471 = vunpack.c.l.b16 %v2404
    %v2472 = vunpack.c.h.b16 %v2404
    %v2473 = vunpack.c.l.b16 %v2405
    %v2474 = vunpack.c.h.b16 %v2405
    %v2475 = vunpack.c.l.b16 %v2406
    %v2476 = vunpack.c.h.b16 %v2406
    %v2477 = vunpack.c.l.b16 %v2407
    %v2478 = vunpack.c.h.b16 %v2407
    %v2479 = vunpack.c.l.b16 %v2408
    %v2480 = vunpack.c.h.b16 %v2408
    %v2481 = vunpack.c.l.b16 %v2409
    %v2482 = vunpack.c.h.b16 %v2409
    %v2483 = vunpack.c.l.b16 %v2410
    %v2484 = vunpack.c.h.b16 %v2410
    %v2485 = vunpack.c.l.b16 %v2411
    %v2486 = vunpack.c.h.b16 %v2411
    %v2487 = vunpack.c.l.b16 %v2412
    %v2488 = vunpack.c.h.b16 %v2412
    %v2489 = vunpack.c.l.b16 %v2413
    %v2490 = vunpack.c.h.b16 %v2413
    %v2491 = vunpack.c.l.b16 %v2414
    %v2492 = vunpack.c.h.b16 %v2414
    %v2493 = vunpack.c.l.b16 %v2415
    %v2494 = vunpack.c.h.b16 %v2415
    %v2495 = vunpack.c.l.b16 %v2416
    %v2496 = vunpack.c.h.b16 %v2416
    %v2497 = vunpack.c.l.b16 %v2417
    %v2498 = vunpack.c.h.b16 %v2417
    %v2499 = vunpack.c.l.b16 %v2418
    %v2500 = vunpack.c.h.b16 %v2418
    %v2501 = vunpack.c.l.b16 %v2419
    %v2502 = vunpack.c.h.b16 %v2419
    %v2503 = vunpack.c.l.b16 %v2420
    %v2504 = vunpack.c.h.b16 %v2420
    %v2505 = vunpack.c.l.b16 %v2421
    %v2506 = vunpack.c.h.b16 %v2421
    %v2507 = vunpack.c.l.b16 %v2422
    %v2508 = vunpack.c.h.b16 %v2422
    %v2509 = vunpack.c.l.b16 %v2423
    %v2510 = vunpack.c.h.b16 %v2423
    %v2511 = vunpack.c.l.b16 %v2424
    %v2512 = vunpack.c.h.b16 %v2424
    %v2513 = vunpack.c.l.b16 %v2425
    %v2514 = vunpack.c.h.b16 %v2425
    %v2515 = vunpack.c.l.b16 %v2426
    %v2516 = vunpack.c.h.b16 %v2426
    %v2517 = vunpack.c.l.b16 %v2427
    %v2518 = vunpack.c.h.b16 %v2427
    %v2519 = vunpack.c.l.b16 %v2428
    %v2520 = vunpack.c.h.b16 %v2428
    %v2521 = vunpack.c.l.b16 %v2429
    %v2522 = vunpack.c.h.b16 %v2429
    %v2523 = vunpack.c.l.b16 %v2430
    %v2524 = vunpack.c.h.b16 %v2430
    %v2525 = vunpack.c.l.b16 %v2431
    %v2526 = vunpack.c.h.b16 %v2431
    %v2527 = vunpack.c.l.b16 %v2432
    %v2528 = vunpack.c.h.b16 %v2432
    %v2529 = vpack.c.b16 %v2469, %v2465
    %v2530 = vpack.c.b16 %v2470, %v2466
    %v2531 = vpack.c.b16 %v2471, %v2467
    %v2532 = vpack.c.b16 %v2472, %v2468
    %v2533 = vpack.c.b16 %v2477, %v2473
    %v2534 = vpack.c.b16 %v2478, %v2474
    %v2535 = vpack.c.b16 %v2479, %v2475
    %v2536 = vpack.c.b16 %v2480, %v2476
    %v2537 = vpack.c.b16 %v2485, %v2481
    %v2538 = vpack.c.b16 %v2486, %v2482
    %v2539 = vpack.c.b16 %v2487, %v2483
    %v2540 = vpack.c.b16 %v2488, %v2484
    %v2541 = vpack.c.b16 %v2493, %v2489
    %v2542 = vpack.c.b16 %v2494, %v2490
    %v2543 = vpack.c.b16 %v2495, %v2491
    %v2544 = vpack.c.b16 %v2496, %v2492
    %v2545 = vpack.c.b16 %v2501, %v2497
    %v2546 = vpack.c.b16 %v2502, %v2498
    %v2547 = vpack.c.b16 %v2503, %v2499
    %v2548 = vpack.c.b16 %v2504, %v2500
    %v2549 = vpack.c.b16 %v2509, %v2505
    %v2550 = vpack.c.b16 %v2510, %v2506
    %v2551 = vpack.c.b16 %v2511, %v2507
    %v2552 = vpack.c.b16 %v2512, %v2508
    %v2553 = vpack.c.b16 %v2517, %v2513
    %v2554 = vpack.c.b16 %v2518, %v2514
    %v2555 = vpack.c.b16 %v2519, %v2515
    %v2556 = vpack.c.b16 %v2520, %v2516
    %v2557 = vpack.c.b16 %v2525, %v2521
    %v2558 = vpack.c.b16 %v2526, %v2522
    %v2559 = vpack.c.b16 %v2527, %v2523
    %v2560 = vpack.c.b16 %v2528, %v2524
    %2593 = vmatprep.subr.bf16.mxu0 %v2558
    %2594 = vmatpush1.bf16.msra.mxu0 %v2557
    %2595 = vmatprep.subr.bf16.mxu0 %v2554
    %2596 = vmatpush1.bf16.msra.mxu0 %v2553
    %2597 = vmatprep.subr.bf16.mxu0 %v2550
    %2598 = vmatpush1.bf16.msra.mxu0 %v2549
    %2599 = vmatprep.subr.bf16.mxu0 %v2546
    %2600 = vmatpush1.bf16.msra.mxu0 %v2545
    %2601 = vmatprep.subr.bf16.mxu0 %v2542
    %2602 = vmatpush1.bf16.msra.mxu0 %v2541
    %2603 = vmatprep.subr.bf16.mxu0 %v2538
    %2604 = vmatpush1.bf16.msra.mxu0 %v2537
    %2605 = vmatprep.subr.bf16.mxu0 %v2534
    %2606 = vmatpush1.bf16.msra.mxu0 %v2533
    %2607 = vmatprep.subr.bf16.mxu0 %v2530
    %2608 = vmatpush1.bf16.msra.mxu0 %v2529
    %2609 = vmatprep.subr.bf16.mxu0 0
    %2610 = vmatpush2.bf16.msra.mxu0 0
    %2611 = vmatprep.subr.bf16.mxu0 0
    %2612 = vmatpush2.bf16.msra.mxu0 0
    %2613 = vmatprep.subr.bf16.mxu0 0
    %2614 = vmatpush2.bf16.msra.mxu0 0
    %2615 = vmatprep.subr.bf16.mxu0 0
    %2616 = vmatpush2.bf16.msra.mxu0 0
    %2617 = vmatprep.subr.bf16.mxu0 0
    %2618 = vmatpush2.bf16.msra.mxu0 0
    %2619 = vmatprep.subr.bf16.mxu0 0
    %2620 = vmatpush2.bf16.msra.mxu0 0
    %2621 = vmatprep.subr.bf16.mxu0 0
    %2622 = vmatpush2.bf16.msra.mxu0 0
    %2623 = vmatprep.subr.bf16.mxu0 0
    %2624 = vmatpush2.bf16.msra.mxu0 0
    %2625 = vmatprep.mubr.bf16.mxu0 0
    %2626 = vmatmul.mubr.bf16.gmra.mxu0 %v2400
    %v2627 = vpop.f32.mrf.mxu0
    %v2628 = vadd.f32 0.0, %v2627
    %v2629 = vpop.f32.mrf.mxu0
    %v2630 = vadd.f32 0.0, %v2629
    %v2631 = vpop.f32.mrf.mxu0
    %v2632 = vpop.f32.mrf.mxu0
    %2633 = vdwg.mxu0
    %2634 = vmatprep.subr.bf16.mxu0 %v2560
    %2635 = vmatpush1.bf16.msra.mxu0 %v2559
    %2636 = vmatprep.subr.bf16.mxu0 %v2556
    %2637 = vmatpush1.bf16.msra.mxu0 %v2555
    %2638 = vmatprep.subr.bf16.mxu0 %v2552
    %2639 = vmatpush1.bf16.msra.mxu0 %v2551
    %2640 = vmatprep.subr.bf16.mxu0 %v2548
    %2641 = vmatpush1.bf16.msra.mxu0 %v2547
    %2642 = vmatprep.subr.bf16.mxu0 %v2544
    %2643 = vmatpush1.bf16.msra.mxu0 %v2543
    %2644 = vmatprep.subr.bf16.mxu0 %v2540
    %2645 = vmatpush1.bf16.msra.mxu0 %v2539
    %2646 = vmatprep.subr.bf16.mxu0 %v2536
    %2647 = vmatpush1.bf16.msra.mxu0 %v2535
    %2648 = vmatprep.subr.bf16.mxu0 %v2532
    %2649 = vmatpush1.bf16.msra.mxu0 %v2531
    %2650 = vmatprep.subr.bf16.mxu0 0
    %2651 = vmatpush2.bf16.msra.mxu0 0
    %2652 = vmatprep.subr.bf16.mxu0 0
    %2653 = vmatpush2.bf16.msra.mxu0 0
    %2654 = vmatprep.subr.bf16.mxu0 0
    %2655 = vmatpush2.bf16.msra.mxu0 0
    %2656 = vmatprep.subr.bf16.mxu0 0
    %2657 = vmatpush2.bf16.msra.mxu0 0
    %2658 = vmatprep.subr.bf16.mxu0 0
    %2659 = vmatpush2.bf16.msra.mxu0 0
    %2660 = vmatprep.subr.bf16.mxu0 0
    %2661 = vmatpush2.bf16.msra.mxu0 0
    %2662 = vmatprep.subr.bf16.mxu0 0
    %2663 = vmatpush2.bf16.msra.mxu0 0
    %2664 = vmatprep.subr.bf16.mxu0 0
    %2665 = vmatpush2.bf16.msra.mxu0 0
    %2666 = vmatprep.mubr.bf16.mxu0 0
    %2667 = vmatmul.mubr.bf16.gmra.mxu0 %v2400
    %v2668 = vpop.f32.mrf.mxu0
    %v2669 = vadd.f32 0.0, %v2668
    %v2670 = vpop.f32.mrf.mxu0
    %v2671 = vadd.f32 0.0, %v2670
    %v2672 = vpop.f32.mrf.mxu0
    %v2673 = vpop.f32.mrf.mxu0
    %2674 = vdwg.mxu0
    %v2675 = vadd.f32 %v2396, %v2628
    %v2676 = vadd.f32 %v2397, %v2630
    %v2677 = vadd.f32 %v2398, %v2669
    %v2678 = vadd.f32 %v2399, %v2671
    %v2679 = vxor.u32 %v2675, 2147483648
    %v2680 = vmul.f32 %v2679, 1.442695
    %v2681 = vpow.pop %v2680
    %v2682 = vadd.f32 %v2681, 1.0
    %v2683 = vrcp.pop %v2682
    %v2684 = vmul.f32 1.0, %v2683
    %v2685 = vxor.u32 %v2676, 2147483648
    %v2686 = vmul.f32 %v2685, 1.442695
    %v2687 = vpow.pop %v2686
    %v2688 = vadd.f32 %v2687, 1.0
    %v2689 = vrcp.pop %v2688
    %v2690 = vmul.f32 1.0, %v2689
    %v2691 = vtanh.pop %v2677
    %v2692 = vxor.u32 %v2678, 2147483648
    %v2693 = vmul.f32 %v2692, 1.442695
    %v2694 = vpow.pop %v2693
    %v2695 = vadd.f32 %v2694, 1.0
    %v2696 = vrcp.pop %v2695
    %v2697 = vmul.f32 1.0, %v2696
    %v2698 = vmul.f32 %v2690, %v2388
    %v2699 = vmul.f32 %v2684, %v2691
    %v2700 = vadd.f32 %v2698, %v2699
    %v2701 = vtanh.pop %v2700
    %v2702 = vmul.f32 %v2697, %v2701
    %s2703 = scalar_lea.vmem [#allocation3], 48
    %2704 = vst [vmem:[%s2703] sm:$0xff] %v2702
    %s2705 = smul.u32 7, 4
    %s2706 = smul.addr %s2705, 8
    %s2707 = scalar_lea.vmem [#allocation2], %s2706
    %v2708 = vld [vmem:[%s2707] sm:$0xff]
    %v2709 = vld [vmem:[%s2707 + $0x8] sm:$0xff]
    %v2710 = vld [vmem:[%s2707 + $0x10] sm:$0xff]
    %v2711 = vld [vmem:[%s2707 + $0x18] sm:$0xff]
    %v2712 = vpack.c.bf16 %v2702, %v2702
    %v2713 = vld [vmem:[#allocation9] sm:$0xff]
    %v2714 = vld [vmem:[#allocation9 + $0x8] sm:$0xff]
    %v2715 = vld [vmem:[#allocation9 + $0x10] sm:$0xff]
    %v2716 = vld [vmem:[#allocation9 + $0x18] sm:$0xff]
    %v2717 = vld [vmem:[#allocation9 + $0x20] sm:$0xff]
    %v2718 = vld [vmem:[#allocation9 + $0x28] sm:$0xff]
    %v2719 = vld [vmem:[#allocation9 + $0x30] sm:$0xff]
    %v2720 = vld [vmem:[#allocation9 + $0x38] sm:$0xff]
    %v2721 = vld [vmem:[#allocation9 + $0x40] sm:$0xff]
    %v2722 = vld [vmem:[#allocation9 + $0x48] sm:$0xff]
    %v2723 = vld [vmem:[#allocation9 + $0x50] sm:$0xff]
    %v2724 = vld [vmem:[#allocation9 + $0x58] sm:$0xff]
    %v2725 = vld [vmem:[#allocation9 + $0x60] sm:$0xff]
    %v2726 = vld [vmem:[#allocation9 + $0x68] sm:$0xff]
    %v2727 = vld [vmem:[#allocation9 + $0x70] sm:$0xff]
    %v2728 = vld [vmem:[#allocation9 + $0x78] sm:$0xff]
    %v2729 = vld [vmem:[#allocation9 + $0x80] sm:$0xff]
    %v2730 = vld [vmem:[#allocation9 + $0x88] sm:$0xff]
    %v2731 = vld [vmem:[#allocation9 + $0x90] sm:$0xff]
    %v2732 = vld [vmem:[#allocation9 + $0x98] sm:$0xff]
    %v2733 = vld [vmem:[#allocation9 + $0xa0] sm:$0xff]
    %v2734 = vld [vmem:[#allocation9 + $0xa8] sm:$0xff]
    %v2735 = vld [vmem:[#allocation9 + $0xb0] sm:$0xff]
    %v2736 = vld [vmem:[#allocation9 + $0xb8] sm:$0xff]
    %v2737 = vld [vmem:[#allocation9 + $0xc0] sm:$0xff]
    %v2738 = vld [vmem:[#allocation9 + $0xc8] sm:$0xff]
    %v2739 = vld [vmem:[#allocation9 + $0xd0] sm:$0xff]
    %v2740 = vld [vmem:[#allocation9 + $0xd8] sm:$0xff]
    %v2741 = vld [vmem:[#allocation9 + $0xe0] sm:$0xff]
    %v2742 = vld [vmem:[#allocation9 + $0xe8] sm:$0xff]
    %v2743 = vld [vmem:[#allocation9 + $0xf0] sm:$0xff]
    %v2744 = vld [vmem:[#allocation9 + $0xf8] sm:$0xff]
    %v2777 = vunpack.c.l.b16 %v2713
    %v2778 = vunpack.c.h.b16 %v2713
    %v2779 = vunpack.c.l.b16 %v2714
    %v2780 = vunpack.c.h.b16 %v2714
    %v2781 = vunpack.c.l.b16 %v2715
    %v2782 = vunpack.c.h.b16 %v2715
    %v2783 = vunpack.c.l.b16 %v2716
    %v2784 = vunpack.c.h.b16 %v2716
    %v2785 = vunpack.c.l.b16 %v2717
    %v2786 = vunpack.c.h.b16 %v2717
    %v2787 = vunpack.c.l.b16 %v2718
    %v2788 = vunpack.c.h.b16 %v2718
    %v2789 = vunpack.c.l.b16 %v2719
    %v2790 = vunpack.c.h.b16 %v2719
    %v2791 = vunpack.c.l.b16 %v2720
    %v2792 = vunpack.c.h.b16 %v2720
    %v2793 = vunpack.c.l.b16 %v2721
    %v2794 = vunpack.c.h.b16 %v2721
    %v2795 = vunpack.c.l.b16 %v2722
    %v2796 = vunpack.c.h.b16 %v2722
    %v2797 = vunpack.c.l.b16 %v2723
    %v2798 = vunpack.c.h.b16 %v2723
    %v2799 = vunpack.c.l.b16 %v2724
    %v2800 = vunpack.c.h.b16 %v2724
    %v2801 = vunpack.c.l.b16 %v2725
    %v2802 = vunpack.c.h.b16 %v2725
    %v2803 = vunpack.c.l.b16 %v2726
    %v2804 = vunpack.c.h.b16 %v2726
    %v2805 = vunpack.c.l.b16 %v2727
    %v2806 = vunpack.c.h.b16 %v2727
    %v2807 = vunpack.c.l.b16 %v2728
    %v2808 = vunpack.c.h.b16 %v2728
    %v2809 = vunpack.c.l.b16 %v2729
    %v2810 = vunpack.c.h.b16 %v2729
    %v2811 = vunpack.c.l.b16 %v2730
    %v2812 = vunpack.c.h.b16 %v2730
    %v2813 = vunpack.c.l.b16 %v2731
    %v2814 = vunpack.c.h.b16 %v2731
    %v2815 = vunpack.c.l.b16 %v2732
    %v2816 = vunpack.c.h.b16 %v2732
    %v2817 = vunpack.c.l.b16 %v2733
    %v2818 = vunpack.c.h.b16 %v2733
    %v2819 = vunpack.c.l.b16 %v2734
    %v2820 = vunpack.c.h.b16 %v2734
    %v2821 = vunpack.c.l.b16 %v2735
    %v2822 = vunpack.c.h.b16 %v2735
    %v2823 = vunpack.c.l.b16 %v2736
    %v2824 = vunpack.c.h.b16 %v2736
    %v2825 = vunpack.c.l.b16 %v2737
    %v2826 = vunpack.c.h.b16 %v2737
    %v2827 = vunpack.c.l.b16 %v2738
    %v2828 = vunpack.c.h.b16 %v2738
    %v2829 = vunpack.c.l.b16 %v2739
    %v2830 = vunpack.c.h.b16 %v2739
    %v2831 = vunpack.c.l.b16 %v2740
    %v2832 = vunpack.c.h.b16 %v2740
    %v2833 = vunpack.c.l.b16 %v2741
    %v2834 = vunpack.c.h.b16 %v2741
    %v2835 = vunpack.c.l.b16 %v2742
    %v2836 = vunpack.c.h.b16 %v2742
    %v2837 = vunpack.c.l.b16 %v2743
    %v2838 = vunpack.c.h.b16 %v2743
    %v2839 = vunpack.c.l.b16 %v2744
    %v2840 = vunpack.c.h.b16 %v2744
    %v2841 = vpack.c.b16 %v2781, %v2777
    %v2842 = vpack.c.b16 %v2782, %v2778
    %v2843 = vpack.c.b16 %v2783, %v2779
    %v2844 = vpack.c.b16 %v2784, %v2780
    %v2845 = vpack.c.b16 %v2789, %v2785
    %v2846 = vpack.c.b16 %v2790, %v2786
    %v2847 = vpack.c.b16 %v2791, %v2787
    %v2848 = vpack.c.b16 %v2792, %v2788
    %v2849 = vpack.c.b16 %v2797, %v2793
    %v2850 = vpack.c.b16 %v2798, %v2794
    %v2851 = vpack.c.b16 %v2799, %v2795
    %v2852 = vpack.c.b16 %v2800, %v2796
    %v2853 = vpack.c.b16 %v2805, %v2801
    %v2854 = vpack.c.b16 %v2806, %v2802
    %v2855 = vpack.c.b16 %v2807, %v2803
    %v2856 = vpack.c.b16 %v2808, %v2804
    %v2857 = vpack.c.b16 %v2813, %v2809
    %v2858 = vpack.c.b16 %v2814, %v2810
    %v2859 = vpack.c.b16 %v2815, %v2811
    %v2860 = vpack.c.b16 %v2816, %v2812
    %v2861 = vpack.c.b16 %v2821, %v2817
    %v2862 = vpack.c.b16 %v2822, %v2818
    %v2863 = vpack.c.b16 %v2823, %v2819
    %v2864 = vpack.c.b16 %v2824, %v2820
    %v2865 = vpack.c.b16 %v2829, %v2825
    %v2866 = vpack.c.b16 %v2830, %v2826
    %v2867 = vpack.c.b16 %v2831, %v2827
    %v2868 = vpack.c.b16 %v2832, %v2828
    %v2869 = vpack.c.b16 %v2837, %v2833
    %v2870 = vpack.c.b16 %v2838, %v2834
    %v2871 = vpack.c.b16 %v2839, %v2835
    %v2872 = vpack.c.b16 %v2840, %v2836
    %2905 = vmatprep.subr.bf16.mxu0 %v2870
    %2906 = vmatpush1.bf16.msra.mxu0 %v2869
    %2907 = vmatprep.subr.bf16.mxu0 %v2866
    %2908 = vmatpush1.bf16.msra.mxu0 %v2865
    %2909 = vmatprep.subr.bf16.mxu0 %v2862
    %2910 = vmatpush1.bf16.msra.mxu0 %v2861
    %2911 = vmatprep.subr.bf16.mxu0 %v2858
    %2912 = vmatpush1.bf16.msra.mxu0 %v2857
    %2913 = vmatprep.subr.bf16.mxu0 %v2854
    %2914 = vmatpush1.bf16.msra.mxu0 %v2853
    %2915 = vmatprep.subr.bf16.mxu0 %v2850
    %2916 = vmatpush1.bf16.msra.mxu0 %v2849
    %2917 = vmatprep.subr.bf16.mxu0 %v2846
    %2918 = vmatpush1.bf16.msra.mxu0 %v2845
    %2919 = vmatprep.subr.bf16.mxu0 %v2842
    %2920 = vmatpush1.bf16.msra.mxu0 %v2841
    %2921 = vmatprep.subr.bf16.mxu0 0
    %2922 = vmatpush2.bf16.msra.mxu0 0
    %2923 = vmatprep.subr.bf16.mxu0 0
    %2924 = vmatpush2.bf16.msra.mxu0 0
    %2925 = vmatprep.subr.bf16.mxu0 0
    %2926 = vmatpush2.bf16.msra.mxu0 0
    %2927 = vmatprep.subr.bf16.mxu0 0
    %2928 = vmatpush2.bf16.msra.mxu0 0
    %2929 = vmatprep.subr.bf16.mxu0 0
    %2930 = vmatpush2.bf16.msra.mxu0 0
    %2931 = vmatprep.subr.bf16.mxu0 0
    %2932 = vmatpush2.bf16.msra.mxu0 0
    %2933 = vmatprep.subr.bf16.mxu0 0
    %2934 = vmatpush2.bf16.msra.mxu0 0
    %2935 = vmatprep.subr.bf16.mxu0 0
    %2936 = vmatpush2.bf16.msra.mxu0 0
    %2937 = vmatprep.mubr.bf16.mxu0 0
    %2938 = vmatmul.mubr.bf16.gmra.mxu0 %v2712
    %v2939 = vpop.f32.mrf.mxu0
    %v2940 = vadd.f32 0.0, %v2939
    %v2941 = vpop.f32.mrf.mxu0
    %v2942 = vadd.f32 0.0, %v2941
    %v2943 = vpop.f32.mrf.mxu0
    %v2944 = vpop.f32.mrf.mxu0
    %2945 = vdwg.mxu0
    %2946 = vmatprep.subr.bf16.mxu0 %v2872
    %2947 = vmatpush1.bf16.msra.mxu0 %v2871
    %2948 = vmatprep.subr.bf16.mxu0 %v2868
    %2949 = vmatpush1.bf16.msra.mxu0 %v2867
    %2950 = vmatprep.subr.bf16.mxu0 %v2864
    %2951 = vmatpush1.bf16.msra.mxu0 %v2863
    %2952 = vmatprep.subr.bf16.mxu0 %v2860
    %2953 = vmatpush1.bf16.msra.mxu0 %v2859
    %2954 = vmatprep.subr.bf16.mxu0 %v2856
    %2955 = vmatpush1.bf16.msra.mxu0 %v2855
    %2956 = vmatprep.subr.bf16.mxu0 %v2852
    %2957 = vmatpush1.bf16.msra.mxu0 %v2851
    %2958 = vmatprep.subr.bf16.mxu0 %v2848
    %2959 = vmatpush1.bf16.msra.mxu0 %v2847
    %2960 = vmatprep.subr.bf16.mxu0 %v2844
    %2961 = vmatpush1.bf16.msra.mxu0 %v2843
    %2962 = vmatprep.subr.bf16.mxu0 0
    %2963 = vmatpush2.bf16.msra.mxu0 0
    %2964 = vmatprep.subr.bf16.mxu0 0
    %2965 = vmatpush2.bf16.msra.mxu0 0
    %2966 = vmatprep.subr.bf16.mxu0 0
    %2967 = vmatpush2.bf16.msra.mxu0 0
    %2968 = vmatprep.subr.bf16.mxu0 0
    %2969 = vmatpush2.bf16.msra.mxu0 0
    %2970 = vmatprep.subr.bf16.mxu0 0
    %2971 = vmatpush2.bf16.msra.mxu0 0
    %2972 = vmatprep.subr.bf16.mxu0 0
    %2973 = vmatpush2.bf16.msra.mxu0 0
    %2974 = vmatprep.subr.bf16.mxu0 0
    %2975 = vmatpush2.bf16.msra.mxu0 0
    %2976 = vmatprep.subr.bf16.mxu0 0
    %2977 = vmatpush2.bf16.msra.mxu0 0
    %2978 = vmatprep.mubr.bf16.mxu0 0
    %2979 = vmatmul.mubr.bf16.gmra.mxu0 %v2712
    %v2980 = vpop.f32.mrf.mxu0
    %v2981 = vadd.f32 0.0, %v2980
    %v2982 = vpop.f32.mrf.mxu0
    %v2983 = vadd.f32 0.0, %v2982
    %v2984 = vpop.f32.mrf.mxu0
    %v2985 = vpop.f32.mrf.mxu0
    %2986 = vdwg.mxu0
    %v2987 = vadd.f32 %v2708, %v2940
    %v2988 = vadd.f32 %v2709, %v2942
    %v2989 = vadd.f32 %v2710, %v2981
    %v2990 = vadd.f32 %v2711, %v2983
    %v2991 = vxor.u32 %v2987, 2147483648
    %v2992 = vmul.f32 %v2991, 1.442695
    %v2993 = vpow.pop %v2992
    %v2994 = vadd.f32 %v2993, 1.0
    %v2995 = vrcp.pop %v2994
    %v2996 = vmul.f32 1.0, %v2995
    %v2997 = vxor.u32 %v2988, 2147483648
    %v2998 = vmul.f32 %v2997, 1.442695
    %v2999 = vpow.pop %v2998
    %v3000 = vadd.f32 %v2999, 1.0
    %v3001 = vrcp.pop %v3000
    %v3002 = vmul.f32 1.0, %v3001
    %v3003 = vtanh.pop %v2989
    %v3004 = vxor.u32 %v2990, 2147483648
    %v3005 = vmul.f32 %v3004, 1.442695
    %v3006 = vpow.pop %v3005
    %v3007 = vadd.f32 %v3006, 1.0
    %v3008 = vrcp.pop %v3007
    %v3009 = vmul.f32 1.0, %v3008
    %v3010 = vmul.f32 %v3002, %v2700
    %v3011 = vmul.f32 %v2996, %v3003
    %v3012 = vadd.f32 %v3010, %v3011
    %v3013 = vtanh.pop %v3012
    %v3014 = vmul.f32 %v3009, %v3013
    %s3015 = scalar_lea.vmem [#allocation3], 56
    %3016 = vst [vmem:[%s3015] sm:$0xff] %v3014
    %3017 = vst [vmem:[#allocation13] sm:$0xff] %v3014
    %3018 = vst [vmem:[#allocation14] sm:$0xff] %v3012
    %v3019 = vld [vmem:[#allocation3] sm:$0xff]
    %v3020 = vld [vmem:[#allocation3 + $0x8] sm:$0xff]
    %v3021 = vld [vmem:[#allocation3 + $0x10] sm:$0xff]
    %v3022 = vld [vmem:[#allocation3 + $0x18] sm:$0xff]
    %v3023 = vld [vmem:[#allocation3 + $0x20] sm:$0xff]
    %v3024 = vld [vmem:[#allocation3 + $0x28] sm:$0xff]
    %v3025 = vld [vmem:[#allocation3 + $0x30] sm:$0xff]
    %v3026 = vld [vmem:[#allocation3 + $0x38] sm:$0xff]
    %v3027 = vpack.c.bf16 %v3020, %v3019
    %v3028 = vpack.c.bf16 %v3022, %v3021
    %v3029 = vpack.c.bf16 %v3024, %v3023
    %v3030 = vpack.c.bf16 %v3026, %v3025
    %v3031 = vld [vmem:[#allocation10] sm:$0xff]
    %v3032 = vld [vmem:[#allocation10 + $0x8] sm:$0xff]
    %v3033 = vld [vmem:[#allocation10 + $0x10] sm:$0xff]
    %v3034 = vld [vmem:[#allocation10 + $0x18] sm:$0xff]
    %v3035 = vld [vmem:[#allocation10 + $0x20] sm:$0xff]
    %v3036 = vld [vmem:[#allocation10 + $0x28] sm:$0xff]
    %v3037 = vld [vmem:[#allocation10 + $0x30] sm:$0xff]
    %v3038 = vld [vmem:[#allocation10 + $0x38] sm:$0xff]
    %v3039 = vld [vmem:[#allocation10 + $0x40] sm:$0xff]
    %v3040 = vld [vmem:[#allocation10 + $0x48] sm:$0xff]
    %v3041 = vld [vmem:[#allocation10 + $0x50] sm:$0xff]
    %v3042 = vld [vmem:[#allocation10 + $0x58] sm:$0xff]
    %v3043 = vld [vmem:[#allocation10 + $0x60] sm:$0xff]
    %v3044 = vld [vmem:[#allocation10 + $0x68] sm:$0xff]
    %v3045 = vld [vmem:[#allocation10 + $0x70] sm:$0xff]
    %v3046 = vld [vmem:[#allocation10 + $0x78] sm:$0xff]
    %v3047 = vld [vmem:[#allocation10 + $0x80] sm:$0xff]
    %v3048 = vld [vmem:[#allocation10 + $0x88] sm:$0xff]
    %v3049 = vld [vmem:[#allocation10 + $0x90] sm:$0xff]
    %v3050 = vld [vmem:[#allocation10 + $0x98] sm:$0xff]
    %v3051 = vld [vmem:[#allocation10 + $0xa0] sm:$0xff]
    %v3052 = vld [vmem:[#allocation10 + $0xa8] sm:$0xff]
    %v3053 = vld [vmem:[#allocation10 + $0xb0] sm:$0xff]
    %v3054 = vld [vmem:[#allocation10 + $0xb8] sm:$0xff]
    %v3055 = vld [vmem:[#allocation10 + $0xc0] sm:$0xff]
    %v3056 = vld [vmem:[#allocation10 + $0xc8] sm:$0xff]
    %v3057 = vld [vmem:[#allocation10 + $0xd0] sm:$0xff]
    %v3058 = vld [vmem:[#allocation10 + $0xd8] sm:$0xff]
    %v3059 = vld [vmem:[#allocation10 + $0xe0] sm:$0xff]
    %v3060 = vld [vmem:[#allocation10 + $0xe8] sm:$0xff]
    %v3061 = vld [vmem:[#allocation10 + $0xf0] sm:$0xff]
    %v3062 = vld [vmem:[#allocation10 + $0xf8] sm:$0xff]
    %v3063 = vld [vmem:[%s6] sm:$0xf]
    %v3065 = vlaneseq
    %v3066 = vshrl.u32 %v3065, 7
    %v3067 = vsub.s32 0, %v3066
    %v3068 = vrot.slane %v3063, %v3067
    %v3069 = vlaneseq
    %v3070 = vshrl.u32 %v3069, 7
    %v3071 = vsub.s32 1, %v3070
    %v3072 = vrot.slane %v3063, %v3071
    %v3073 = vlaneseq
    %v3074 = vshrl.u32 %v3073, 7
    %v3075 = vsub.s32 2, %v3074
    %v3076 = vrot.slane %v3063, %v3075
    %v3077 = vlaneseq
    %v3078 = vshrl.u32 %v3077, 7
    %v3079 = vsub.s32 3, %v3078
    %v3080 = vrot.slane %v3063, %v3079
    %v3117 = vunpack.c.l.b16 %v3031
    %v3118 = vunpack.c.h.b16 %v3031
    %v3119 = vunpack.c.l.b16 %v3032
    %v3120 = vunpack.c.h.b16 %v3032
    %v3121 = vunpack.c.l.b16 %v3033
    %v3122 = vunpack.c.h.b16 %v3033
    %v3123 = vunpack.c.l.b16 %v3034
    %v3124 = vunpack.c.h.b16 %v3034
    %v3125 = vunpack.c.l.b16 %v3035
    %v3126 = vunpack.c.h.b16 %v3035
    %v3127 = vunpack.c.l.b16 %v3036
    %v3128 = vunpack.c.h.b16 %v3036
    %v3129 = vunpack.c.l.b16 %v3037
    %v3130 = vunpack.c.h.b16 %v3037
    %v3131 = vunpack.c.l.b16 %v3038
    %v3132 = vunpack.c.h.b16 %v3038
    %v3133 = vunpack.c.l.b16 %v3039
    %v3134 = vunpack.c.h.b16 %v3039
    %v3135 = vunpack.c.l.b16 %v3040
    %v3136 = vunpack.c.h.b16 %v3040
    %v3137 = vunpack.c.l.b16 %v3041
    %v3138 = vunpack.c.h.b16 %v3041
    %v3139 = vunpack.c.l.b16 %v3042
    %v3140 = vunpack.c.h.b16 %v3042
    %v3141 = vunpack.c.l.b16 %v3043
    %v3142 = vunpack.c.h.b16 %v3043
    %v3143 = vunpack.c.l.b16 %v3044
    %v3144 = vunpack.c.h.b16 %v3044
    %v3145 = vunpack.c.l.b16 %v3045
    %v3146 = vunpack.c.h.b16 %v3045
    %v3147 = vunpack.c.l.b16 %v3046
    %v3148 = vunpack.c.h.b16 %v3046
    %v3149 = vunpack.c.l.b16 %v3047
    %v3150 = vunpack.c.h.b16 %v3047
    %v3151 = vunpack.c.l.b16 %v3048
    %v3152 = vunpack.c.h.b16 %v3048
    %v3153 = vunpack.c.l.b16 %v3049
    %v3154 = vunpack.c.h.b16 %v3049
    %v3155 = vunpack.c.l.b16 %v3050
    %v3156 = vunpack.c.h.b16 %v3050
    %v3157 = vunpack.c.l.b16 %v3051
    %v3158 = vunpack.c.h.b16 %v3051
    %v3159 = vunpack.c.l.b16 %v3052
    %v3160 = vunpack.c.h.b16 %v3052
    %v3161 = vunpack.c.l.b16 %v3053
    %v3162 = vunpack.c.h.b16 %v3053
    %v3163 = vunpack.c.l.b16 %v3054
    %v3164 = vunpack.c.h.b16 %v3054
    %v3165 = vunpack.c.l.b16 %v3055
    %v3166 = vunpack.c.h.b16 %v3055
    %v3167 = vunpack.c.l.b16 %v3056
    %v3168 = vunpack.c.h.b16 %v3056
    %v3169 = vunpack.c.l.b16 %v3057
    %v3170 = vunpack.c.h.b16 %v3057
    %v3171 = vunpack.c.l.b16 %v3058
    %v3172 = vunpack.c.h.b16 %v3058
    %v3173 = vunpack.c.l.b16 %v3059
    %v3174 = vunpack.c.h.b16 %v3059
    %v3175 = vunpack.c.l.b16 %v3060
    %v3176 = vunpack.c.h.b16 %v3060
    %v3177 = vunpack.c.l.b16 %v3061
    %v3178 = vunpack.c.h.b16 %v3061
    %v3179 = vunpack.c.l.b16 %v3062
    %v3180 = vunpack.c.h.b16 %v3062
    %v3181 = vpack.c.b16 %v3121, %v3117
    %v3182 = vpack.c.b16 %v3122, %v3118
    %v3183 = vpack.c.b16 %v3123, %v3119
    %v3184 = vpack.c.b16 %v3124, %v3120
    %v3185 = vpack.c.b16 %v3129, %v3125
    %v3186 = vpack.c.b16 %v3130, %v3126
    %v3187 = vpack.c.b16 %v3131, %v3127
    %v3188 = vpack.c.b16 %v3132, %v3128
    %v3189 = vpack.c.b16 %v3137, %v3133
    %v3190 = vpack.c.b16 %v3138, %v3134
    %v3191 = vpack.c.b16 %v3139, %v3135
    %v3192 = vpack.c.b16 %v3140, %v3136
    %v3193 = vpack.c.b16 %v3145, %v3141
    %v3194 = vpack.c.b16 %v3146, %v3142
    %v3195 = vpack.c.b16 %v3147, %v3143
    %v3196 = vpack.c.b16 %v3148, %v3144
    %v3197 = vpack.c.b16 %v3153, %v3149
    %v3198 = vpack.c.b16 %v3154, %v3150
    %v3199 = vpack.c.b16 %v3155, %v3151
    %v3200 = vpack.c.b16 %v3156, %v3152
    %v3201 = vpack.c.b16 %v3161, %v3157
    %v3202 = vpack.c.b16 %v3162, %v3158
    %v3203 = vpack.c.b16 %v3163, %v3159
    %v3204 = vpack.c.b16 %v3164, %v3160
    %v3205 = vpack.c.b16 %v3169, %v3165
    %v3206 = vpack.c.b16 %v3170, %v3166
    %v3207 = vpack.c.b16 %v3171, %v3167
    %v3208 = vpack.c.b16 %v3172, %v3168
    %v3209 = vpack.c.b16 %v3177, %v3173
    %v3210 = vpack.c.b16 %v3178, %v3174
    %v3211 = vpack.c.b16 %v3179, %v3175
    %v3212 = vpack.c.b16 %v3180, %v3176
    %3245 = vmatprep.subr.bf16.mxu0 %v3210
    %3246 = vmatpush1.bf16.msra.mxu0 %v3209
    %3247 = vmatprep.subr.bf16.mxu0 %v3206
    %3248 = vmatpush1.bf16.msra.mxu0 %v3205
    %3249 = vmatprep.subr.bf16.mxu0 %v3202
    %3250 = vmatpush1.bf16.msra.mxu0 %v3201
    %3251 = vmatprep.subr.bf16.mxu0 %v3198
    %3252 = vmatpush1.bf16.msra.mxu0 %v3197
    %3253 = vmatprep.subr.bf16.mxu0 %v3194
    %3254 = vmatpush1.bf16.msra.mxu0 %v3193
    %3255 = vmatprep.subr.bf16.mxu0 %v3190
    %3256 = vmatpush1.bf16.msra.mxu0 %v3189
    %3257 = vmatprep.subr.bf16.mxu0 %v3186
    %3258 = vmatpush1.bf16.msra.mxu0 %v3185
    %3259 = vmatprep.subr.bf16.mxu0 %v3182
    %3260 = vmatpush1.bf16.msra.mxu0 %v3181
    %3261 = vmatprep.subr.bf16.mxu0 0
    %3262 = vmatpush2.bf16.msra.mxu0 0
    %3263 = vmatprep.subr.bf16.mxu0 0
    %3264 = vmatpush2.bf16.msra.mxu0 0
    %3265 = vmatprep.subr.bf16.mxu0 0
    %3266 = vmatpush2.bf16.msra.mxu0 0
    %3267 = vmatprep.subr.bf16.mxu0 0
    %3268 = vmatpush2.bf16.msra.mxu0 0
    %3269 = vmatprep.subr.bf16.mxu0 0
    %3270 = vmatpush2.bf16.msra.mxu0 0
    %3271 = vmatprep.subr.bf16.mxu0 0
    %3272 = vmatpush2.bf16.msra.mxu0 0
    %3273 = vmatprep.subr.bf16.mxu0 0
    %3274 = vmatpush2.bf16.msra.mxu0 0
    %3275 = vmatprep.subr.bf16.mxu0 0
    %3276 = vmatpush2.bf16.msra.mxu0 0
    %3277 = vmatprep.mubr.bf16.mxu0 0
    %3278 = vmatmul.mubr.bf16.gmra.mxu0 %v3027
    %v3279 = vpop.f32.mrf.mxu0
    %v3280 = vadd.f32 %v3068, %v3279
    %v3281 = vpop.f32.mrf.mxu0
    %v3282 = vadd.f32 %v3072, %v3281
    %v3283 = vpop.f32.mrf.mxu0
    %v3284 = vadd.f32 %v3068, %v3283
    %v3285 = vpop.f32.mrf.mxu0
    %v3286 = vadd.f32 %v3072, %v3285
    %3287 = vmatprep.mubr.bf16.mxu0 0
    %3288 = vmatmul.mubr.bf16.gmra.mxu0 %v3028
    %v3289 = vpop.f32.mrf.mxu0
    %v3290 = vadd.f32 %v3068, %v3289
    %v3291 = vpop.f32.mrf.mxu0
    %v3292 = vadd.f32 %v3072, %v3291
    %v3293 = vpop.f32.mrf.mxu0
    %v3294 = vadd.f32 %v3068, %v3293
    %v3295 = vpop.f32.mrf.mxu0
    %v3296 = vadd.f32 %v3072, %v3295
    %3297 = vmatprep.mubr.bf16.mxu0 0
    %3298 = vmatmul.mubr.bf16.gmra.mxu0 %v3029
    %v3299 = vpop.f32.mrf.mxu0
    %v3300 = vadd.f32 %v3068, %v3299
    %v3301 = vpop.f32.mrf.mxu0
    %v3302 = vadd.f32 %v3072, %v3301
    %v3303 = vpop.f32.mrf.mxu0
    %v3304 = vadd.f32 %v3068, %v3303
    %v3305 = vpop.f32.mrf.mxu0
    %v3306 = vadd.f32 %v3072, %v3305
    %3307 = vmatprep.mubr.bf16.mxu0 0
    %3308 = vmatmul.mubr.bf16.gmra.mxu0 %v3030
    %v3309 = vpop.f32.mrf.mxu0
    %v3310 = vadd.f32 %v3068, %v3309
    %v3311 = vpop.f32.mrf.mxu0
    %v3312 = vadd.f32 %v3072, %v3311
    %v3313 = vpop.f32.mrf.mxu0
    %v3314 = vadd.f32 %v3068, %v3313
    %v3315 = vpop.f32.mrf.mxu0
    %v3316 = vadd.f32 %v3072, %v3315
    %3317 = vdwg.mxu0
    %3318 = vmatprep.subr.bf16.mxu0 %v3212
    %3319 = vmatpush1.bf16.msra.mxu0 %v3211
    %3320 = vmatprep.subr.bf16.mxu0 %v3208
    %3321 = vmatpush1.bf16.msra.mxu0 %v3207
    %3322 = vmatprep.subr.bf16.mxu0 %v3204
    %3323 = vmatpush1.bf16.msra.mxu0 %v3203
    %3324 = vmatprep.subr.bf16.mxu0 %v3200
    %3325 = vmatpush1.bf16.msra.mxu0 %v3199
    %3326 = vmatprep.subr.bf16.mxu0 %v3196
    %3327 = vmatpush1.bf16.msra.mxu0 %v3195
    %3328 = vmatprep.subr.bf16.mxu0 %v3192
    %3329 = vmatpush1.bf16.msra.mxu0 %v3191
    %3330 = vmatprep.subr.bf16.mxu0 %v3188
    %3331 = vmatpush1.bf16.msra.mxu0 %v3187
    %3332 = vmatprep.subr.bf16.mxu0 %v3184
    %3333 = vmatpush1.bf16.msra.mxu0 %v3183
    %3334 = vmatprep.subr.bf16.mxu0 0
    %3335 = vmatpush2.bf16.msra.mxu0 0
    %3336 = vmatprep.subr.bf16.mxu0 0
    %3337 = vmatpush2.bf16.msra.mxu0 0
    %3338 = vmatprep.subr.bf16.mxu0 0
    %3339 = vmatpush2.bf16.msra.mxu0 0
    %3340 = vmatprep.subr.bf16.mxu0 0
    %3341 = vmatpush2.bf16.msra.mxu0 0
    %3342 = vmatprep.subr.bf16.mxu0 0
    %3343 = vmatpush2.bf16.msra.mxu0 0
    %3344 = vmatprep.subr.bf16.mxu0 0
    %3345 = vmatpush2.bf16.msra.mxu0 0
    %3346 = vmatprep.subr.bf16.mxu0 0
    %3347 = vmatpush2.bf16.msra.mxu0 0
    %3348 = vmatprep.subr.bf16.mxu0 0
    %3349 = vmatpush2.bf16.msra.mxu0 0
    %3350 = vmatprep.mubr.bf16.mxu0 0
    %3351 = vmatmul.mubr.bf16.gmra.mxu0 %v3027
    %v3352 = vpop.f32.mrf.mxu0
    %v3353 = vadd.f32 %v3076, %v3352
    %v3354 = vpop.f32.mrf.mxu0
    %v3355 = vadd.f32 %v3080, %v3354
    %v3356 = vpop.f32.mrf.mxu0
    %v3357 = vadd.f32 %v3076, %v3356
    %v3358 = vpop.f32.mrf.mxu0
    %v3359 = vadd.f32 %v3080, %v3358
    %3360 = vmatprep.mubr.bf16.mxu0 0
    %3361 = vmatmul.mubr.bf16.gmra.mxu0 %v3028
    %v3362 = vpop.f32.mrf.mxu0
    %v3363 = vadd.f32 %v3076, %v3362
    %v3364 = vpop.f32.mrf.mxu0
    %v3365 = vadd.f32 %v3080, %v3364
    %v3366 = vpop.f32.mrf.mxu0
    %v3367 = vadd.f32 %v3076, %v3366
    %v3368 = vpop.f32.mrf.mxu0
    %v3369 = vadd.f32 %v3080, %v3368
    %3370 = vmatprep.mubr.bf16.mxu0 0
    %3371 = vmatmul.mubr.bf16.gmra.mxu0 %v3029
    %v3372 = vpop.f32.mrf.mxu0
    %v3373 = vadd.f32 %v3076, %v3372
    %v3374 = vpop.f32.mrf.mxu0
    %v3375 = vadd.f32 %v3080, %v3374
    %v3376 = vpop.f32.mrf.mxu0
    %v3377 = vadd.f32 %v3076, %v3376
    %v3378 = vpop.f32.mrf.mxu0
    %v3379 = vadd.f32 %v3080, %v3378
    %3380 = vmatprep.mubr.bf16.mxu0 0
    %3381 = vmatmul.mubr.bf16.gmra.mxu0 %v3030
    %v3382 = vpop.f32.mrf.mxu0
    %v3383 = vadd.f32 %v3076, %v3382
    %v3384 = vpop.f32.mrf.mxu0
    %v3385 = vadd.f32 %v3080, %v3384
    %v3386 = vpop.f32.mrf.mxu0
    %v3387 = vadd.f32 %v3076, %v3386
    %v3388 = vpop.f32.mrf.mxu0
    %v3389 = vadd.f32 %v3080, %v3388
    %3390 = vdwg.mxu0
    %3391 = vst [vmem:[#allocation2] sm:$0xff] %v3280
    %3392 = vst [vmem:[#allocation2 + $0x8] sm:$0xff] %v3282
    %3393 = vst [vmem:[#allocation2 + $0x10] sm:$0xff] %v3353
    %3394 = vst [vmem:[#allocation2 + $0x18] sm:$0xff] %v3355
    %3395 = vst [vmem:[#allocation2 + $0x20] sm:$0xff] %v3284
    %3396 = vst [vmem:[#allocation2 + $0x28] sm:$0xff] %v3286
    %3397 = vst [vmem:[#allocation2 + $0x30] sm:$0xff] %v3357
    %3398 = vst [vmem:[#allocation2 + $0x38] sm:$0xff] %v3359
    %3399 = vst [vmem:[#allocation2 + $0x40] sm:$0xff] %v3290
    %3400 = vst [vmem:[#allocation2 + $0x48] sm:$0xff] %v3292
    %3401 = vst [vmem:[#allocation2 + $0x50] sm:$0xff] %v3363
    %3402 = vst [vmem:[#allocation2 + $0x58] sm:$0xff] %v3365
    %3403 = vst [vmem:[#allocation2 + $0x60] sm:$0xff] %v3294
    %3404 = vst [vmem:[#allocation2 + $0x68] sm:$0xff] %v3296
    %3405 = vst [vmem:[#allocation2 + $0x70] sm:$0xff] %v3367
    %3406 = vst [vmem:[#allocation2 + $0x78] sm:$0xff] %v3369
    %3407 = vst [vmem:[#allocation2 + $0x80] sm:$0xff] %v3300
    %3408 = vst [vmem:[#allocation2 + $0x88] sm:$0xff] %v3302
    %3409 = vst [vmem:[#allocation2 + $0x90] sm:$0xff] %v3373
    %3410 = vst [vmem:[#allocation2 + $0x98] sm:$0xff] %v3375
    %3411 = vst [vmem:[#allocation2 + $0xa0] sm:$0xff] %v3304
    %3412 = vst [vmem:[#allocation2 + $0xa8] sm:$0xff] %v3306
    %3413 = vst [vmem:[#allocation2 + $0xb0] sm:$0xff] %v3377
    %3414 = vst [vmem:[#allocation2 + $0xb8] sm:$0xff] %v3379
    %3415 = vst [vmem:[#allocation2 + $0xc0] sm:$0xff] %v3310
    %3416 = vst [vmem:[#allocation2 + $0xc8] sm:$0xff] %v3312
    %3417 = vst [vmem:[#allocation2 + $0xd0] sm:$0xff] %v3383
    %3418 = vst [vmem:[#allocation2 + $0xd8] sm:$0xff] %v3385
    %3419 = vst [vmem:[#allocation2 + $0xe0] sm:$0xff] %v3314
    %3420 = vst [vmem:[#allocation2 + $0xe8] sm:$0xff] %v3316
    %3421 = vst [vmem:[#allocation2 + $0xf0] sm:$0xff] %v3387
    %3422 = vst [vmem:[#allocation2 + $0xf8] sm:$0xff] %v3389
    %v3423 = vld [vmem:[%s525] sm:$0xff]
    %v3424 = vld [vmem:[%s525 + $0x8] sm:$0xff]
    %v3425 = vld [vmem:[%s525 + $0x10] sm:$0xff]
    %v3426 = vld [vmem:[%s525 + $0x18] sm:$0xff]
    %v3427 = vld [vmem:[#allocation12] sm:$0xff]
    %v3428 = vld [vmem:[#allocation12 + $0x8] sm:$0xff]
    %v3429 = vld [vmem:[#allocation12 + $0x10] sm:$0xff]
    %v3430 = vld [vmem:[#allocation12 + $0x18] sm:$0xff]
    %v3431 = vld [vmem:[#allocation12 + $0x20] sm:$0xff]
    %v3432 = vld [vmem:[#allocation12 + $0x28] sm:$0xff]
    %v3433 = vld [vmem:[#allocation12 + $0x30] sm:$0xff]
    %v3434 = vld [vmem:[#allocation12 + $0x38] sm:$0xff]
    %v3435 = vld [vmem:[#allocation12 + $0x40] sm:$0xff]
    %v3436 = vld [vmem:[#allocation12 + $0x48] sm:$0xff]
    %v3437 = vld [vmem:[#allocation12 + $0x50] sm:$0xff]
    %v3438 = vld [vmem:[#allocation12 + $0x58] sm:$0xff]
    %v3439 = vld [vmem:[#allocation12 + $0x60] sm:$0xff]
    %v3440 = vld [vmem:[#allocation12 + $0x68] sm:$0xff]
    %v3441 = vld [vmem:[#allocation12 + $0x70] sm:$0xff]
    %v3442 = vld [vmem:[#allocation12 + $0x78] sm:$0xff]
    %v3443 = vld [vmem:[#allocation12 + $0x80] sm:$0xff]
    %v3444 = vld [vmem:[#allocation12 + $0x88] sm:$0xff]
    %v3445 = vld [vmem:[#allocation12 + $0x90] sm:$0xff]
    %v3446 = vld [vmem:[#allocation12 + $0x98] sm:$0xff]
    %v3447 = vld [vmem:[#allocation12 + $0xa0] sm:$0xff]
    %v3448 = vld [vmem:[#allocation12 + $0xa8] sm:$0xff]
    %v3449 = vld [vmem:[#allocation12 + $0xb0] sm:$0xff]
    %v3450 = vld [vmem:[#allocation12 + $0xb8] sm:$0xff]
    %v3451 = vld [vmem:[#allocation12 + $0xc0] sm:$0xff]
    %v3452 = vld [vmem:[#allocation12 + $0xc8] sm:$0xff]
    %v3453 = vld [vmem:[#allocation12 + $0xd0] sm:$0xff]
    %v3454 = vld [vmem:[#allocation12 + $0xd8] sm:$0xff]
    %v3455 = vld [vmem:[#allocation12 + $0xe0] sm:$0xff]
    %v3456 = vld [vmem:[#allocation12 + $0xe8] sm:$0xff]
    %v3457 = vld [vmem:[#allocation12 + $0xf0] sm:$0xff]
    %v3458 = vld [vmem:[#allocation12 + $0xf8] sm:$0xff]
    %v3491 = vunpack.c.l.b16 %v3427
    %v3492 = vunpack.c.h.b16 %v3427
    %v3493 = vunpack.c.l.b16 %v3428
    %v3494 = vunpack.c.h.b16 %v3428
    %v3495 = vunpack.c.l.b16 %v3429
    %v3496 = vunpack.c.h.b16 %v3429
    %v3497 = vunpack.c.l.b16 %v3430
    %v3498 = vunpack.c.h.b16 %v3430
    %v3499 = vunpack.c.l.b16 %v3431
    %v3500 = vunpack.c.h.b16 %v3431
    %v3501 = vunpack.c.l.b16 %v3432
    %v3502 = vunpack.c.h.b16 %v3432
    %v3503 = vunpack.c.l.b16 %v3433
    %v3504 = vunpack.c.h.b16 %v3433
    %v3505 = vunpack.c.l.b16 %v3434
    %v3506 = vunpack.c.h.b16 %v3434
    %v3507 = vunpack.c.l.b16 %v3435
    %v3508 = vunpack.c.h.b16 %v3435
    %v3509 = vunpack.c.l.b16 %v3436
    %v3510 = vunpack.c.h.b16 %v3436
    %v3511 = vunpack.c.l.b16 %v3437
    %v3512 = vunpack.c.h.b16 %v3437
    %v3513 = vunpack.c.l.b16 %v3438
    %v3514 = vunpack.c.h.b16 %v3438
    %v3515 = vunpack.c.l.b16 %v3439
    %v3516 = vunpack.c.h.b16 %v3439
    %v3517 = vunpack.c.l.b16 %v3440
    %v3518 = vunpack.c.h.b16 %v3440
    %v3519 = vunpack.c.l.b16 %v3441
    %v3520 = vunpack.c.h.b16 %v3441
    %v3521 = vunpack.c.l.b16 %v3442
    %v3522 = vunpack.c.h.b16 %v3442
    %v3523 = vunpack.c.l.b16 %v3443
    %v3524 = vunpack.c.h.b16 %v3443
    %v3525 = vunpack.c.l.b16 %v3444
    %v3526 = vunpack.c.h.b16 %v3444
    %v3527 = vunpack.c.l.b16 %v3445
    %v3528 = vunpack.c.h.b16 %v3445
    %v3529 = vunpack.c.l.b16 %v3446
    %v3530 = vunpack.c.h.b16 %v3446
    %v3531 = vunpack.c.l.b16 %v3447
    %v3532 = vunpack.c.h.b16 %v3447
    %v3533 = vunpack.c.l.b16 %v3448
    %v3534 = vunpack.c.h.b16 %v3448
    %v3535 = vunpack.c.l.b16 %v3449
    %v3536 = vunpack.c.h.b16 %v3449
    %v3537 = vunpack.c.l.b16 %v3450
    %v3538 = vunpack.c.h.b16 %v3450
    %v3539 = vunpack.c.l.b16 %v3451
    %v3540 = vunpack.c.h.b16 %v3451
    %v3541 = vunpack.c.l.b16 %v3452
    %v3542 = vunpack.c.h.b16 %v3452
    %v3543 = vunpack.c.l.b16 %v3453
    %v3544 = vunpack.c.h.b16 %v3453
    %v3545 = vunpack.c.l.b16 %v3454
    %v3546 = vunpack.c.h.b16 %v3454
    %v3547 = vunpack.c.l.b16 %v3455
    %v3548 = vunpack.c.h.b16 %v3455
    %v3549 = vunpack.c.l.b16 %v3456
    %v3550 = vunpack.c.h.b16 %v3456
    %v3551 = vunpack.c.l.b16 %v3457
    %v3552 = vunpack.c.h.b16 %v3457
    %v3553 = vunpack.c.l.b16 %v3458
    %v3554 = vunpack.c.h.b16 %v3458
    %v3555 = vpack.c.b16 %v3495, %v3491
    %v3556 = vpack.c.b16 %v3496, %v3492
    %v3557 = vpack.c.b16 %v3497, %v3493
    %v3558 = vpack.c.b16 %v3498, %v3494
    %v3559 = vpack.c.b16 %v3503, %v3499
    %v3560 = vpack.c.b16 %v3504, %v3500
    %v3561 = vpack.c.b16 %v3505, %v3501
    %v3562 = vpack.c.b16 %v3506, %v3502
    %v3563 = vpack.c.b16 %v3511, %v3507
    %v3564 = vpack.c.b16 %v3512, %v3508
    %v3565 = vpack.c.b16 %v3513, %v3509
    %v3566 = vpack.c.b16 %v3514, %v3510
    %v3567 = vpack.c.b16 %v3519, %v3515
    %v3568 = vpack.c.b16 %v3520, %v3516
    %v3569 = vpack.c.b16 %v3521, %v3517
    %v3570 = vpack.c.b16 %v3522, %v3518
    %v3571 = vpack.c.b16 %v3527, %v3523
    %v3572 = vpack.c.b16 %v3528, %v3524
    %v3573 = vpack.c.b16 %v3529, %v3525
    %v3574 = vpack.c.b16 %v3530, %v3526
    %v3575 = vpack.c.b16 %v3535, %v3531
    %v3576 = vpack.c.b16 %v3536, %v3532
    %v3577 = vpack.c.b16 %v3537, %v3533
    %v3578 = vpack.c.b16 %v3538, %v3534
    %v3579 = vpack.c.b16 %v3543, %v3539
    %v3580 = vpack.c.b16 %v3544, %v3540
    %v3581 = vpack.c.b16 %v3545, %v3541
    %v3582 = vpack.c.b16 %v3546, %v3542
    %v3583 = vpack.c.b16 %v3551, %v3547
    %v3584 = vpack.c.b16 %v3552, %v3548
    %v3585 = vpack.c.b16 %v3553, %v3549
    %v3586 = vpack.c.b16 %v3554, %v3550
    %3619 = vmatprep.subr.bf16.mxu0 %v3584
    %3620 = vmatpush1.bf16.msra.mxu0 %v3583
    %3621 = vmatprep.subr.bf16.mxu0 %v3580
    %3622 = vmatpush1.bf16.msra.mxu0 %v3579
    %3623 = vmatprep.subr.bf16.mxu0 %v3576
    %3624 = vmatpush1.bf16.msra.mxu0 %v3575
    %3625 = vmatprep.subr.bf16.mxu0 %v3572
    %3626 = vmatpush1.bf16.msra.mxu0 %v3571
    %3627 = vmatprep.subr.bf16.mxu0 %v3568
    %3628 = vmatpush1.bf16.msra.mxu0 %v3567
    %3629 = vmatprep.subr.bf16.mxu0 %v3564
    %3630 = vmatpush1.bf16.msra.mxu0 %v3563
    %3631 = vmatprep.subr.bf16.mxu0 %v3560
    %3632 = vmatpush1.bf16.msra.mxu0 %v3559
    %3633 = vmatprep.subr.bf16.mxu0 %v3556
    %3634 = vmatpush1.bf16.msra.mxu0 %v3555
    %3635 = vmatprep.subr.bf16.mxu0 0
    %3636 = vmatpush2.bf16.msra.mxu0 0
    %3637 = vmatprep.subr.bf16.mxu0 0
    %3638 = vmatpush2.bf16.msra.mxu0 0
    %3639 = vmatprep.subr.bf16.mxu0 0
    %3640 = vmatpush2.bf16.msra.mxu0 0
    %3641 = vmatprep.subr.bf16.mxu0 0
    %3642 = vmatpush2.bf16.msra.mxu0 0
    %3643 = vmatprep.subr.bf16.mxu0 0
    %3644 = vmatpush2.bf16.msra.mxu0 0
    %3645 = vmatprep.subr.bf16.mxu0 0
    %3646 = vmatpush2.bf16.msra.mxu0 0
    %3647 = vmatprep.subr.bf16.mxu0 0
    %3648 = vmatpush2.bf16.msra.mxu0 0
    %3649 = vmatprep.subr.bf16.mxu0 0
    %3650 = vmatpush2.bf16.msra.mxu0 0
    %3651 = vmatprep.mubr.bf16.mxu0 0
    %3652 = vmatmul.mubr.bf16.gmra.mxu0 0
    %v3653 = vpop.f32.mrf.mxu0
    %v3654 = vadd.f32 0.0, %v3653
    %v3655 = vpop.f32.mrf.mxu0
    %v3656 = vadd.f32 0.0, %v3655
    %v3657 = vpop.f32.mrf.mxu0
    %v3658 = vpop.f32.mrf.mxu0
    %3659 = vdwg.mxu0
    %3660 = vmatprep.subr.bf16.mxu0 %v3586
    %3661 = vmatpush1.bf16.msra.mxu0 %v3585
    %3662 = vmatprep.subr.bf16.mxu0 %v3582
    %3663 = vmatpush1.bf16.msra.mxu0 %v3581
    %3664 = vmatprep.subr.bf16.mxu0 %v3578
    %3665 = vmatpush1.bf16.msra.mxu0 %v3577
    %3666 = vmatprep.subr.bf16.mxu0 %v3574
    %3667 = vmatpush1.bf16.msra.mxu0 %v3573
    %3668 = vmatprep.subr.bf16.mxu0 %v3570
    %3669 = vmatpush1.bf16.msra.mxu0 %v3569
    %3670 = vmatprep.subr.bf16.mxu0 %v3566
    %3671 = vmatpush1.bf16.msra.mxu0 %v3565
    %3672 = vmatprep.subr.bf16.mxu0 %v3562
    %3673 = vmatpush1.bf16.msra.mxu0 %v3561
    %3674 = vmatprep.subr.bf16.mxu0 %v3558
    %3675 = vmatpush1.bf16.msra.mxu0 %v3557
    %3676 = vmatprep.subr.bf16.mxu0 0
    %3677 = vmatpush2.bf16.msra.mxu0 0
    %3678 = vmatprep.subr.bf16.mxu0 0
    %3679 = vmatpush2.bf16.msra.mxu0 0
    %3680 = vmatprep.subr.bf16.mxu0 0
    %3681 = vmatpush2.bf16.msra.mxu0 0
    %3682 = vmatprep.subr.bf16.mxu0 0
    %3683 = vmatpush2.bf16.msra.mxu0 0
    %3684 = vmatprep.subr.bf16.mxu0 0
    %3685 = vmatpush2.bf16.msra.mxu0 0
    %3686 = vmatprep.subr.bf16.mxu0 0
    %3687 = vmatpush2.bf16.msra.mxu0 0
    %3688 = vmatprep.subr.bf16.mxu0 0
    %3689 = vmatpush2.bf16.msra.mxu0 0
    %3690 = vmatprep.subr.bf16.mxu0 0
    %3691 = vmatpush2.bf16.msra.mxu0 0
    %3692 = vmatprep.mubr.bf16.mxu0 0
    %3693 = vmatmul.mubr.bf16.gmra.mxu0 0
    %v3694 = vpop.f32.mrf.mxu0
    %v3695 = vadd.f32 0.0, %v3694
    %v3696 = vpop.f32.mrf.mxu0
    %v3697 = vadd.f32 0.0, %v3696
    %v3698 = vpop.f32.mrf.mxu0
    %v3699 = vpop.f32.mrf.mxu0
    %3700 = vdwg.mxu0
    %v3701 = vadd.f32 %v3423, %v3654
    %v3702 = vadd.f32 %v3424, %v3656
    %v3703 = vadd.f32 %v3425, %v3695
    %v3704 = vadd.f32 %v3426, %v3697
    %v3705 = vxor.u32 %v3701, 2147483648
    %v3706 = vmul.f32 %v3705, 1.442695
    %v3707 = vpow.pop %v3706
    %v3708 = vadd.f32 %v3707, 1.0
    %v3709 = vrcp.pop %v3708
    %v3710 = vmul.f32 1.0, %v3709
    %v3711 = vxor.u32 %v3702, 2147483648
    %v3712 = vmul.f32 %v3711, 1.442695
    %v3713 = vpow.pop %v3712
    %v3714 = vadd.f32 %v3713, 1.0
    %v3715 = vrcp.pop %v3714
    %v3716 = vmul.f32 1.0, %v3715
    %v3717 = vtanh.pop %v3703
    %v3718 = vxor.u32 %v3704, 2147483648
    %v3719 = vmul.f32 %v3718, 1.442695
    %v3720 = vpow.pop %v3719
    %v3721 = vadd.f32 %v3720, 1.0
    %v3722 = vrcp.pop %v3721
    %v3723 = vmul.f32 1.0, %v3722
    %v3724 = vmul.f32 %v3716, 0.0
    %v3725 = vmul.f32 %v3710, %v3717
    %v3726 = vadd.f32 %v3724, %v3725
    %v3727 = vtanh.pop %v3726
    %v3728 = vmul.f32 %v3723, %v3727
    %3729 = vst [vmem:[#allocation3] sm:$0xff] %v3728
    %v3730 = vld [vmem:[%s835] sm:$0xff]
    %v3731 = vld [vmem:[%s835 + $0x8] sm:$0xff]
    %v3732 = vld [vmem:[%s835 + $0x10] sm:$0xff]
    %v3733 = vld [vmem:[%s835 + $0x18] sm:$0xff]
    %v3734 = vpack.c.bf16 %v3728, %v3728
    %v3735 = vld [vmem:[#allocation12] sm:$0xff]
    %v3736 = vld [vmem:[#allocation12 + $0x8] sm:$0xff]
    %v3737 = vld [vmem:[#allocation12 + $0x10] sm:$0xff]
    %v3738 = vld [vmem:[#allocation12 + $0x18] sm:$0xff]
    %v3739 = vld [vmem:[#allocation12 + $0x20] sm:$0xff]
    %v3740 = vld [vmem:[#allocation12 + $0x28] sm:$0xff]
    %v3741 = vld [vmem:[#allocation12 + $0x30] sm:$0xff]
    %v3742 = vld [vmem:[#allocation12 + $0x38] sm:$0xff]
    %v3743 = vld [vmem:[#allocation12 + $0x40] sm:$0xff]
    %v3744 = vld [vmem:[#allocation12 + $0x48] sm:$0xff]
    %v3745 = vld [vmem:[#allocation12 + $0x50] sm:$0xff]
    %v3746 = vld [vmem:[#allocation12 + $0x58] sm:$0xff]
    %v3747 = vld [vmem:[#allocation12 + $0x60] sm:$0xff]
    %v3748 = vld [vmem:[#allocation12 + $0x68] sm:$0xff]
    %v3749 = vld [vmem:[#allocation12 + $0x70] sm:$0xff]
    %v3750 = vld [vmem:[#allocation12 + $0x78] sm:$0xff]
    %v3751 = vld [vmem:[#allocation12 + $0x80] sm:$0xff]
    %v3752 = vld [vmem:[#allocation12 + $0x88] sm:$0xff]
    %v3753 = vld [vmem:[#allocation12 + $0x90] sm:$0xff]
    %v3754 = vld [vmem:[#allocation12 + $0x98] sm:$0xff]
    %v3755 = vld [vmem:[#allocation12 + $0xa0] sm:$0xff]
    %v3756 = vld [vmem:[#allocation12 + $0xa8] sm:$0xff]
    %v3757 = vld [vmem:[#allocation12 + $0xb0] sm:$0xff]
    %v3758 = vld [vmem:[#allocation12 + $0xb8] sm:$0xff]
    %v3759 = vld [vmem:[#allocation12 + $0xc0] sm:$0xff]
    %v3760 = vld [vmem:[#allocation12 + $0xc8] sm:$0xff]
    %v3761 = vld [vmem:[#allocation12 + $0xd0] sm:$0xff]
    %v3762 = vld [vmem:[#allocation12 + $0xd8] sm:$0xff]
    %v3763 = vld [vmem:[#allocation12 + $0xe0] sm:$0xff]
    %v3764 = vld [vmem:[#allocation12 + $0xe8] sm:$0xff]
    %v3765 = vld [vmem:[#allocation12 + $0xf0] sm:$0xff]
    %v3766 = vld [vmem:[#allocation12 + $0xf8] sm:$0xff]
    %v3799 = vunpack.c.l.b16 %v3735
    %v3800 = vunpack.c.h.b16 %v3735
    %v3801 = vunpack.c.l.b16 %v3736
    %v3802 = vunpack.c.h.b16 %v3736
    %v3803 = vunpack.c.l.b16 %v3737
    %v3804 = vunpack.c.h.b16 %v3737
    %v3805 = vunpack.c.l.b16 %v3738
    %v3806 = vunpack.c.h.b16 %v3738
    %v3807 = vunpack.c.l.b16 %v3739
    %v3808 = vunpack.c.h.b16 %v3739
    %v3809 = vunpack.c.l.b16 %v3740
    %v3810 = vunpack.c.h.b16 %v3740
    %v3811 = vunpack.c.l.b16 %v3741
    %v3812 = vunpack.c.h.b16 %v3741
    %v3813 = vunpack.c.l.b16 %v3742
    %v3814 = vunpack.c.h.b16 %v3742
    %v3815 = vunpack.c.l.b16 %v3743
    %v3816 = vunpack.c.h.b16 %v3743
    %v3817 = vunpack.c.l.b16 %v3744
    %v3818 = vunpack.c.h.b16 %v3744
    %v3819 = vunpack.c.l.b16 %v3745
    %v3820 = vunpack.c.h.b16 %v3745
    %v3821 = vunpack.c.l.b16 %v3746
    %v3822 = vunpack.c.h.b16 %v3746
    %v3823 = vunpack.c.l.b16 %v3747
    %v3824 = vunpack.c.h.b16 %v3747
    %v3825 = vunpack.c.l.b16 %v3748
    %v3826 = vunpack.c.h.b16 %v3748
    %v3827 = vunpack.c.l.b16 %v3749
    %v3828 = vunpack.c.h.b16 %v3749
    %v3829 = vunpack.c.l.b16 %v3750
    %v3830 = vunpack.c.h.b16 %v3750
    %v3831 = vunpack.c.l.b16 %v3751
    %v3832 = vunpack.c.h.b16 %v3751
    %v3833 = vunpack.c.l.b16 %v3752
    %v3834 = vunpack.c.h.b16 %v3752
    %v3835 = vunpack.c.l.b16 %v3753
    %v3836 = vunpack.c.h.b16 %v3753
    %v3837 = vunpack.c.l.b16 %v3754
    %v3838 = vunpack.c.h.b16 %v3754
    %v3839 = vunpack.c.l.b16 %v3755
    %v3840 = vunpack.c.h.b16 %v3755
    %v3841 = vunpack.c.l.b16 %v3756
    %v3842 = vunpack.c.h.b16 %v3756
    %v3843 = vunpack.c.l.b16 %v3757
    %v3844 = vunpack.c.h.b16 %v3757
    %v3845 = vunpack.c.l.b16 %v3758
    %v3846 = vunpack.c.h.b16 %v3758
    %v3847 = vunpack.c.l.b16 %v3759
    %v3848 = vunpack.c.h.b16 %v3759
    %v3849 = vunpack.c.l.b16 %v3760
    %v3850 = vunpack.c.h.b16 %v3760
    %v3851 = vunpack.c.l.b16 %v3761
    %v3852 = vunpack.c.h.b16 %v3761
    %v3853 = vunpack.c.l.b16 %v3762
    %v3854 = vunpack.c.h.b16 %v3762
    %v3855 = vunpack.c.l.b16 %v3763
    %v3856 = vunpack.c.h.b16 %v3763
    %v3857 = vunpack.c.l.b16 %v3764
    %v3858 = vunpack.c.h.b16 %v3764
    %v3859 = vunpack.c.l.b16 %v3765
    %v3860 = vunpack.c.h.b16 %v3765
    %v3861 = vunpack.c.l.b16 %v3766
    %v3862 = vunpack.c.h.b16 %v3766
    %v3863 = vpack.c.b16 %v3803, %v3799
    %v3864 = vpack.c.b16 %v3804, %v3800
    %v3865 = vpack.c.b16 %v3805, %v3801
    %v3866 = vpack.c.b16 %v3806, %v3802
    %v3867 = vpack.c.b16 %v3811, %v3807
    %v3868 = vpack.c.b16 %v3812, %v3808
    %v3869 = vpack.c.b16 %v3813, %v3809
    %v3870 = vpack.c.b16 %v3814, %v3810
    %v3871 = vpack.c.b16 %v3819, %v3815
    %v3872 = vpack.c.b16 %v3820, %v3816
    %v3873 = vpack.c.b16 %v3821, %v3817
    %v3874 = vpack.c.b16 %v3822, %v3818
    %v3875 = vpack.c.b16 %v3827, %v3823
    %v3876 = vpack.c.b16 %v3828, %v3824
    %v3877 = vpack.c.b16 %v3829, %v3825
    %v3878 = vpack.c.b16 %v3830, %v3826
    %v3879 = vpack.c.b16 %v3835, %v3831
    %v3880 = vpack.c.b16 %v3836, %v3832
    %v3881 = vpack.c.b16 %v3837, %v3833
    %v3882 = vpack.c.b16 %v3838, %v3834
    %v3883 = vpack.c.b16 %v3843, %v3839
    %v3884 = vpack.c.b16 %v3844, %v3840
    %v3885 = vpack.c.b16 %v3845, %v3841
    %v3886 = vpack.c.b16 %v3846, %v3842
    %v3887 = vpack.c.b16 %v3851, %v3847
    %v3888 = vpack.c.b16 %v3852, %v3848
    %v3889 = vpack.c.b16 %v3853, %v3849
    %v3890 = vpack.c.b16 %v3854, %v3850
    %v3891 = vpack.c.b16 %v3859, %v3855
    %v3892 = vpack.c.b16 %v3860, %v3856
    %v3893 = vpack.c.b16 %v3861, %v3857
    %v3894 = vpack.c.b16 %v3862, %v3858
    %3927 = vmatprep.subr.bf16.mxu0 %v3892
    %3928 = vmatpush1.bf16.msra.mxu0 %v3891
    %3929 = vmatprep.subr.bf16.mxu0 %v3888
    %3930 = vmatpush1.bf16.msra.mxu0 %v3887
    %3931 = vmatprep.subr.bf16.mxu0 %v3884
    %3932 = vmatpush1.bf16.msra.mxu0 %v3883
    %3933 = vmatprep.subr.bf16.mxu0 %v3880
    %3934 = vmatpush1.bf16.msra.mxu0 %v3879
    %3935 = vmatprep.subr.bf16.mxu0 %v3876
    %3936 = vmatpush1.bf16.msra.mxu0 %v3875
    %3937 = vmatprep.subr.bf16.mxu0 %v3872
    %3938 = vmatpush1.bf16.msra.mxu0 %v3871
    %3939 = vmatprep.subr.bf16.mxu0 %v3868
    %3940 = vmatpush1.bf16.msra.mxu0 %v3867
    %3941 = vmatprep.subr.bf16.mxu0 %v3864
    %3942 = vmatpush1.bf16.msra.mxu0 %v3863
    %3943 = vmatprep.subr.bf16.mxu0 0
    %3944 = vmatpush2.bf16.msra.mxu0 0
    %3945 = vmatprep.subr.bf16.mxu0 0
    %3946 = vmatpush2.bf16.msra.mxu0 0
    %3947 = vmatprep.subr.bf16.mxu0 0
    %3948 = vmatpush2.bf16.msra.mxu0 0
    %3949 = vmatprep.subr.bf16.mxu0 0
    %3950 = vmatpush2.bf16.msra.mxu0 0
    %3951 = vmatprep.subr.bf16.mxu0 0
    %3952 = vmatpush2.bf16.msra.mxu0 0
    %3953 = vmatprep.subr.bf16.mxu0 0
    %3954 = vmatpush2.bf16.msra.mxu0 0
    %3955 = vmatprep.subr.bf16.mxu0 0
    %3956 = vmatpush2.bf16.msra.mxu0 0
    %3957 = vmatprep.subr.bf16.mxu0 0
    %3958 = vmatpush2.bf16.msra.mxu0 0
    %3959 = vmatprep.mubr.bf16.mxu0 0
    %3960 = vmatmul.mubr.bf16.gmra.mxu0 %v3734
    %v3961 = vpop.f32.mrf.mxu0
    %v3962 = vadd.f32 0.0, %v3961
    %v3963 = vpop.f32.mrf.mxu0
    %v3964 = vadd.f32 0.0, %v3963
    %v3965 = vpop.f32.mrf.mxu0
    %v3966 = vpop.f32.mrf.mxu0
    %3967 = vdwg.mxu0
    %3968 = vmatprep.subr.bf16.mxu0 %v3894
    %3969 = vmatpush1.bf16.msra.mxu0 %v3893
    %3970 = vmatprep.subr.bf16.mxu0 %v3890
    %3971 = vmatpush1.bf16.msra.mxu0 %v3889
    %3972 = vmatprep.subr.bf16.mxu0 %v3886
    %3973 = vmatpush1.bf16.msra.mxu0 %v3885
    %3974 = vmatprep.subr.bf16.mxu0 %v3882
    %3975 = vmatpush1.bf16.msra.mxu0 %v3881
    %3976 = vmatprep.subr.bf16.mxu0 %v3878
    %3977 = vmatpush1.bf16.msra.mxu0 %v3877
    %3978 = vmatprep.subr.bf16.mxu0 %v3874
    %3979 = vmatpush1.bf16.msra.mxu0 %v3873
    %3980 = vmatprep.subr.bf16.mxu0 %v3870
    %3981 = vmatpush1.bf16.msra.mxu0 %v3869
    %3982 = vmatprep.subr.bf16.mxu0 %v3866
    %3983 = vmatpush1.bf16.msra.mxu0 %v3865
    %3984 = vmatprep.subr.bf16.mxu0 0
    %3985 = vmatpush2.bf16.msra.mxu0 0
    %3986 = vmatprep.subr.bf16.mxu0 0
    %3987 = vmatpush2.bf16.msra.mxu0 0
    %3988 = vmatprep.subr.bf16.mxu0 0
    %3989 = vmatpush2.bf16.msra.mxu0 0
    %3990 = vmatprep.subr.bf16.mxu0 0
    %3991 = vmatpush2.bf16.msra.mxu0 0
    %3992 = vmatprep.subr.bf16.mxu0 0
    %3993 = vmatpush2.bf16.msra.mxu0 0
    %3994 = vmatprep.subr.bf16.mxu0 0
    %3995 = vmatpush2.bf16.msra.mxu0 0
    %3996 = vmatprep.subr.bf16.mxu0 0
    %3997 = vmatpush2.bf16.msra.mxu0 0
    %3998 = vmatprep.subr.bf16.mxu0 0
    %3999 = vmatpush2.bf16.msra.mxu0 0
    %4000 = vmatprep.mubr.bf16.mxu0 0
    %4001 = vmatmul.mubr.bf16.gmra.mxu0 %v3734
    %v4002 = vpop.f32.mrf.mxu0
    %v4003 = vadd.f32 0.0, %v4002
    %v4004 = vpop.f32.mrf.mxu0
    %v4005 = vadd.f32 0.0, %v4004
    %v4006 = vpop.f32.mrf.mxu0
    %v4007 = vpop.f32.mrf.mxu0
    %4008 = vdwg.mxu0
    %v4009 = vadd.f32 %v3730, %v3962
    %v4010 = vadd.f32 %v3731, %v3964
    %v4011 = vadd.f32 %v3732, %v4003
    %v4012 = vadd.f32 %v3733, %v4005
    %v4013 = vxor.u32 %v4009, 2147483648
    %v4014 = vmul.f32 %v4013, 1.442695
    %v4015 = vpow.pop %v4014
    %v4016 = vadd.f32 %v4015, 1.0
    %v4017 = vrcp.pop %v4016
    %v4018 = vmul.f32 1.0, %v4017
    %v4019 = vxor.u32 %v4010, 2147483648
    %v4020 = vmul.f32 %v4019, 1.442695
    %v4021 = vpow.pop %v4020
    %v4022 = vadd.f32 %v4021, 1.0
    %v4023 = vrcp.pop %v4022
    %v4024 = vmul.f32 1.0, %v4023
    %v4025 = vtanh.pop %v4011
    %v4026 = vxor.u32 %v4012, 2147483648
    %v4027 = vmul.f32 %v4026, 1.442695
    %v4028 = vpow.pop %v4027
    %v4029 = vadd.f32 %v4028, 1.0
    %v4030 = vrcp.pop %v4029
    %v4031 = vmul.f32 1.0, %v4030
    %v4032 = vmul.f32 %v4024, %v3726
    %v4033 = vmul.f32 %v4018, %v4025
    %v4034 = vadd.f32 %v4032, %v4033
    %v4035 = vtanh.pop %v4034
    %v4036 = vmul.f32 %v4031, %v4035
    %4037 = vst [vmem:[%s1143] sm:$0xff] %v4036
    %v4038 = vld [vmem:[%s1147] sm:$0xff]
    %v4039 = vld [vmem:[%s1147 + $0x8] sm:$0xff]
    %v4040 = vld [vmem:[%s1147 + $0x10] sm:$0xff]
    %v4041 = vld [vmem:[%s1147 + $0x18] sm:$0xff]
    %v4042 = vpack.c.bf16 %v4036, %v4036
    %v4043 = vld [vmem:[#allocation12] sm:$0xff]
    %v4044 = vld [vmem:[#allocation12 + $0x8] sm:$0xff]
    %v4045 = vld [vmem:[#allocation12 + $0x10] sm:$0xff]
    %v4046 = vld [vmem:[#allocation12 + $0x18] sm:$0xff]
    %v4047 = vld [vmem:[#allocation12 + $0x20] sm:$0xff]
    %v4048 = vld [vmem:[#allocation12 + $0x28] sm:$0xff]
    %v4049 = vld [vmem:[#allocation12 + $0x30] sm:$0xff]
    %v4050 = vld [vmem:[#allocation12 + $0x38] sm:$0xff]
    %v4051 = vld [vmem:[#allocation12 + $0x40] sm:$0xff]
    %v4052 = vld [vmem:[#allocation12 + $0x48] sm:$0xff]
    %v4053 = vld [vmem:[#allocation12 + $0x50] sm:$0xff]
    %v4054 = vld [vmem:[#allocation12 + $0x58] sm:$0xff]
    %v4055 = vld [vmem:[#allocation12 + $0x60] sm:$0xff]
    %v4056 = vld [vmem:[#allocation12 + $0x68] sm:$0xff]
    %v4057 = vld [vmem:[#allocation12 + $0x70] sm:$0xff]
    %v4058 = vld [vmem:[#allocation12 + $0x78] sm:$0xff]
    %v4059 = vld [vmem:[#allocation12 + $0x80] sm:$0xff]
    %v4060 = vld [vmem:[#allocation12 + $0x88] sm:$0xff]
    %v4061 = vld [vmem:[#allocation12 + $0x90] sm:$0xff]
    %v4062 = vld [vmem:[#allocation12 + $0x98] sm:$0xff]
    %v4063 = vld [vmem:[#allocation12 + $0xa0] sm:$0xff]
    %v4064 = vld [vmem:[#allocation12 + $0xa8] sm:$0xff]
    %v4065 = vld [vmem:[#allocation12 + $0xb0] sm:$0xff]
    %v4066 = vld [vmem:[#allocation12 + $0xb8] sm:$0xff]
    %v4067 = vld [vmem:[#allocation12 + $0xc0] sm:$0xff]
    %v4068 = vld [vmem:[#allocation12 + $0xc8] sm:$0xff]
    %v4069 = vld [vmem:[#allocation12 + $0xd0] sm:$0xff]
    %v4070 = vld [vmem:[#allocation12 + $0xd8] sm:$0xff]
    %v4071 = vld [vmem:[#allocation12 + $0xe0] sm:$0xff]
    %v4072 = vld [vmem:[#allocation12 + $0xe8] sm:$0xff]
    %v4073 = vld [vmem:[#allocation12 + $0xf0] sm:$0xff]
    %v4074 = vld [vmem:[#allocation12 + $0xf8] sm:$0xff]
    %v4107 = vunpack.c.l.b16 %v4043
    %v4108 = vunpack.c.h.b16 %v4043
    %v4109 = vunpack.c.l.b16 %v4044
    %v4110 = vunpack.c.h.b16 %v4044
    %v4111 = vunpack.c.l.b16 %v4045
    %v4112 = vunpack.c.h.b16 %v4045
    %v4113 = vunpack.c.l.b16 %v4046
    %v4114 = vunpack.c.h.b16 %v4046
    %v4115 = vunpack.c.l.b16 %v4047
    %v4116 = vunpack.c.h.b16 %v4047
    %v4117 = vunpack.c.l.b16 %v4048
    %v4118 = vunpack.c.h.b16 %v4048
    %v4119 = vunpack.c.l.b16 %v4049
    %v4120 = vunpack.c.h.b16 %v4049
    %v4121 = vunpack.c.l.b16 %v4050
    %v4122 = vunpack.c.h.b16 %v4050
    %v4123 = vunpack.c.l.b16 %v4051
    %v4124 = vunpack.c.h.b16 %v4051
    %v4125 = vunpack.c.l.b16 %v4052
    %v4126 = vunpack.c.h.b16 %v4052
    %v4127 = vunpack.c.l.b16 %v4053
    %v4128 = vunpack.c.h.b16 %v4053
    %v4129 = vunpack.c.l.b16 %v4054
    %v4130 = vunpack.c.h.b16 %v4054
    %v4131 = vunpack.c.l.b16 %v4055
    %v4132 = vunpack.c.h.b16 %v4055
    %v4133 = vunpack.c.l.b16 %v4056
    %v4134 = vunpack.c.h.b16 %v4056
    %v4135 = vunpack.c.l.b16 %v4057
    %v4136 = vunpack.c.h.b16 %v4057
    %v4137 = vunpack.c.l.b16 %v4058
    %v4138 = vunpack.c.h.b16 %v4058
    %v4139 = vunpack.c.l.b16 %v4059
    %v4140 = vunpack.c.h.b16 %v4059
    %v4141 = vunpack.c.l.b16 %v4060
    %v4142 = vunpack.c.h.b16 %v4060
    %v4143 = vunpack.c.l.b16 %v4061
    %v4144 = vunpack.c.h.b16 %v4061
    %v4145 = vunpack.c.l.b16 %v4062
    %v4146 = vunpack.c.h.b16 %v4062
    %v4147 = vunpack.c.l.b16 %v4063
    %v4148 = vunpack.c.h.b16 %v4063
    %v4149 = vunpack.c.l.b16 %v4064
    %v4150 = vunpack.c.h.b16 %v4064
    %v4151 = vunpack.c.l.b16 %v4065
    %v4152 = vunpack.c.h.b16 %v4065
    %v4153 = vunpack.c.l.b16 %v4066
    %v4154 = vunpack.c.h.b16 %v4066
    %v4155 = vunpack.c.l.b16 %v4067
    %v4156 = vunpack.c.h.b16 %v4067
    %v4157 = vunpack.c.l.b16 %v4068
    %v4158 = vunpack.c.h.b16 %v4068
    %v4159 = vunpack.c.l.b16 %v4069
    %v4160 = vunpack.c.h.b16 %v4069
    %v4161 = vunpack.c.l.b16 %v4070
    %v4162 = vunpack.c.h.b16 %v4070
    %v4163 = vunpack.c.l.b16 %v4071
    %v4164 = vunpack.c.h.b16 %v4071
    %v4165 = vunpack.c.l.b16 %v4072
    %v4166 = vunpack.c.h.b16 %v4072
    %v4167 = vunpack.c.l.b16 %v4073
    %v4168 = vunpack.c.h.b16 %v4073
    %v4169 = vunpack.c.l.b16 %v4074
    %v4170 = vunpack.c.h.b16 %v4074
    %v4171 = vpack.c.b16 %v4111, %v4107
    %v4172 = vpack.c.b16 %v4112, %v4108
    %v4173 = vpack.c.b16 %v4113, %v4109
    %v4174 = vpack.c.b16 %v4114, %v4110
    %v4175 = vpack.c.b16 %v4119, %v4115
    %v4176 = vpack.c.b16 %v4120, %v4116
    %v4177 = vpack.c.b16 %v4121, %v4117
    %v4178 = vpack.c.b16 %v4122, %v4118
    %v4179 = vpack.c.b16 %v4127, %v4123
    %v4180 = vpack.c.b16 %v4128, %v4124
    %v4181 = vpack.c.b16 %v4129, %v4125
    %v4182 = vpack.c.b16 %v4130, %v4126
    %v4183 = vpack.c.b16 %v4135, %v4131
    %v4184 = vpack.c.b16 %v4136, %v4132
    %v4185 = vpack.c.b16 %v4137, %v4133
    %v4186 = vpack.c.b16 %v4138, %v4134
    %v4187 = vpack.c.b16 %v4143, %v4139
    %v4188 = vpack.c.b16 %v4144, %v4140
    %v4189 = vpack.c.b16 %v4145, %v4141
    %v4190 = vpack.c.b16 %v4146, %v4142
    %v4191 = vpack.c.b16 %v4151, %v4147
    %v4192 = vpack.c.b16 %v4152, %v4148
    %v4193 = vpack.c.b16 %v4153, %v4149
    %v4194 = vpack.c.b16 %v4154, %v4150
    %v4195 = vpack.c.b16 %v4159, %v4155
    %v4196 = vpack.c.b16 %v4160, %v4156
    %v4197 = vpack.c.b16 %v4161, %v4157
    %v4198 = vpack.c.b16 %v4162, %v4158
    %v4199 = vpack.c.b16 %v4167, %v4163
    %v4200 = vpack.c.b16 %v4168, %v4164
    %v4201 = vpack.c.b16 %v4169, %v4165
    %v4202 = vpack.c.b16 %v4170, %v4166
    %4235 = vmatprep.subr.bf16.mxu0 %v4200
    %4236 = vmatpush1.bf16.msra.mxu0 %v4199
    %4237 = vmatprep.subr.bf16.mxu0 %v4196
    %4238 = vmatpush1.bf16.msra.mxu0 %v4195
    %4239 = vmatprep.subr.bf16.mxu0 %v4192
    %4240 = vmatpush1.bf16.msra.mxu0 %v4191
    %4241 = vmatprep.subr.bf16.mxu0 %v4188
    %4242 = vmatpush1.bf16.msra.mxu0 %v4187
    %4243 = vmatprep.subr.bf16.mxu0 %v4184
    %4244 = vmatpush1.bf16.msra.mxu0 %v4183
    %4245 = vmatprep.subr.bf16.mxu0 %v4180
    %4246 = vmatpush1.bf16.msra.mxu0 %v4179
    %4247 = vmatprep.subr.bf16.mxu0 %v4176
    %4248 = vmatpush1.bf16.msra.mxu0 %v4175
    %4249 = vmatprep.subr.bf16.mxu0 %v4172
    %4250 = vmatpush1.bf16.msra.mxu0 %v4171
    %4251 = vmatprep.subr.bf16.mxu0 0
    %4252 = vmatpush2.bf16.msra.mxu0 0
    %4253 = vmatprep.subr.bf16.mxu0 0
    %4254 = vmatpush2.bf16.msra.mxu0 0
    %4255 = vmatprep.subr.bf16.mxu0 0
    %4256 = vmatpush2.bf16.msra.mxu0 0
    %4257 = vmatprep.subr.bf16.mxu0 0
    %4258 = vmatpush2.bf16.msra.mxu0 0
    %4259 = vmatprep.subr.bf16.mxu0 0
    %4260 = vmatpush2.bf16.msra.mxu0 0
    %4261 = vmatprep.subr.bf16.mxu0 0
    %4262 = vmatpush2.bf16.msra.mxu0 0
    %4263 = vmatprep.subr.bf16.mxu0 0
    %4264 = vmatpush2.bf16.msra.mxu0 0
    %4265 = vmatprep.subr.bf16.mxu0 0
    %4266 = vmatpush2.bf16.msra.mxu0 0
    %4267 = vmatprep.mubr.bf16.mxu0 0
    %4268 = vmatmul.mubr.bf16.gmra.mxu0 %v4042
    %v4269 = vpop.f32.mrf.mxu0
    %v4270 = vadd.f32 0.0, %v4269
    %v4271 = vpop.f32.mrf.mxu0
    %v4272 = vadd.f32 0.0, %v4271
    %v4273 = vpop.f32.mrf.mxu0
    %v4274 = vpop.f32.mrf.mxu0
    %4275 = vdwg.mxu0
    %4276 = vmatprep.subr.bf16.mxu0 %v4202
    %4277 = vmatpush1.bf16.msra.mxu0 %v4201
    %4278 = vmatprep.subr.bf16.mxu0 %v4198
    %4279 = vmatpush1.bf16.msra.mxu0 %v4197
    %4280 = vmatprep.subr.bf16.mxu0 %v4194
    %4281 = vmatpush1.bf16.msra.mxu0 %v4193
    %4282 = vmatprep.subr.bf16.mxu0 %v4190
    %4283 = vmatpush1.bf16.msra.mxu0 %v4189
    %4284 = vmatprep.subr.bf16.mxu0 %v4186
    %4285 = vmatpush1.bf16.msra.mxu0 %v4185
    %4286 = vmatprep.subr.bf16.mxu0 %v4182
    %4287 = vmatpush1.bf16.msra.mxu0 %v4181
    %4288 = vmatprep.subr.bf16.mxu0 %v4178
    %4289 = vmatpush1.bf16.msra.mxu0 %v4177
    %4290 = vmatprep.subr.bf16.mxu0 %v4174
    %4291 = vmatpush1.bf16.msra.mxu0 %v4173
    %4292 = vmatprep.subr.bf16.mxu0 0
    %4293 = vmatpush2.bf16.msra.mxu0 0
    %4294 = vmatprep.subr.bf16.mxu0 0
    %4295 = vmatpush2.bf16.msra.mxu0 0
    %4296 = vmatprep.subr.bf16.mxu0 0
    %4297 = vmatpush2.bf16.msra.mxu0 0
    %4298 = vmatprep.subr.bf16.mxu0 0
    %4299 = vmatpush2.bf16.msra.mxu0 0
    %4300 = vmatprep.subr.bf16.mxu0 0
    %4301 = vmatpush2.bf16.msra.mxu0 0
    %4302 = vmatprep.subr.bf16.mxu0 0
    %4303 = vmatpush2.bf16.msra.mxu0 0
    %4304 = vmatprep.subr.bf16.mxu0 0
    %4305 = vmatpush2.bf16.msra.mxu0 0
    %4306 = vmatprep.subr.bf16.mxu0 0
    %4307 = vmatpush2.bf16.msra.mxu0 0
    %4308 = vmatprep.mubr.bf16.mxu0 0
    %4309 = vmatmul.mubr.bf16.gmra.mxu0 %v4042
    %v4310 = vpop.f32.mrf.mxu0
    %v4311 = vadd.f32 0.0, %v4310
    %v4312 = vpop.f32.mrf.mxu0
    %v4313 = vadd.f32 0.0, %v4312
    %v4314 = vpop.f32.mrf.mxu0
    %v4315 = vpop.f32.mrf.mxu0
    %4316 = vdwg.mxu0
    %v4317 = vadd.f32 %v4038, %v4270
    %v4318 = vadd.f32 %v4039, %v4272
    %v4319 = vadd.f32 %v4040, %v4311
    %v4320 = vadd.f32 %v4041, %v4313
    %v4321 = vxor.u32 %v4317, 2147483648
    %v4322 = vmul.f32 %v4321, 1.442695
    %v4323 = vpow.pop %v4322
    %v4324 = vadd.f32 %v4323, 1.0
    %v4325 = vrcp.pop %v4324
    %v4326 = vmul.f32 1.0, %v4325
    %v4327 = vxor.u32 %v4318, 2147483648
    %v4328 = vmul.f32 %v4327, 1.442695
    %v4329 = vpow.pop %v4328
    %v4330 = vadd.f32 %v4329, 1.0
    %v4331 = vrcp.pop %v4330
    %v4332 = vmul.f32 1.0, %v4331
    %v4333 = vtanh.pop %v4319
    %v4334 = vxor.u32 %v4320, 2147483648
    %v4335 = vmul.f32 %v4334, 1.442695
    %v4336 = vpow.pop %v4335
    %v4337 = vadd.f32 %v4336, 1.0
    %v4338 = vrcp.pop %v4337
    %v4339 = vmul.f32 1.0, %v4338
    %v4340 = vmul.f32 %v4332, %v4034
    %v4341 = vmul.f32 %v4326, %v4333
    %v4342 = vadd.f32 %v4340, %v4341
    %v4343 = vtanh.pop %v4342
    %v4344 = vmul.f32 %v4339, %v4343
    %4345 = vst [vmem:[%s1455] sm:$0xff] %v4344
    %v4346 = vld [vmem:[%s1459] sm:$0xff]
    %v4347 = vld [vmem:[%s1459 + $0x8] sm:$0xff]
    %v4348 = vld [vmem:[%s1459 + $0x10] sm:$0xff]
    %v4349 = vld [vmem:[%s1459 + $0x18] sm:$0xff]
    %v4350 = vpack.c.bf16 %v4344, %v4344
    %v4351 = vld [vmem:[#allocation12] sm:$0xff]
    %v4352 = vld [vmem:[#allocation12 + $0x8] sm:$0xff]
    %v4353 = vld [vmem:[#allocation12 + $0x10] sm:$0xff]
    %v4354 = vld [vmem:[#allocation12 + $0x18] sm:$0xff]
    %v4355 = vld [vmem:[#allocation12 + $0x20] sm:$0xff]
    %v4356 = vld [vmem:[#allocation12 + $0x28] sm:$0xff]
    %v4357 = vld [vmem:[#allocation12 + $0x30] sm:$0xff]
    %v4358 = vld [vmem:[#allocation12 + $0x38] sm:$0xff]
    %v4359 = vld [vmem:[#allocation12 + $0x40] sm:$0xff]
    %v4360 = vld [vmem:[#allocation12 + $0x48] sm:$0xff]
    %v4361 = vld [vmem:[#allocation12 + $0x50] sm:$0xff]
    %v4362 = vld [vmem:[#allocation12 + $0x58] sm:$0xff]
    %v4363 = vld [vmem:[#allocation12 + $0x60] sm:$0xff]
    %v4364 = vld [vmem:[#allocation12 + $0x68] sm:$0xff]
    %v4365 = vld [vmem:[#allocation12 + $0x70] sm:$0xff]
    %v4366 = vld [vmem:[#allocation12 + $0x78] sm:$0xff]
    %v4367 = vld [vmem:[#allocation12 + $0x80] sm:$0xff]
    %v4368 = vld [vmem:[#allocation12 + $0x88] sm:$0xff]
    %v4369 = vld [vmem:[#allocation12 + $0x90] sm:$0xff]
    %v4370 = vld [vmem:[#allocation12 + $0x98] sm:$0xff]
    %v4371 = vld [vmem:[#allocation12 + $0xa0] sm:$0xff]
    %v4372 = vld [vmem:[#allocation12 + $0xa8] sm:$0xff]
    %v4373 = vld [vmem:[#allocation12 + $0xb0] sm:$0xff]
    %v4374 = vld [vmem:[#allocation12 + $0xb8] sm:$0xff]
    %v4375 = vld [vmem:[#allocation12 + $0xc0] sm:$0xff]
    %v4376 = vld [vmem:[#allocation12 + $0xc8] sm:$0xff]
    %v4377 = vld [vmem:[#allocation12 + $0xd0] sm:$0xff]
    %v4378 = vld [vmem:[#allocation12 + $0xd8] sm:$0xff]
    %v4379 = vld [vmem:[#allocation12 + $0xe0] sm:$0xff]
    %v4380 = vld [vmem:[#allocation12 + $0xe8] sm:$0xff]
    %v4381 = vld [vmem:[#allocation12 + $0xf0] sm:$0xff]
    %v4382 = vld [vmem:[#allocation12 + $0xf8] sm:$0xff]
    %v4415 = vunpack.c.l.b16 %v4351
    %v4416 = vunpack.c.h.b16 %v4351
    %v4417 = vunpack.c.l.b16 %v4352
    %v4418 = vunpack.c.h.b16 %v4352
    %v4419 = vunpack.c.l.b16 %v4353
    %v4420 = vunpack.c.h.b16 %v4353
    %v4421 = vunpack.c.l.b16 %v4354
    %v4422 = vunpack.c.h.b16 %v4354
    %v4423 = vunpack.c.l.b16 %v4355
    %v4424 = vunpack.c.h.b16 %v4355
    %v4425 = vunpack.c.l.b16 %v4356
    %v4426 = vunpack.c.h.b16 %v4356
    %v4427 = vunpack.c.l.b16 %v4357
    %v4428 = vunpack.c.h.b16 %v4357
    %v4429 = vunpack.c.l.b16 %v4358
    %v4430 = vunpack.c.h.b16 %v4358
    %v4431 = vunpack.c.l.b16 %v4359
    %v4432 = vunpack.c.h.b16 %v4359
    %v4433 = vunpack.c.l.b16 %v4360
    %v4434 = vunpack.c.h.b16 %v4360
    %v4435 = vunpack.c.l.b16 %v4361
    %v4436 = vunpack.c.h.b16 %v4361
    %v4437 = vunpack.c.l.b16 %v4362
    %v4438 = vunpack.c.h.b16 %v4362
    %v4439 = vunpack.c.l.b16 %v4363
    %v4440 = vunpack.c.h.b16 %v4363
    %v4441 = vunpack.c.l.b16 %v4364
    %v4442 = vunpack.c.h.b16 %v4364
    %v4443 = vunpack.c.l.b16 %v4365
    %v4444 = vunpack.c.h.b16 %v4365
    %v4445 = vunpack.c.l.b16 %v4366
    %v4446 = vunpack.c.h.b16 %v4366
    %v4447 = vunpack.c.l.b16 %v4367
    %v4448 = vunpack.c.h.b16 %v4367
    %v4449 = vunpack.c.l.b16 %v4368
    %v4450 = vunpack.c.h.b16 %v4368
    %v4451 = vunpack.c.l.b16 %v4369
    %v4452 = vunpack.c.h.b16 %v4369
    %v4453 = vunpack.c.l.b16 %v4370
    %v4454 = vunpack.c.h.b16 %v4370
    %v4455 = vunpack.c.l.b16 %v4371
    %v4456 = vunpack.c.h.b16 %v4371
    %v4457 = vunpack.c.l.b16 %v4372
    %v4458 = vunpack.c.h.b16 %v4372
    %v4459 = vunpack.c.l.b16 %v4373
    %v4460 = vunpack.c.h.b16 %v4373
    %v4461 = vunpack.c.l.b16 %v4374
    %v4462 = vunpack.c.h.b16 %v4374
    %v4463 = vunpack.c.l.b16 %v4375
    %v4464 = vunpack.c.h.b16 %v4375
    %v4465 = vunpack.c.l.b16 %v4376
    %v4466 = vunpack.c.h.b16 %v4376
    %v4467 = vunpack.c.l.b16 %v4377
    %v4468 = vunpack.c.h.b16 %v4377
    %v4469 = vunpack.c.l.b16 %v4378
    %v4470 = vunpack.c.h.b16 %v4378
    %v4471 = vunpack.c.l.b16 %v4379
    %v4472 = vunpack.c.h.b16 %v4379
    %v4473 = vunpack.c.l.b16 %v4380
    %v4474 = vunpack.c.h.b16 %v4380
    %v4475 = vunpack.c.l.b16 %v4381
    %v4476 = vunpack.c.h.b16 %v4381
    %v4477 = vunpack.c.l.b16 %v4382
    %v4478 = vunpack.c.h.b16 %v4382
    %v4479 = vpack.c.b16 %v4419, %v4415
    %v4480 = vpack.c.b16 %v4420, %v4416
    %v4481 = vpack.c.b16 %v4421, %v4417
    %v4482 = vpack.c.b16 %v4422, %v4418
    %v4483 = vpack.c.b16 %v4427, %v4423
    %v4484 = vpack.c.b16 %v4428, %v4424
    %v4485 = vpack.c.b16 %v4429, %v4425
    %v4486 = vpack.c.b16 %v4430, %v4426
    %v4487 = vpack.c.b16 %v4435, %v4431
    %v4488 = vpack.c.b16 %v4436, %v4432
    %v4489 = vpack.c.b16 %v4437, %v4433
    %v4490 = vpack.c.b16 %v4438, %v4434
    %v4491 = vpack.c.b16 %v4443, %v4439
    %v4492 = vpack.c.b16 %v4444, %v4440
    %v4493 = vpack.c.b16 %v4445, %v4441
    %v4494 = vpack.c.b16 %v4446, %v4442
    %v4495 = vpack.c.b16 %v4451, %v4447
    %v4496 = vpack.c.b16 %v4452, %v4448
    %v4497 = vpack.c.b16 %v4453, %v4449
    %v4498 = vpack.c.b16 %v4454, %v4450
    %v4499 = vpack.c.b16 %v4459, %v4455
    %v4500 = vpack.c.b16 %v4460, %v4456
    %v4501 = vpack.c.b16 %v4461, %v4457
    %v4502 = vpack.c.b16 %v4462, %v4458
    %v4503 = vpack.c.b16 %v4467, %v4463
    %v4504 = vpack.c.b16 %v4468, %v4464
    %v4505 = vpack.c.b16 %v4469, %v4465
    %v4506 = vpack.c.b16 %v4470, %v4466
    %v4507 = vpack.c.b16 %v4475, %v4471
    %v4508 = vpack.c.b16 %v4476, %v4472
    %v4509 = vpack.c.b16 %v4477, %v4473
    %v4510 = vpack.c.b16 %v4478, %v4474
    %4543 = vmatprep.subr.bf16.mxu0 %v4508
    %4544 = vmatpush1.bf16.msra.mxu0 %v4507
    %4545 = vmatprep.subr.bf16.mxu0 %v4504
    %4546 = vmatpush1.bf16.msra.mxu0 %v4503
    %4547 = vmatprep.subr.bf16.mxu0 %v4500
    %4548 = vmatpush1.bf16.msra.mxu0 %v4499
    %4549 = vmatprep.subr.bf16.mxu0 %v4496
    %4550 = vmatpush1.bf16.msra.mxu0 %v4495
    %4551 = vmatprep.subr.bf16.mxu0 %v4492
    %4552 = vmatpush1.bf16.msra.mxu0 %v4491
    %4553 = vmatprep.subr.bf16.mxu0 %v4488
    %4554 = vmatpush1.bf16.msra.mxu0 %v4487
    %4555 = vmatprep.subr.bf16.mxu0 %v4484
    %4556 = vmatpush1.bf16.msra.mxu0 %v4483
    %4557 = vmatprep.subr.bf16.mxu0 %v4480
    %4558 = vmatpush1.bf16.msra.mxu0 %v4479
    %4559 = vmatprep.subr.bf16.mxu0 0
    %4560 = vmatpush2.bf16.msra.mxu0 0
    %4561 = vmatprep.subr.bf16.mxu0 0
    %4562 = vmatpush2.bf16.msra.mxu0 0
    %4563 = vmatprep.subr.bf16.mxu0 0
    %4564 = vmatpush2.bf16.msra.mxu0 0
    %4565 = vmatprep.subr.bf16.mxu0 0
    %4566 = vmatpush2.bf16.msra.mxu0 0
    %4567 = vmatprep.subr.bf16.mxu0 0
    %4568 = vmatpush2.bf16.msra.mxu0 0
    %4569 = vmatprep.subr.bf16.mxu0 0
    %4570 = vmatpush2.bf16.msra.mxu0 0
    %4571 = vmatprep.subr.bf16.mxu0 0
    %4572 = vmatpush2.bf16.msra.mxu0 0
    %4573 = vmatprep.subr.bf16.mxu0 0
    %4574 = vmatpush2.bf16.msra.mxu0 0
    %4575 = vmatprep.mubr.bf16.mxu0 0
    %4576 = vmatmul.mubr.bf16.gmra.mxu0 %v4350
    %v4577 = vpop.f32.mrf.mxu0
    %v4578 = vadd.f32 0.0, %v4577
    %v4579 = vpop.f32.mrf.mxu0
    %v4580 = vadd.f32 0.0, %v4579
    %v4581 = vpop.f32.mrf.mxu0
    %v4582 = vpop.f32.mrf.mxu0
    %4583 = vdwg.mxu0
    %4584 = vmatprep.subr.bf16.mxu0 %v4510
    %4585 = vmatpush1.bf16.msra.mxu0 %v4509
    %4586 = vmatprep.subr.bf16.mxu0 %v4506
    %4587 = vmatpush1.bf16.msra.mxu0 %v4505
    %4588 = vmatprep.subr.bf16.mxu0 %v4502
    %4589 = vmatpush1.bf16.msra.mxu0 %v4501
    %4590 = vmatprep.subr.bf16.mxu0 %v4498
    %4591 = vmatpush1.bf16.msra.mxu0 %v4497
    %4592 = vmatprep.subr.bf16.mxu0 %v4494
    %4593 = vmatpush1.bf16.msra.mxu0 %v4493
    %4594 = vmatprep.subr.bf16.mxu0 %v4490
    %4595 = vmatpush1.bf16.msra.mxu0 %v4489
    %4596 = vmatprep.subr.bf16.mxu0 %v4486
    %4597 = vmatpush1.bf16.msra.mxu0 %v4485
    %4598 = vmatprep.subr.bf16.mxu0 %v4482
    %4599 = vmatpush1.bf16.msra.mxu0 %v4481
    %4600 = vmatprep.subr.bf16.mxu0 0
    %4601 = vmatpush2.bf16.msra.mxu0 0
    %4602 = vmatprep.subr.bf16.mxu0 0
    %4603 = vmatpush2.bf16.msra.mxu0 0
    %4604 = vmatprep.subr.bf16.mxu0 0
    %4605 = vmatpush2.bf16.msra.mxu0 0
    %4606 = vmatprep.subr.bf16.mxu0 0
    %4607 = vmatpush2.bf16.msra.mxu0 0
    %4608 = vmatprep.subr.bf16.mxu0 0
    %4609 = vmatpush2.bf16.msra.mxu0 0
    %4610 = vmatprep.subr.bf16.mxu0 0
    %4611 = vmatpush2.bf16.msra.mxu0 0
    %4612 = vmatprep.subr.bf16.mxu0 0
    %4613 = vmatpush2.bf16.msra.mxu0 0
    %4614 = vmatprep.subr.bf16.mxu0 0
    %4615 = vmatpush2.bf16.msra.mxu0 0
    %4616 = vmatprep.mubr.bf16.mxu0 0
    %4617 = vmatmul.mubr.bf16.gmra.mxu0 %v4350
    %v4618 = vpop.f32.mrf.mxu0
    %v4619 = vadd.f32 0.0, %v4618
    %v4620 = vpop.f32.mrf.mxu0
    %v4621 = vadd.f32 0.0, %v4620
    %v4622 = vpop.f32.mrf.mxu0
    %v4623 = vpop.f32.mrf.mxu0
    %4624 = vdwg.mxu0
    %v4625 = vadd.f32 %v4346, %v4578
    %v4626 = vadd.f32 %v4347, %v4580
    %v4627 = vadd.f32 %v4348, %v4619
    %v4628 = vadd.f32 %v4349, %v4621
    %v4629 = vxor.u32 %v4625, 2147483648
    %v4630 = vmul.f32 %v4629, 1.442695
    %v4631 = vpow.pop %v4630
    %v4632 = vadd.f32 %v4631, 1.0
    %v4633 = vrcp.pop %v4632
    %v4634 = vmul.f32 1.0, %v4633
    %v4635 = vxor.u32 %v4626, 2147483648
    %v4636 = vmul.f32 %v4635, 1.442695
    %v4637 = vpow.pop %v4636
    %v4638 = vadd.f32 %v4637, 1.0
    %v4639 = vrcp.pop %v4638
    %v4640 = vmul.f32 1.0, %v4639
    %v4641 = vtanh.pop %v4627
    %v4642 = vxor.u32 %v4628, 2147483648
    %v4643 = vmul.f32 %v4642, 1.442695
    %v4644 = vpow.pop %v4643
    %v4645 = vadd.f32 %v4644, 1.0
    %v4646 = vrcp.pop %v4645
    %v4647 = vmul.f32 1.0, %v4646
    %v4648 = vmul.f32 %v4640, %v4342
    %v4649 = vmul.f32 %v4634, %v4641
    %v4650 = vadd.f32 %v4648, %v4649
    %v4651 = vtanh.pop %v4650
    %v4652 = vmul.f32 %v4647, %v4651
    %4653 = vst [vmem:[%s1767] sm:$0xff] %v4652
    %v4654 = vld [vmem:[%s1771] sm:$0xff]
    %v4655 = vld [vmem:[%s1771 + $0x8] sm:$0xff]
    %v4656 = vld [vmem:[%s1771 + $0x10] sm:$0xff]
    %v4657 = vld [vmem:[%s1771 + $0x18] sm:$0xff]
    %v4658 = vpack.c.bf16 %v4652, %v4652
    %v4659 = vld [vmem:[#allocation12] sm:$0xff]
    %v4660 = vld [vmem:[#allocation12 + $0x8] sm:$0xff]
    %v4661 = vld [vmem:[#allocation12 + $0x10] sm:$0xff]
    %v4662 = vld [vmem:[#allocation12 + $0x18] sm:$0xff]
    %v4663 = vld [vmem:[#allocation12 + $0x20] sm:$0xff]
    %v4664 = vld [vmem:[#allocation12 + $0x28] sm:$0xff]
    %v4665 = vld [vmem:[#allocation12 + $0x30] sm:$0xff]
    %v4666 = vld [vmem:[#allocation12 + $0x38] sm:$0xff]
    %v4667 = vld [vmem:[#allocation12 + $0x40] sm:$0xff]
    %v4668 = vld [vmem:[#allocation12 + $0x48] sm:$0xff]
    %v4669 = vld [vmem:[#allocation12 + $0x50] sm:$0xff]
    %v4670 = vld [vmem:[#allocation12 + $0x58] sm:$0xff]
    %v4671 = vld [vmem:[#allocation12 + $0x60] sm:$0xff]
    %v4672 = vld [vmem:[#allocation12 + $0x68] sm:$0xff]
    %v4673 = vld [vmem:[#allocation12 + $0x70] sm:$0xff]
    %v4674 = vld [vmem:[#allocation12 + $0x78] sm:$0xff]
    %v4675 = vld [vmem:[#allocation12 + $0x80] sm:$0xff]
    %v4676 = vld [vmem:[#allocation12 + $0x88] sm:$0xff]
    %v4677 = vld [vmem:[#allocation12 + $0x90] sm:$0xff]
    %v4678 = vld [vmem:[#allocation12 + $0x98] sm:$0xff]
    %v4679 = vld [vmem:[#allocation12 + $0xa0] sm:$0xff]
    %v4680 = vld [vmem:[#allocation12 + $0xa8] sm:$0xff]
    %v4681 = vld [vmem:[#allocation12 + $0xb0] sm:$0xff]
    %v4682 = vld [vmem:[#allocation12 + $0xb8] sm:$0xff]
    %v4683 = vld [vmem:[#allocation12 + $0xc0] sm:$0xff]
    %v4684 = vld [vmem:[#allocation12 + $0xc8] sm:$0xff]
    %v4685 = vld [vmem:[#allocation12 + $0xd0] sm:$0xff]
    %v4686 = vld [vmem:[#allocation12 + $0xd8] sm:$0xff]
    %v4687 = vld [vmem:[#allocation12 + $0xe0] sm:$0xff]
    %v4688 = vld [vmem:[#allocation12 + $0xe8] sm:$0xff]
    %v4689 = vld [vmem:[#allocation12 + $0xf0] sm:$0xff]
    %v4690 = vld [vmem:[#allocation12 + $0xf8] sm:$0xff]
    %v4723 = vunpack.c.l.b16 %v4659
    %v4724 = vunpack.c.h.b16 %v4659
    %v4725 = vunpack.c.l.b16 %v4660
    %v4726 = vunpack.c.h.b16 %v4660
    %v4727 = vunpack.c.l.b16 %v4661
    %v4728 = vunpack.c.h.b16 %v4661
    %v4729 = vunpack.c.l.b16 %v4662
    %v4730 = vunpack.c.h.b16 %v4662
    %v4731 = vunpack.c.l.b16 %v4663
    %v4732 = vunpack.c.h.b16 %v4663
    %v4733 = vunpack.c.l.b16 %v4664
    %v4734 = vunpack.c.h.b16 %v4664
    %v4735 = vunpack.c.l.b16 %v4665
    %v4736 = vunpack.c.h.b16 %v4665
    %v4737 = vunpack.c.l.b16 %v4666
    %v4738 = vunpack.c.h.b16 %v4666
    %v4739 = vunpack.c.l.b16 %v4667
    %v4740 = vunpack.c.h.b16 %v4667
    %v4741 = vunpack.c.l.b16 %v4668
    %v4742 = vunpack.c.h.b16 %v4668
    %v4743 = vunpack.c.l.b16 %v4669
    %v4744 = vunpack.c.h.b16 %v4669
    %v4745 = vunpack.c.l.b16 %v4670
    %v4746 = vunpack.c.h.b16 %v4670
    %v4747 = vunpack.c.l.b16 %v4671
    %v4748 = vunpack.c.h.b16 %v4671
    %v4749 = vunpack.c.l.b16 %v4672
    %v4750 = vunpack.c.h.b16 %v4672
    %v4751 = vunpack.c.l.b16 %v4673
    %v4752 = vunpack.c.h.b16 %v4673
    %v4753 = vunpack.c.l.b16 %v4674
    %v4754 = vunpack.c.h.b16 %v4674
    %v4755 = vunpack.c.l.b16 %v4675
    %v4756 = vunpack.c.h.b16 %v4675
    %v4757 = vunpack.c.l.b16 %v4676
    %v4758 = vunpack.c.h.b16 %v4676
    %v4759 = vunpack.c.l.b16 %v4677
    %v4760 = vunpack.c.h.b16 %v4677
    %v4761 = vunpack.c.l.b16 %v4678
    %v4762 = vunpack.c.h.b16 %v4678
    %v4763 = vunpack.c.l.b16 %v4679
    %v4764 = vunpack.c.h.b16 %v4679
    %v4765 = vunpack.c.l.b16 %v4680
    %v4766 = vunpack.c.h.b16 %v4680
    %v4767 = vunpack.c.l.b16 %v4681
    %v4768 = vunpack.c.h.b16 %v4681
    %v4769 = vunpack.c.l.b16 %v4682
    %v4770 = vunpack.c.h.b16 %v4682
    %v4771 = vunpack.c.l.b16 %v4683
    %v4772 = vunpack.c.h.b16 %v4683
    %v4773 = vunpack.c.l.b16 %v4684
    %v4774 = vunpack.c.h.b16 %v4684
    %v4775 = vunpack.c.l.b16 %v4685
    %v4776 = vunpack.c.h.b16 %v4685
    %v4777 = vunpack.c.l.b16 %v4686
    %v4778 = vunpack.c.h.b16 %v4686
    %v4779 = vunpack.c.l.b16 %v4687
    %v4780 = vunpack.c.h.b16 %v4687
    %v4781 = vunpack.c.l.b16 %v4688
    %v4782 = vunpack.c.h.b16 %v4688
    %v4783 = vunpack.c.l.b16 %v4689
    %v4784 = vunpack.c.h.b16 %v4689
    %v4785 = vunpack.c.l.b16 %v4690
    %v4786 = vunpack.c.h.b16 %v4690
    %v4787 = vpack.c.b16 %v4727, %v4723
    %v4788 = vpack.c.b16 %v4728, %v4724
    %v4789 = vpack.c.b16 %v4729, %v4725
    %v4790 = vpack.c.b16 %v4730, %v4726
    %v4791 = vpack.c.b16 %v4735, %v4731
    %v4792 = vpack.c.b16 %v4736, %v4732
    %v4793 = vpack.c.b16 %v4737, %v4733
    %v4794 = vpack.c.b16 %v4738, %v4734
    %v4795 = vpack.c.b16 %v4743, %v4739
    %v4796 = vpack.c.b16 %v4744, %v4740
    %v4797 = vpack.c.b16 %v4745, %v4741
    %v4798 = vpack.c.b16 %v4746, %v4742
    %v4799 = vpack.c.b16 %v4751, %v4747
    %v4800 = vpack.c.b16 %v4752, %v4748
    %v4801 = vpack.c.b16 %v4753, %v4749
    %v4802 = vpack.c.b16 %v4754, %v4750
    %v4803 = vpack.c.b16 %v4759, %v4755
    %v4804 = vpack.c.b16 %v4760, %v4756
    %v4805 = vpack.c.b16 %v4761, %v4757
    %v4806 = vpack.c.b16 %v4762, %v4758
    %v4807 = vpack.c.b16 %v4767, %v4763
    %v4808 = vpack.c.b16 %v4768, %v4764
    %v4809 = vpack.c.b16 %v4769, %v4765
    %v4810 = vpack.c.b16 %v4770, %v4766
    %v4811 = vpack.c.b16 %v4775, %v4771
    %v4812 = vpack.c.b16 %v4776, %v4772
    %v4813 = vpack.c.b16 %v4777, %v4773
    %v4814 = vpack.c.b16 %v4778, %v4774
    %v4815 = vpack.c.b16 %v4783, %v4779
    %v4816 = vpack.c.b16 %v4784, %v4780
    %v4817 = vpack.c.b16 %v4785, %v4781
    %v4818 = vpack.c.b16 %v4786, %v4782
    %4851 = vmatprep.subr.bf16.mxu0 %v4816
    %4852 = vmatpush1.bf16.msra.mxu0 %v4815
    %4853 = vmatprep.subr.bf16.mxu0 %v4812
    %4854 = vmatpush1.bf16.msra.mxu0 %v4811
    %4855 = vmatprep.subr.bf16.mxu0 %v4808
    %4856 = vmatpush1.bf16.msra.mxu0 %v4807
    %4857 = vmatprep.subr.bf16.mxu0 %v4804
    %4858 = vmatpush1.bf16.msra.mxu0 %v4803
    %4859 = vmatprep.subr.bf16.mxu0 %v4800
    %4860 = vmatpush1.bf16.msra.mxu0 %v4799
    %4861 = vmatprep.subr.bf16.mxu0 %v4796
    %4862 = vmatpush1.bf16.msra.mxu0 %v4795
    %4863 = vmatprep.subr.bf16.mxu0 %v4792
    %4864 = vmatpush1.bf16.msra.mxu0 %v4791
    %4865 = vmatprep.subr.bf16.mxu0 %v4788
    %4866 = vmatpush1.bf16.msra.mxu0 %v4787
    %4867 = vmatprep.subr.bf16.mxu0 0
    %4868 = vmatpush2.bf16.msra.mxu0 0
    %4869 = vmatprep.subr.bf16.mxu0 0
    %4870 = vmatpush2.bf16.msra.mxu0 0
    %4871 = vmatprep.subr.bf16.mxu0 0
    %4872 = vmatpush2.bf16.msra.mxu0 0
    %4873 = vmatprep.subr.bf16.mxu0 0
    %4874 = vmatpush2.bf16.msra.mxu0 0
    %4875 = vmatprep.subr.bf16.mxu0 0
    %4876 = vmatpush2.bf16.msra.mxu0 0
    %4877 = vmatprep.subr.bf16.mxu0 0
    %4878 = vmatpush2.bf16.msra.mxu0 0
    %4879 = vmatprep.subr.bf16.mxu0 0
    %4880 = vmatpush2.bf16.msra.mxu0 0
    %4881 = vmatprep.subr.bf16.mxu0 0
    %4882 = vmatpush2.bf16.msra.mxu0 0
    %4883 = vmatprep.mubr.bf16.mxu0 0
    %4884 = vmatmul.mubr.bf16.gmra.mxu0 %v4658
    %v4885 = vpop.f32.mrf.mxu0
    %v4886 = vadd.f32 0.0, %v4885
    %v4887 = vpop.f32.mrf.mxu0
    %v4888 = vadd.f32 0.0, %v4887
    %v4889 = vpop.f32.mrf.mxu0
    %v4890 = vpop.f32.mrf.mxu0
    %4891 = vdwg.mxu0
    %4892 = vmatprep.subr.bf16.mxu0 %v4818
    %4893 = vmatpush1.bf16.msra.mxu0 %v4817
    %4894 = vmatprep.subr.bf16.mxu0 %v4814
    %4895 = vmatpush1.bf16.msra.mxu0 %v4813
    %4896 = vmatprep.subr.bf16.mxu0 %v4810
    %4897 = vmatpush1.bf16.msra.mxu0 %v4809
    %4898 = vmatprep.subr.bf16.mxu0 %v4806
    %4899 = vmatpush1.bf16.msra.mxu0 %v4805
    %4900 = vmatprep.subr.bf16.mxu0 %v4802
    %4901 = vmatpush1.bf16.msra.mxu0 %v4801
    %4902 = vmatprep.subr.bf16.mxu0 %v4798
    %4903 = vmatpush1.bf16.msra.mxu0 %v4797
    %4904 = vmatprep.subr.bf16.mxu0 %v4794
    %4905 = vmatpush1.bf16.msra.mxu0 %v4793
    %4906 = vmatprep.subr.bf16.mxu0 %v4790
    %4907 = vmatpush1.bf16.msra.mxu0 %v4789
    %4908 = vmatprep.subr.bf16.mxu0 0
    %4909 = vmatpush2.bf16.msra.mxu0 0
    %4910 = vmatprep.subr.bf16.mxu0 0
    %4911 = vmatpush2.bf16.msra.mxu0 0
    %4912 = vmatprep.subr.bf16.mxu0 0
    %4913 = vmatpush2.bf16.msra.mxu0 0
    %4914 = vmatprep.subr.bf16.mxu0 0
    %4915 = vmatpush2.bf16.msra.mxu0 0
    %4916 = vmatprep.subr.bf16.mxu0 0
    %4917 = vmatpush2.bf16.msra.mxu0 0
    %4918 = vmatprep.subr.bf16.mxu0 0
    %4919 = vmatpush2.bf16.msra.mxu0 0
    %4920 = vmatprep.subr.bf16.mxu0 0
    %4921 = vmatpush2.bf16.msra.mxu0 0
    %4922 = vmatprep.subr.bf16.mxu0 0
    %4923 = vmatpush2.bf16.msra.mxu0 0
    %4924 = vmatprep.mubr.bf16.mxu0 0
    %4925 = vmatmul.mubr.bf16.gmra.mxu0 %v4658
    %v4926 = vpop.f32.mrf.mxu0
    %v4927 = vadd.f32 0.0, %v4926
    %v4928 = vpop.f32.mrf.mxu0
    %v4929 = vadd.f32 0.0, %v4928
    %v4930 = vpop.f32.mrf.mxu0
    %v4931 = vpop.f32.mrf.mxu0
    %4932 = vdwg.mxu0
    %v4933 = vadd.f32 %v4654, %v4886
    %v4934 = vadd.f32 %v4655, %v4888
    %v4935 = vadd.f32 %v4656, %v4927
    %v4936 = vadd.f32 %v4657, %v4929
    %v4937 = vxor.u32 %v4933, 2147483648
    %v4938 = vmul.f32 %v4937, 1.442695
    %v4939 = vpow.pop %v4938
    %v4940 = vadd.f32 %v4939, 1.0
    %v4941 = vrcp.pop %v4940
    %v4942 = vmul.f32 1.0, %v4941
    %v4943 = vxor.u32 %v4934, 2147483648
    %v4944 = vmul.f32 %v4943, 1.442695
    %v4945 = vpow.pop %v4944
    %v4946 = vadd.f32 %v4945, 1.0
    %v4947 = vrcp.pop %v4946
    %v4948 = vmul.f32 1.0, %v4947
    %v4949 = vtanh.pop %v4935
    %v4950 = vxor.u32 %v4936, 2147483648
    %v4951 = vmul.f32 %v4950, 1.442695
    %v4952 = vpow.pop %v4951
    %v4953 = vadd.f32 %v4952, 1.0
    %v4954 = vrcp.pop %v4953
    %v4955 = vmul.f32 1.0, %v4954
    %v4956 = vmul.f32 %v4948, %v4650
    %v4957 = vmul.f32 %v4942, %v4949
    %v4958 = vadd.f32 %v4956, %v4957
    %v4959 = vtanh.pop %v4958
    %v4960 = vmul.f32 %v4955, %v4959
    %4961 = vst [vmem:[%s2079] sm:$0xff] %v4960
    %v4962 = vld [vmem:[%s2083] sm:$0xff]
    %v4963 = vld [vmem:[%s2083 + $0x8] sm:$0xff]
    %v4964 = vld [vmem:[%s2083 + $0x10] sm:$0xff]
    %v4965 = vld [vmem:[%s2083 + $0x18] sm:$0xff]
    %v4966 = vpack.c.bf16 %v4960, %v4960
    %v4967 = vld [vmem:[#allocation12] sm:$0xff]
    %v4968 = vld [vmem:[#allocation12 + $0x8] sm:$0xff]
    %v4969 = vld [vmem:[#allocation12 + $0x10] sm:$0xff]
    %v4970 = vld [vmem:[#allocation12 + $0x18] sm:$0xff]
    %v4971 = vld [vmem:[#allocation12 + $0x20] sm:$0xff]
    %v4972 = vld [vmem:[#allocation12 + $0x28] sm:$0xff]
    %v4973 = vld [vmem:[#allocation12 + $0x30] sm:$0xff]
    %v4974 = vld [vmem:[#allocation12 + $0x38] sm:$0xff]
    %v4975 = vld [vmem:[#allocation12 + $0x40] sm:$0xff]
    %v4976 = vld [vmem:[#allocation12 + $0x48] sm:$0xff]
    %v4977 = vld [vmem:[#allocation12 + $0x50] sm:$0xff]
    %v4978 = vld [vmem:[#allocation12 + $0x58] sm:$0xff]
    %v4979 = vld [vmem:[#allocation12 + $0x60] sm:$0xff]
    %v4980 = vld [vmem:[#allocation12 + $0x68] sm:$0xff]
    %v4981 = vld [vmem:[#allocation12 + $0x70] sm:$0xff]
    %v4982 = vld [vmem:[#allocation12 + $0x78] sm:$0xff]
    %v4983 = vld [vmem:[#allocation12 + $0x80] sm:$0xff]
    %v4984 = vld [vmem:[#allocation12 + $0x88] sm:$0xff]
    %v4985 = vld [vmem:[#allocation12 + $0x90] sm:$0xff]
    %v4986 = vld [vmem:[#allocation12 + $0x98] sm:$0xff]
    %v4987 = vld [vmem:[#allocation12 + $0xa0] sm:$0xff]
    %v4988 = vld [vmem:[#allocation12 + $0xa8] sm:$0xff]
    %v4989 = vld [vmem:[#allocation12 + $0xb0] sm:$0xff]
    %v4990 = vld [vmem:[#allocation12 + $0xb8] sm:$0xff]
    %v4991 = vld [vmem:[#allocation12 + $0xc0] sm:$0xff]
    %v4992 = vld [vmem:[#allocation12 + $0xc8] sm:$0xff]
    %v4993 = vld [vmem:[#allocation12 + $0xd0] sm:$0xff]
    %v4994 = vld [vmem:[#allocation12 + $0xd8] sm:$0xff]
    %v4995 = vld [vmem:[#allocation12 + $0xe0] sm:$0xff]
    %v4996 = vld [vmem:[#allocation12 + $0xe8] sm:$0xff]
    %v4997 = vld [vmem:[#allocation12 + $0xf0] sm:$0xff]
    %v4998 = vld [vmem:[#allocation12 + $0xf8] sm:$0xff]
    %v5031 = vunpack.c.l.b16 %v4967
    %v5032 = vunpack.c.h.b16 %v4967
    %v5033 = vunpack.c.l.b16 %v4968
    %v5034 = vunpack.c.h.b16 %v4968
    %v5035 = vunpack.c.l.b16 %v4969
    %v5036 = vunpack.c.h.b16 %v4969
    %v5037 = vunpack.c.l.b16 %v4970
    %v5038 = vunpack.c.h.b16 %v4970
    %v5039 = vunpack.c.l.b16 %v4971
    %v5040 = vunpack.c.h.b16 %v4971
    %v5041 = vunpack.c.l.b16 %v4972
    %v5042 = vunpack.c.h.b16 %v4972
    %v5043 = vunpack.c.l.b16 %v4973
    %v5044 = vunpack.c.h.b16 %v4973
    %v5045 = vunpack.c.l.b16 %v4974
    %v5046 = vunpack.c.h.b16 %v4974
    %v5047 = vunpack.c.l.b16 %v4975
    %v5048 = vunpack.c.h.b16 %v4975
    %v5049 = vunpack.c.l.b16 %v4976
    %v5050 = vunpack.c.h.b16 %v4976
    %v5051 = vunpack.c.l.b16 %v4977
    %v5052 = vunpack.c.h.b16 %v4977
    %v5053 = vunpack.c.l.b16 %v4978
    %v5054 = vunpack.c.h.b16 %v4978
    %v5055 = vunpack.c.l.b16 %v4979
    %v5056 = vunpack.c.h.b16 %v4979
    %v5057 = vunpack.c.l.b16 %v4980
    %v5058 = vunpack.c.h.b16 %v4980
    %v5059 = vunpack.c.l.b16 %v4981
    %v5060 = vunpack.c.h.b16 %v4981
    %v5061 = vunpack.c.l.b16 %v4982
    %v5062 = vunpack.c.h.b16 %v4982
    %v5063 = vunpack.c.l.b16 %v4983
    %v5064 = vunpack.c.h.b16 %v4983
    %v5065 = vunpack.c.l.b16 %v4984
    %v5066 = vunpack.c.h.b16 %v4984
    %v5067 = vunpack.c.l.b16 %v4985
    %v5068 = vunpack.c.h.b16 %v4985
    %v5069 = vunpack.c.l.b16 %v4986
    %v5070 = vunpack.c.h.b16 %v4986
    %v5071 = vunpack.c.l.b16 %v4987
    %v5072 = vunpack.c.h.b16 %v4987
    %v5073 = vunpack.c.l.b16 %v4988
    %v5074 = vunpack.c.h.b16 %v4988
    %v5075 = vunpack.c.l.b16 %v4989
    %v5076 = vunpack.c.h.b16 %v4989
    %v5077 = vunpack.c.l.b16 %v4990
    %v5078 = vunpack.c.h.b16 %v4990
    %v5079 = vunpack.c.l.b16 %v4991
    %v5080 = vunpack.c.h.b16 %v4991
    %v5081 = vunpack.c.l.b16 %v4992
    %v5082 = vunpack.c.h.b16 %v4992
    %v5083 = vunpack.c.l.b16 %v4993
    %v5084 = vunpack.c.h.b16 %v4993
    %v5085 = vunpack.c.l.b16 %v4994
    %v5086 = vunpack.c.h.b16 %v4994
    %v5087 = vunpack.c.l.b16 %v4995
    %v5088 = vunpack.c.h.b16 %v4995
    %v5089 = vunpack.c.l.b16 %v4996
    %v5090 = vunpack.c.h.b16 %v4996
    %v5091 = vunpack.c.l.b16 %v4997
    %v5092 = vunpack.c.h.b16 %v4997
    %v5093 = vunpack.c.l.b16 %v4998
    %v5094 = vunpack.c.h.b16 %v4998
    %v5095 = vpack.c.b16 %v5035, %v5031
    %v5096 = vpack.c.b16 %v5036, %v5032
    %v5097 = vpack.c.b16 %v5037, %v5033
    %v5098 = vpack.c.b16 %v5038, %v5034
    %v5099 = vpack.c.b16 %v5043, %v5039
    %v5100 = vpack.c.b16 %v5044, %v5040
    %v5101 = vpack.c.b16 %v5045, %v5041
    %v5102 = vpack.c.b16 %v5046, %v5042
    %v5103 = vpack.c.b16 %v5051, %v5047
    %v5104 = vpack.c.b16 %v5052, %v5048
    %v5105 = vpack.c.b16 %v5053, %v5049
    %v5106 = vpack.c.b16 %v5054, %v5050
    %v5107 = vpack.c.b16 %v5059, %v5055
    %v5108 = vpack.c.b16 %v5060, %v5056
    %v5109 = vpack.c.b16 %v5061, %v5057
    %v5110 = vpack.c.b16 %v5062, %v5058
    %v5111 = vpack.c.b16 %v5067, %v5063
    %v5112 = vpack.c.b16 %v5068, %v5064
    %v5113 = vpack.c.b16 %v5069, %v5065
    %v5114 = vpack.c.b16 %v5070, %v5066
    %v5115 = vpack.c.b16 %v5075, %v5071
    %v5116 = vpack.c.b16 %v5076, %v5072
    %v5117 = vpack.c.b16 %v5077, %v5073
    %v5118 = vpack.c.b16 %v5078, %v5074
    %v5119 = vpack.c.b16 %v5083, %v5079
    %v5120 = vpack.c.b16 %v5084, %v5080
    %v5121 = vpack.c.b16 %v5085, %v5081
    %v5122 = vpack.c.b16 %v5086, %v5082
    %v5123 = vpack.c.b16 %v5091, %v5087
    %v5124 = vpack.c.b16 %v5092, %v5088
    %v5125 = vpack.c.b16 %v5093, %v5089
    %v5126 = vpack.c.b16 %v5094, %v5090
    %5159 = vmatprep.subr.bf16.mxu0 %v5124
    %5160 = vmatpush1.bf16.msra.mxu0 %v5123
    %5161 = vmatprep.subr.bf16.mxu0 %v5120
    %5162 = vmatpush1.bf16.msra.mxu0 %v5119
    %5163 = vmatprep.subr.bf16.mxu0 %v5116
    %5164 = vmatpush1.bf16.msra.mxu0 %v5115
    %5165 = vmatprep.subr.bf16.mxu0 %v5112
    %5166 = vmatpush1.bf16.msra.mxu0 %v5111
    %5167 = vmatprep.subr.bf16.mxu0 %v5108
    %5168 = vmatpush1.bf16.msra.mxu0 %v5107
    %5169 = vmatprep.subr.bf16.mxu0 %v5104
    %5170 = vmatpush1.bf16.msra.mxu0 %v5103
    %5171 = vmatprep.subr.bf16.mxu0 %v5100
    %5172 = vmatpush1.bf16.msra.mxu0 %v5099
    %5173 = vmatprep.subr.bf16.mxu0 %v5096
    %5174 = vmatpush1.bf16.msra.mxu0 %v5095
    %5175 = vmatprep.subr.bf16.mxu0 0
    %5176 = vmatpush2.bf16.msra.mxu0 0
    %5177 = vmatprep.subr.bf16.mxu0 0
    %5178 = vmatpush2.bf16.msra.mxu0 0
    %5179 = vmatprep.subr.bf16.mxu0 0
    %5180 = vmatpush2.bf16.msra.mxu0 0
    %5181 = vmatprep.subr.bf16.mxu0 0
    %5182 = vmatpush2.bf16.msra.mxu0 0
    %5183 = vmatprep.subr.bf16.mxu0 0
    %5184 = vmatpush2.bf16.msra.mxu0 0
    %5185 = vmatprep.subr.bf16.mxu0 0
    %5186 = vmatpush2.bf16.msra.mxu0 0
    %5187 = vmatprep.subr.bf16.mxu0 0
    %5188 = vmatpush2.bf16.msra.mxu0 0
    %5189 = vmatprep.subr.bf16.mxu0 0
    %5190 = vmatpush2.bf16.msra.mxu0 0
    %5191 = vmatprep.mubr.bf16.mxu0 0
    %5192 = vmatmul.mubr.bf16.gmra.mxu0 %v4966
    %v5193 = vpop.f32.mrf.mxu0
    %v5194 = vadd.f32 0.0, %v5193
    %v5195 = vpop.f32.mrf.mxu0
    %v5196 = vadd.f32 0.0, %v5195
    %v5197 = vpop.f32.mrf.mxu0
    %v5198 = vpop.f32.mrf.mxu0
    %5199 = vdwg.mxu0
    %5200 = vmatprep.subr.bf16.mxu0 %v5126
    %5201 = vmatpush1.bf16.msra.mxu0 %v5125
    %5202 = vmatprep.subr.bf16.mxu0 %v5122
    %5203 = vmatpush1.bf16.msra.mxu0 %v5121
    %5204 = vmatprep.subr.bf16.mxu0 %v5118
    %5205 = vmatpush1.bf16.msra.mxu0 %v5117
    %5206 = vmatprep.subr.bf16.mxu0 %v5114
    %5207 = vmatpush1.bf16.msra.mxu0 %v5113
    %5208 = vmatprep.subr.bf16.mxu0 %v5110
    %5209 = vmatpush1.bf16.msra.mxu0 %v5109
    %5210 = vmatprep.subr.bf16.mxu0 %v5106
    %5211 = vmatpush1.bf16.msra.mxu0 %v5105
    %5212 = vmatprep.subr.bf16.mxu0 %v5102
    %5213 = vmatpush1.bf16.msra.mxu0 %v5101
    %5214 = vmatprep.subr.bf16.mxu0 %v5098
    %5215 = vmatpush1.bf16.msra.mxu0 %v5097
    %5216 = vmatprep.subr.bf16.mxu0 0
    %5217 = vmatpush2.bf16.msra.mxu0 0
    %5218 = vmatprep.subr.bf16.mxu0 0
    %5219 = vmatpush2.bf16.msra.mxu0 0
    %5220 = vmatprep.subr.bf16.mxu0 0
    %5221 = vmatpush2.bf16.msra.mxu0 0
    %5222 = vmatprep.subr.bf16.mxu0 0
    %5223 = vmatpush2.bf16.msra.mxu0 0
    %5224 = vmatprep.subr.bf16.mxu0 0
    %5225 = vmatpush2.bf16.msra.mxu0 0
    %5226 = vmatprep.subr.bf16.mxu0 0
    %5227 = vmatpush2.bf16.msra.mxu0 0
    %5228 = vmatprep.subr.bf16.mxu0 0
    %5229 = vmatpush2.bf16.msra.mxu0 0
    %5230 = vmatprep.subr.bf16.mxu0 0
    %5231 = vmatpush2.bf16.msra.mxu0 0
    %5232 = vmatprep.mubr.bf16.mxu0 0
    %5233 = vmatmul.mubr.bf16.gmra.mxu0 %v4966
    %v5234 = vpop.f32.mrf.mxu0
    %v5235 = vadd.f32 0.0, %v5234
    %v5236 = vpop.f32.mrf.mxu0
    %v5237 = vadd.f32 0.0, %v5236
    %v5238 = vpop.f32.mrf.mxu0
    %v5239 = vpop.f32.mrf.mxu0
    %5240 = vdwg.mxu0
    %v5241 = vadd.f32 %v4962, %v5194
    %v5242 = vadd.f32 %v4963, %v5196
    %v5243 = vadd.f32 %v4964, %v5235
    %v5244 = vadd.f32 %v4965, %v5237
    %v5245 = vxor.u32 %v5241, 2147483648
    %v5246 = vmul.f32 %v5245, 1.442695
    %v5247 = vpow.pop %v5246
    %v5248 = vadd.f32 %v5247, 1.0
    %v5249 = vrcp.pop %v5248
    %v5250 = vmul.f32 1.0, %v5249
    %v5251 = vxor.u32 %v5242, 2147483648
    %v5252 = vmul.f32 %v5251, 1.442695
    %v5253 = vpow.pop %v5252
    %v5254 = vadd.f32 %v5253, 1.0
    %v5255 = vrcp.pop %v5254
    %v5256 = vmul.f32 1.0, %v5255
    %v5257 = vtanh.pop %v5243
    %v5258 = vxor.u32 %v5244, 2147483648
    %v5259 = vmul.f32 %v5258, 1.442695
    %v5260 = vpow.pop %v5259
    %v5261 = vadd.f32 %v5260, 1.0
    %v5262 = vrcp.pop %v5261
    %v5263 = vmul.f32 1.0, %v5262
    %v5264 = vmul.f32 %v5256, %v4958
    %v5265 = vmul.f32 %v5250, %v5257
    %v5266 = vadd.f32 %v5264, %v5265
    %v5267 = vtanh.pop %v5266
    %v5268 = vmul.f32 %v5263, %v5267
    %5269 = vst [vmem:[%s2391] sm:$0xff] %v5268
    %v5270 = vld [vmem:[%s2395] sm:$0xff]
    %v5271 = vld [vmem:[%s2395 + $0x8] sm:$0xff]
    %v5272 = vld [vmem:[%s2395 + $0x10] sm:$0xff]
    %v5273 = vld [vmem:[%s2395 + $0x18] sm:$0xff]
    %v5274 = vpack.c.bf16 %v5268, %v5268
    %v5275 = vld [vmem:[#allocation12] sm:$0xff]
    %v5276 = vld [vmem:[#allocation12 + $0x8] sm:$0xff]
    %v5277 = vld [vmem:[#allocation12 + $0x10] sm:$0xff]
    %v5278 = vld [vmem:[#allocation12 + $0x18] sm:$0xff]
    %v5279 = vld [vmem:[#allocation12 + $0x20] sm:$0xff]
    %v5280 = vld [vmem:[#allocation12 + $0x28] sm:$0xff]
    %v5281 = vld [vmem:[#allocation12 + $0x30] sm:$0xff]
    %v5282 = vld [vmem:[#allocation12 + $0x38] sm:$0xff]
    %v5283 = vld [vmem:[#allocation12 + $0x40] sm:$0xff]
    %v5284 = vld [vmem:[#allocation12 + $0x48] sm:$0xff]
    %v5285 = vld [vmem:[#allocation12 + $0x50] sm:$0xff]
    %v5286 = vld [vmem:[#allocation12 + $0x58] sm:$0xff]
    %v5287 = vld [vmem:[#allocation12 + $0x60] sm:$0xff]
    %v5288 = vld [vmem:[#allocation12 + $0x68] sm:$0xff]
    %v5289 = vld [vmem:[#allocation12 + $0x70] sm:$0xff]
    %v5290 = vld [vmem:[#allocation12 + $0x78] sm:$0xff]
    %v5291 = vld [vmem:[#allocation12 + $0x80] sm:$0xff]
    %v5292 = vld [vmem:[#allocation12 + $0x88] sm:$0xff]
    %v5293 = vld [vmem:[#allocation12 + $0x90] sm:$0xff]
    %v5294 = vld [vmem:[#allocation12 + $0x98] sm:$0xff]
    %v5295 = vld [vmem:[#allocation12 + $0xa0] sm:$0xff]
    %v5296 = vld [vmem:[#allocation12 + $0xa8] sm:$0xff]
    %v5297 = vld [vmem:[#allocation12 + $0xb0] sm:$0xff]
    %v5298 = vld [vmem:[#allocation12 + $0xb8] sm:$0xff]
    %v5299 = vld [vmem:[#allocation12 + $0xc0] sm:$0xff]
    %v5300 = vld [vmem:[#allocation12 + $0xc8] sm:$0xff]
    %v5301 = vld [vmem:[#allocation12 + $0xd0] sm:$0xff]
    %v5302 = vld [vmem:[#allocation12 + $0xd8] sm:$0xff]
    %v5303 = vld [vmem:[#allocation12 + $0xe0] sm:$0xff]
    %v5304 = vld [vmem:[#allocation12 + $0xe8] sm:$0xff]
    %v5305 = vld [vmem:[#allocation12 + $0xf0] sm:$0xff]
    %v5306 = vld [vmem:[#allocation12 + $0xf8] sm:$0xff]
    %v5339 = vunpack.c.l.b16 %v5275
    %v5340 = vunpack.c.h.b16 %v5275
    %v5341 = vunpack.c.l.b16 %v5276
    %v5342 = vunpack.c.h.b16 %v5276
    %v5343 = vunpack.c.l.b16 %v5277
    %v5344 = vunpack.c.h.b16 %v5277
    %v5345 = vunpack.c.l.b16 %v5278
    %v5346 = vunpack.c.h.b16 %v5278
    %v5347 = vunpack.c.l.b16 %v5279
    %v5348 = vunpack.c.h.b16 %v5279
    %v5349 = vunpack.c.l.b16 %v5280
    %v5350 = vunpack.c.h.b16 %v5280
    %v5351 = vunpack.c.l.b16 %v5281
    %v5352 = vunpack.c.h.b16 %v5281
    %v5353 = vunpack.c.l.b16 %v5282
    %v5354 = vunpack.c.h.b16 %v5282
    %v5355 = vunpack.c.l.b16 %v5283
    %v5356 = vunpack.c.h.b16 %v5283
    %v5357 = vunpack.c.l.b16 %v5284
    %v5358 = vunpack.c.h.b16 %v5284
    %v5359 = vunpack.c.l.b16 %v5285
    %v5360 = vunpack.c.h.b16 %v5285
    %v5361 = vunpack.c.l.b16 %v5286
    %v5362 = vunpack.c.h.b16 %v5286
    %v5363 = vunpack.c.l.b16 %v5287
    %v5364 = vunpack.c.h.b16 %v5287
    %v5365 = vunpack.c.l.b16 %v5288
    %v5366 = vunpack.c.h.b16 %v5288
    %v5367 = vunpack.c.l.b16 %v5289
    %v5368 = vunpack.c.h.b16 %v5289
    %v5369 = vunpack.c.l.b16 %v5290
    %v5370 = vunpack.c.h.b16 %v5290
    %v5371 = vunpack.c.l.b16 %v5291
    %v5372 = vunpack.c.h.b16 %v5291
    %v5373 = vunpack.c.l.b16 %v5292
    %v5374 = vunpack.c.h.b16 %v5292
    %v5375 = vunpack.c.l.b16 %v5293
    %v5376 = vunpack.c.h.b16 %v5293
    %v5377 = vunpack.c.l.b16 %v5294
    %v5378 = vunpack.c.h.b16 %v5294
    %v5379 = vunpack.c.l.b16 %v5295
    %v5380 = vunpack.c.h.b16 %v5295
    %v5381 = vunpack.c.l.b16 %v5296
    %v5382 = vunpack.c.h.b16 %v5296
    %v5383 = vunpack.c.l.b16 %v5297
    %v5384 = vunpack.c.h.b16 %v5297
    %v5385 = vunpack.c.l.b16 %v5298
    %v5386 = vunpack.c.h.b16 %v5298
    %v5387 = vunpack.c.l.b16 %v5299
    %v5388 = vunpack.c.h.b16 %v5299
    %v5389 = vunpack.c.l.b16 %v5300
    %v5390 = vunpack.c.h.b16 %v5300
    %v5391 = vunpack.c.l.b16 %v5301
    %v5392 = vunpack.c.h.b16 %v5301
    %v5393 = vunpack.c.l.b16 %v5302
    %v5394 = vunpack.c.h.b16 %v5302
    %v5395 = vunpack.c.l.b16 %v5303
    %v5396 = vunpack.c.h.b16 %v5303
    %v5397 = vunpack.c.l.b16 %v5304
    %v5398 = vunpack.c.h.b16 %v5304
    %v5399 = vunpack.c.l.b16 %v5305
    %v5400 = vunpack.c.h.b16 %v5305
    %v5401 = vunpack.c.l.b16 %v5306
    %v5402 = vunpack.c.h.b16 %v5306
    %v5403 = vpack.c.b16 %v5343, %v5339
    %v5404 = vpack.c.b16 %v5344, %v5340
    %v5405 = vpack.c.b16 %v5345, %v5341
    %v5406 = vpack.c.b16 %v5346, %v5342
    %v5407 = vpack.c.b16 %v5351, %v5347
    %v5408 = vpack.c.b16 %v5352, %v5348
    %v5409 = vpack.c.b16 %v5353, %v5349
    %v5410 = vpack.c.b16 %v5354, %v5350
    %v5411 = vpack.c.b16 %v5359, %v5355
    %v5412 = vpack.c.b16 %v5360, %v5356
    %v5413 = vpack.c.b16 %v5361, %v5357
    %v5414 = vpack.c.b16 %v5362, %v5358
    %v5415 = vpack.c.b16 %v5367, %v5363
    %v5416 = vpack.c.b16 %v5368, %v5364
    %v5417 = vpack.c.b16 %v5369, %v5365
    %v5418 = vpack.c.b16 %v5370, %v5366
    %v5419 = vpack.c.b16 %v5375, %v5371
    %v5420 = vpack.c.b16 %v5376, %v5372
    %v5421 = vpack.c.b16 %v5377, %v5373
    %v5422 = vpack.c.b16 %v5378, %v5374
    %v5423 = vpack.c.b16 %v5383, %v5379
    %v5424 = vpack.c.b16 %v5384, %v5380
    %v5425 = vpack.c.b16 %v5385, %v5381
    %v5426 = vpack.c.b16 %v5386, %v5382
    %v5427 = vpack.c.b16 %v5391, %v5387
    %v5428 = vpack.c.b16 %v5392, %v5388
    %v5429 = vpack.c.b16 %v5393, %v5389
    %v5430 = vpack.c.b16 %v5394, %v5390
    %v5431 = vpack.c.b16 %v5399, %v5395
    %v5432 = vpack.c.b16 %v5400, %v5396
    %v5433 = vpack.c.b16 %v5401, %v5397
    %v5434 = vpack.c.b16 %v5402, %v5398
    %5467 = vmatprep.subr.bf16.mxu0 %v5432
    %5468 = vmatpush1.bf16.msra.mxu0 %v5431
    %5469 = vmatprep.subr.bf16.mxu0 %v5428
    %5470 = vmatpush1.bf16.msra.mxu0 %v5427
    %5471 = vmatprep.subr.bf16.mxu0 %v5424
    %5472 = vmatpush1.bf16.msra.mxu0 %v5423
    %5473 = vmatprep.subr.bf16.mxu0 %v5420
    %5474 = vmatpush1.bf16.msra.mxu0 %v5419
    %5475 = vmatprep.subr.bf16.mxu0 %v5416
    %5476 = vmatpush1.bf16.msra.mxu0 %v5415
    %5477 = vmatprep.subr.bf16.mxu0 %v5412
    %5478 = vmatpush1.bf16.msra.mxu0 %v5411
    %5479 = vmatprep.subr.bf16.mxu0 %v5408
    %5480 = vmatpush1.bf16.msra.mxu0 %v5407
    %5481 = vmatprep.subr.bf16.mxu0 %v5404
    %5482 = vmatpush1.bf16.msra.mxu0 %v5403
    %5483 = vmatprep.subr.bf16.mxu0 0
    %5484 = vmatpush2.bf16.msra.mxu0 0
    %5485 = vmatprep.subr.bf16.mxu0 0
    %5486 = vmatpush2.bf16.msra.mxu0 0
    %5487 = vmatprep.subr.bf16.mxu0 0
    %5488 = vmatpush2.bf16.msra.mxu0 0
    %5489 = vmatprep.subr.bf16.mxu0 0
    %5490 = vmatpush2.bf16.msra.mxu0 0
    %5491 = vmatprep.subr.bf16.mxu0 0
    %5492 = vmatpush2.bf16.msra.mxu0 0
    %5493 = vmatprep.subr.bf16.mxu0 0
    %5494 = vmatpush2.bf16.msra.mxu0 0
    %5495 = vmatprep.subr.bf16.mxu0 0
    %5496 = vmatpush2.bf16.msra.mxu0 0
    %5497 = vmatprep.subr.bf16.mxu0 0
    %5498 = vmatpush2.bf16.msra.mxu0 0
    %5499 = vmatprep.mubr.bf16.mxu0 0
    %5500 = vmatmul.mubr.bf16.gmra.mxu0 %v5274
    %v5501 = vpop.f32.mrf.mxu0
    %v5502 = vadd.f32 0.0, %v5501
    %v5503 = vpop.f32.mrf.mxu0
    %v5504 = vadd.f32 0.0, %v5503
    %v5505 = vpop.f32.mrf.mxu0
    %v5506 = vpop.f32.mrf.mxu0
    %5507 = vdwg.mxu0
    %5508 = vmatprep.subr.bf16.mxu0 %v5434
    %5509 = vmatpush1.bf16.msra.mxu0 %v5433
    %5510 = vmatprep.subr.bf16.mxu0 %v5430
    %5511 = vmatpush1.bf16.msra.mxu0 %v5429
    %5512 = vmatprep.subr.bf16.mxu0 %v5426
    %5513 = vmatpush1.bf16.msra.mxu0 %v5425
    %5514 = vmatprep.subr.bf16.mxu0 %v5422
    %5515 = vmatpush1.bf16.msra.mxu0 %v5421
    %5516 = vmatprep.subr.bf16.mxu0 %v5418
    %5517 = vmatpush1.bf16.msra.mxu0 %v5417
    %5518 = vmatprep.subr.bf16.mxu0 %v5414
    %5519 = vmatpush1.bf16.msra.mxu0 %v5413
    %5520 = vmatprep.subr.bf16.mxu0 %v5410
    %5521 = vmatpush1.bf16.msra.mxu0 %v5409
    %5522 = vmatprep.subr.bf16.mxu0 %v5406
    %5523 = vmatpush1.bf16.msra.mxu0 %v5405
    %5524 = vmatprep.subr.bf16.mxu0 0
    %5525 = vmatpush2.bf16.msra.mxu0 0
    %5526 = vmatprep.subr.bf16.mxu0 0
    %5527 = vmatpush2.bf16.msra.mxu0 0
    %5528 = vmatprep.subr.bf16.mxu0 0
    %5529 = vmatpush2.bf16.msra.mxu0 0
    %5530 = vmatprep.subr.bf16.mxu0 0
    %5531 = vmatpush2.bf16.msra.mxu0 0
    %5532 = vmatprep.subr.bf16.mxu0 0
    %5533 = vmatpush2.bf16.msra.mxu0 0
    %5534 = vmatprep.subr.bf16.mxu0 0
    %5535 = vmatpush2.bf16.msra.mxu0 0
    %5536 = vmatprep.subr.bf16.mxu0 0
    %5537 = vmatpush2.bf16.msra.mxu0 0
    %5538 = vmatprep.subr.bf16.mxu0 0
    %5539 = vmatpush2.bf16.msra.mxu0 0
    %5540 = vmatprep.mubr.bf16.mxu0 0
    %5541 = vmatmul.mubr.bf16.gmra.mxu0 %v5274
    %v5542 = vpop.f32.mrf.mxu0
    %v5543 = vadd.f32 0.0, %v5542
    %v5544 = vpop.f32.mrf.mxu0
    %v5545 = vadd.f32 0.0, %v5544
    %v5546 = vpop.f32.mrf.mxu0
    %v5547 = vpop.f32.mrf.mxu0
    %5548 = vdwg.mxu0
    %v5549 = vadd.f32 %v5270, %v5502
    %v5550 = vadd.f32 %v5271, %v5504
    %v5551 = vadd.f32 %v5272, %v5543
    %v5552 = vadd.f32 %v5273, %v5545
    %v5553 = vxor.u32 %v5549, 2147483648
    %v5554 = vmul.f32 %v5553, 1.442695
    %v5555 = vpow.pop %v5554
    %v5556 = vadd.f32 %v5555, 1.0
    %v5557 = vrcp.pop %v5556
    %v5558 = vmul.f32 1.0, %v5557
    %v5559 = vxor.u32 %v5550, 2147483648
    %v5560 = vmul.f32 %v5559, 1.442695
    %v5561 = vpow.pop %v5560
    %v5562 = vadd.f32 %v5561, 1.0
    %v5563 = vrcp.pop %v5562
    %v5564 = vmul.f32 1.0, %v5563
    %v5565 = vtanh.pop %v5551
    %v5566 = vxor.u32 %v5552, 2147483648
    %v5567 = vmul.f32 %v5566, 1.442695
    %v5568 = vpow.pop %v5567
    %v5569 = vadd.f32 %v5568, 1.0
    %v5570 = vrcp.pop %v5569
    %v5571 = vmul.f32 1.0, %v5570
    %v5572 = vmul.f32 %v5564, %v5266
    %v5573 = vmul.f32 %v5558, %v5565
    %v5574 = vadd.f32 %v5572, %v5573
    %v5575 = vtanh.pop %v5574
    %v5576 = vmul.f32 %v5571, %v5575
    %5577 = vst [vmem:[%s2703] sm:$0xff] %v5576
    %v5578 = vld [vmem:[%s2707] sm:$0xff]
    %v5579 = vld [vmem:[%s2707 + $0x8] sm:$0xff]
    %v5580 = vld [vmem:[%s2707 + $0x10] sm:$0xff]
    %v5581 = vld [vmem:[%s2707 + $0x18] sm:$0xff]
    %v5582 = vpack.c.bf16 %v5576, %v5576
    %v5583 = vld [vmem:[#allocation12] sm:$0xff]
    %v5584 = vld [vmem:[#allocation12 + $0x8] sm:$0xff]
    %v5585 = vld [vmem:[#allocation12 + $0x10] sm:$0xff]
    %v5586 = vld [vmem:[#allocation12 + $0x18] sm:$0xff]
    %v5587 = vld [vmem:[#allocation12 + $0x20] sm:$0xff]
    %v5588 = vld [vmem:[#allocation12 + $0x28] sm:$0xff]
    %v5589 = vld [vmem:[#allocation12 + $0x30] sm:$0xff]
    %v5590 = vld [vmem:[#allocation12 + $0x38] sm:$0xff]
    %v5591 = vld [vmem:[#allocation12 + $0x40] sm:$0xff]
    %v5592 = vld [vmem:[#allocation12 + $0x48] sm:$0xff]
    %v5593 = vld [vmem:[#allocation12 + $0x50] sm:$0xff]
    %v5594 = vld [vmem:[#allocation12 + $0x58] sm:$0xff]
    %v5595 = vld [vmem:[#allocation12 + $0x60] sm:$0xff]
    %v5596 = vld [vmem:[#allocation12 + $0x68] sm:$0xff]
    %v5597 = vld [vmem:[#allocation12 + $0x70] sm:$0xff]
    %v5598 = vld [vmem:[#allocation12 + $0x78] sm:$0xff]
    %v5599 = vld [vmem:[#allocation12 + $0x80] sm:$0xff]
    %v5600 = vld [vmem:[#allocation12 + $0x88] sm:$0xff]
    %v5601 = vld [vmem:[#allocation12 + $0x90] sm:$0xff]
    %v5602 = vld [vmem:[#allocation12 + $0x98] sm:$0xff]
    %v5603 = vld [vmem:[#allocation12 + $0xa0] sm:$0xff]
    %v5604 = vld [vmem:[#allocation12 + $0xa8] sm:$0xff]
    %v5605 = vld [vmem:[#allocation12 + $0xb0] sm:$0xff]
    %v5606 = vld [vmem:[#allocation12 + $0xb8] sm:$0xff]
    %v5607 = vld [vmem:[#allocation12 + $0xc0] sm:$0xff]
    %v5608 = vld [vmem:[#allocation12 + $0xc8] sm:$0xff]
    %v5609 = vld [vmem:[#allocation12 + $0xd0] sm:$0xff]
    %v5610 = vld [vmem:[#allocation12 + $0xd8] sm:$0xff]
    %v5611 = vld [vmem:[#allocation12 + $0xe0] sm:$0xff]
    %v5612 = vld [vmem:[#allocation12 + $0xe8] sm:$0xff]
    %v5613 = vld [vmem:[#allocation12 + $0xf0] sm:$0xff]
    %v5614 = vld [vmem:[#allocation12 + $0xf8] sm:$0xff]
    %v5647 = vunpack.c.l.b16 %v5583
    %v5648 = vunpack.c.h.b16 %v5583
    %v5649 = vunpack.c.l.b16 %v5584
    %v5650 = vunpack.c.h.b16 %v5584
    %v5651 = vunpack.c.l.b16 %v5585
    %v5652 = vunpack.c.h.b16 %v5585
    %v5653 = vunpack.c.l.b16 %v5586
    %v5654 = vunpack.c.h.b16 %v5586
    %v5655 = vunpack.c.l.b16 %v5587
    %v5656 = vunpack.c.h.b16 %v5587
    %v5657 = vunpack.c.l.b16 %v5588
    %v5658 = vunpack.c.h.b16 %v5588
    %v5659 = vunpack.c.l.b16 %v5589
    %v5660 = vunpack.c.h.b16 %v5589
    %v5661 = vunpack.c.l.b16 %v5590
    %v5662 = vunpack.c.h.b16 %v5590
    %v5663 = vunpack.c.l.b16 %v5591
    %v5664 = vunpack.c.h.b16 %v5591
    %v5665 = vunpack.c.l.b16 %v5592
    %v5666 = vunpack.c.h.b16 %v5592
    %v5667 = vunpack.c.l.b16 %v5593
    %v5668 = vunpack.c.h.b16 %v5593
    %v5669 = vunpack.c.l.b16 %v5594
    %v5670 = vunpack.c.h.b16 %v5594
    %v5671 = vunpack.c.l.b16 %v5595
    %v5672 = vunpack.c.h.b16 %v5595
    %v5673 = vunpack.c.l.b16 %v5596
    %v5674 = vunpack.c.h.b16 %v5596
    %v5675 = vunpack.c.l.b16 %v5597
    %v5676 = vunpack.c.h.b16 %v5597
    %v5677 = vunpack.c.l.b16 %v5598
    %v5678 = vunpack.c.h.b16 %v5598
    %v5679 = vunpack.c.l.b16 %v5599
    %v5680 = vunpack.c.h.b16 %v5599
    %v5681 = vunpack.c.l.b16 %v5600
    %v5682 = vunpack.c.h.b16 %v5600
    %v5683 = vunpack.c.l.b16 %v5601
    %v5684 = vunpack.c.h.b16 %v5601
    %v5685 = vunpack.c.l.b16 %v5602
    %v5686 = vunpack.c.h.b16 %v5602
    %v5687 = vunpack.c.l.b16 %v5603
    %v5688 = vunpack.c.h.b16 %v5603
    %v5689 = vunpack.c.l.b16 %v5604
    %v5690 = vunpack.c.h.b16 %v5604
    %v5691 = vunpack.c.l.b16 %v5605
    %v5692 = vunpack.c.h.b16 %v5605
    %v5693 = vunpack.c.l.b16 %v5606
    %v5694 = vunpack.c.h.b16 %v5606
    %v5695 = vunpack.c.l.b16 %v5607
    %v5696 = vunpack.c.h.b16 %v5607
    %v5697 = vunpack.c.l.b16 %v5608
    %v5698 = vunpack.c.h.b16 %v5608
    %v5699 = vunpack.c.l.b16 %v5609
    %v5700 = vunpack.c.h.b16 %v5609
    %v5701 = vunpack.c.l.b16 %v5610
    %v5702 = vunpack.c.h.b16 %v5610
    %v5703 = vunpack.c.l.b16 %v5611
    %v5704 = vunpack.c.h.b16 %v5611
    %v5705 = vunpack.c.l.b16 %v5612
    %v5706 = vunpack.c.h.b16 %v5612
    %v5707 = vunpack.c.l.b16 %v5613
    %v5708 = vunpack.c.h.b16 %v5613
    %v5709 = vunpack.c.l.b16 %v5614
    %v5710 = vunpack.c.h.b16 %v5614
    %v5711 = vpack.c.b16 %v5651, %v5647
    %v5712 = vpack.c.b16 %v5652, %v5648
    %v5713 = vpack.c.b16 %v5653, %v5649
    %v5714 = vpack.c.b16 %v5654, %v5650
    %v5715 = vpack.c.b16 %v5659, %v5655
    %v5716 = vpack.c.b16 %v5660, %v5656
    %v5717 = vpack.c.b16 %v5661, %v5657
    %v5718 = vpack.c.b16 %v5662, %v5658
    %v5719 = vpack.c.b16 %v5667, %v5663
    %v5720 = vpack.c.b16 %v5668, %v5664
    %v5721 = vpack.c.b16 %v5669, %v5665
    %v5722 = vpack.c.b16 %v5670, %v5666
    %v5723 = vpack.c.b16 %v5675, %v5671
    %v5724 = vpack.c.b16 %v5676, %v5672
    %v5725 = vpack.c.b16 %v5677, %v5673
    %v5726 = vpack.c.b16 %v5678, %v5674
    %v5727 = vpack.c.b16 %v5683, %v5679
    %v5728 = vpack.c.b16 %v5684, %v5680
    %v5729 = vpack.c.b16 %v5685, %v5681
    %v5730 = vpack.c.b16 %v5686, %v5682
    %v5731 = vpack.c.b16 %v5691, %v5687
    %v5732 = vpack.c.b16 %v5692, %v5688
    %v5733 = vpack.c.b16 %v5693, %v5689
    %v5734 = vpack.c.b16 %v5694, %v5690
    %v5735 = vpack.c.b16 %v5699, %v5695
    %v5736 = vpack.c.b16 %v5700, %v5696
    %v5737 = vpack.c.b16 %v5701, %v5697
    %v5738 = vpack.c.b16 %v5702, %v5698
    %v5739 = vpack.c.b16 %v5707, %v5703
    %v5740 = vpack.c.b16 %v5708, %v5704
    %v5741 = vpack.c.b16 %v5709, %v5705
    %v5742 = vpack.c.b16 %v5710, %v5706
    %5775 = vmatprep.subr.bf16.mxu0 %v5740
    %5776 = vmatpush1.bf16.msra.mxu0 %v5739
    %5777 = vmatprep.subr.bf16.mxu0 %v5736
    %5778 = vmatpush1.bf16.msra.mxu0 %v5735
    %5779 = vmatprep.subr.bf16.mxu0 %v5732
    %5780 = vmatpush1.bf16.msra.mxu0 %v5731
    %5781 = vmatprep.subr.bf16.mxu0 %v5728
    %5782 = vmatpush1.bf16.msra.mxu0 %v5727
    %5783 = vmatprep.subr.bf16.mxu0 %v5724
    %5784 = vmatpush1.bf16.msra.mxu0 %v5723
    %5785 = vmatprep.subr.bf16.mxu0 %v5720
    %5786 = vmatpush1.bf16.msra.mxu0 %v5719
    %5787 = vmatprep.subr.bf16.mxu0 %v5716
    %5788 = vmatpush1.bf16.msra.mxu0 %v5715
    %5789 = vmatprep.subr.bf16.mxu0 %v5712
    %5790 = vmatpush1.bf16.msra.mxu0 %v5711
    %5791 = vmatprep.subr.bf16.mxu0 0
    %5792 = vmatpush2.bf16.msra.mxu0 0
    %5793 = vmatprep.subr.bf16.mxu0 0
    %5794 = vmatpush2.bf16.msra.mxu0 0
    %5795 = vmatprep.subr.bf16.mxu0 0
    %5796 = vmatpush2.bf16.msra.mxu0 0
    %5797 = vmatprep.subr.bf16.mxu0 0
    %5798 = vmatpush2.bf16.msra.mxu0 0
    %5799 = vmatprep.subr.bf16.mxu0 0
    %5800 = vmatpush2.bf16.msra.mxu0 0
    %5801 = vmatprep.subr.bf16.mxu0 0
    %5802 = vmatpush2.bf16.msra.mxu0 0
    %5803 = vmatprep.subr.bf16.mxu0 0
    %5804 = vmatpush2.bf16.msra.mxu0 0
    %5805 = vmatprep.subr.bf16.mxu0 0
    %5806 = vmatpush2.bf16.msra.mxu0 0
    %5807 = vmatprep.mubr.bf16.mxu0 0
    %5808 = vmatmul.mubr.bf16.gmra.mxu0 %v5582
    %v5809 = vpop.f32.mrf.mxu0
    %v5810 = vadd.f32 0.0, %v5809
    %v5811 = vpop.f32.mrf.mxu0
    %v5812 = vadd.f32 0.0, %v5811
    %v5813 = vpop.f32.mrf.mxu0
    %v5814 = vpop.f32.mrf.mxu0
    %5815 = vdwg.mxu0
    %5816 = vmatprep.subr.bf16.mxu0 %v5742
    %5817 = vmatpush1.bf16.msra.mxu0 %v5741
    %5818 = vmatprep.subr.bf16.mxu0 %v5738
    %5819 = vmatpush1.bf16.msra.mxu0 %v5737
    %5820 = vmatprep.subr.bf16.mxu0 %v5734
    %5821 = vmatpush1.bf16.msra.mxu0 %v5733
    %5822 = vmatprep.subr.bf16.mxu0 %v5730
    %5823 = vmatpush1.bf16.msra.mxu0 %v5729
    %5824 = vmatprep.subr.bf16.mxu0 %v5726
    %5825 = vmatpush1.bf16.msra.mxu0 %v5725
    %5826 = vmatprep.subr.bf16.mxu0 %v5722
    %5827 = vmatpush1.bf16.msra.mxu0 %v5721
    %5828 = vmatprep.subr.bf16.mxu0 %v5718
    %5829 = vmatpush1.bf16.msra.mxu0 %v5717
    %5830 = vmatprep.subr.bf16.mxu0 %v5714
    %5831 = vmatpush1.bf16.msra.mxu0 %v5713
    %5832 = vmatprep.subr.bf16.mxu0 0
    %5833 = vmatpush2.bf16.msra.mxu0 0
    %5834 = vmatprep.subr.bf16.mxu0 0
    %5835 = vmatpush2.bf16.msra.mxu0 0
    %5836 = vmatprep.subr.bf16.mxu0 0
    %5837 = vmatpush2.bf16.msra.mxu0 0
    %5838 = vmatprep.subr.bf16.mxu0 0
    %5839 = vmatpush2.bf16.msra.mxu0 0
    %5840 = vmatprep.subr.bf16.mxu0 0
    %5841 = vmatpush2.bf16.msra.mxu0 0
    %5842 = vmatprep.subr.bf16.mxu0 0
    %5843 = vmatpush2.bf16.msra.mxu0 0
    %5844 = vmatprep.subr.bf16.mxu0 0
    %5845 = vmatpush2.bf16.msra.mxu0 0
    %5846 = vmatprep.subr.bf16.mxu0 0
    %5847 = vmatpush2.bf16.msra.mxu0 0
    %5848 = vmatprep.mubr.bf16.mxu0 0
    %5849 = vmatmul.mubr.bf16.gmra.mxu0 %v5582
    %v5850 = vpop.f32.mrf.mxu0
    %v5851 = vadd.f32 0.0, %v5850
    %v5852 = vpop.f32.mrf.mxu0
    %v5853 = vadd.f32 0.0, %v5852
    %v5854 = vpop.f32.mrf.mxu0
    %v5855 = vpop.f32.mrf.mxu0
    %5856 = vdwg.mxu0
    %v5857 = vadd.f32 %v5578, %v5810
    %v5858 = vadd.f32 %v5579, %v5812
    %v5859 = vadd.f32 %v5580, %v5851
    %v5860 = vadd.f32 %v5581, %v5853
    %v5861 = vxor.u32 %v5857, 2147483648
    %v5862 = vmul.f32 %v5861, 1.442695
    %v5863 = vpow.pop %v5862
    %v5864 = vadd.f32 %v5863, 1.0
    %v5865 = vrcp.pop %v5864
    %v5866 = vmul.f32 1.0, %v5865
    %v5867 = vxor.u32 %v5858, 2147483648
    %v5868 = vmul.f32 %v5867, 1.442695
    %v5869 = vpow.pop %v5868
    %v5870 = vadd.f32 %v5869, 1.0
    %v5871 = vrcp.pop %v5870
    %v5872 = vmul.f32 1.0, %v5871
    %v5873 = vtanh.pop %v5859
    %v5874 = vxor.u32 %v5860, 2147483648
    %v5875 = vmul.f32 %v5874, 1.442695
    %v5876 = vpow.pop %v5875
    %v5877 = vadd.f32 %v5876, 1.0
    %v5878 = vrcp.pop %v5877
    %v5879 = vmul.f32 1.0, %v5878
    %v5880 = vmul.f32 %v5872, %v5574
    %v5881 = vmul.f32 %v5866, %v5873
    %v5882 = vadd.f32 %v5880, %v5881
    %v5883 = vtanh.pop %v5882
    %v5884 = vmul.f32 %v5879, %v5883
    %5885 = vst [vmem:[%s3015] sm:$0xff] %v5884
    %s5886 = scalar_lea.vmem [#allocation13], 8
    %5887 = vst [vmem:[%s5886] sm:$0xff] %v5884
    %s5888 = scalar_lea.vmem [#allocation14], 8
    %5889 = vst [vmem:[%s5888] sm:$0xff] %v5882
    // Predicated region
    $region50: #{tpu_custom_call.1} parent=1 // pred_check
      _
    $region51: #{tpu_custom_call.1} parent=1 // pred_check_branch
      %5891 = sbr.rel (0) target = $region53
    $region52: #{tpu_custom_call.1} parent=1 // pred_region
      %s5893 = ssub.s32 256, 256
      %5894 = vsyncadd [#allocation6], %s5893
      %s5895 = sshll.u32 [#allocation13], 4
      %s5896 = int_to_ptr.vmem [resolvable:$true] %s5895
      %5901 = dma.vmem_to_hbm [thread:$0]  %s5896, 256, %s7, [#allocation6], 128, 128, 8
    $region53: #{tpu_custom_call.1} parent=1 // pred_fallthru
      _
    // Predicated region
    $region54: #{tpu_custom_call.1} parent=1 // pred_check
      _
    $region55: #{tpu_custom_call.1} parent=1 // pred_check_branch
      %5903 = sbr.rel (0) target = $region57
    $region56: #{tpu_custom_call.1} parent=1 // pred_region
      %s5905 = ssub.s32 256, 256
      %5906 = vsyncadd [#allocation15], %s5905
      %s5907 = sshll.u32 [#allocation14], 4
      %s5908 = int_to_ptr.vmem [resolvable:$true] %s5907
      %5913 = dma.vmem_to_hbm [thread:$0]  %s5908, 256, %s8, [#allocation15], 128, 128, 8
    $region57: #{tpu_custom_call.1} parent=1 // pred_fallthru
      _
    // Predicated region
    $region58: #{tpu_custom_call.1} parent=1 // pred_check
      _
    $region59: #{tpu_custom_call.1} parent=1 // pred_check_branch
      %5915 = sbr.rel (0) target = $region61
    $region60: #{tpu_custom_call.1} parent=1 // pred_region
      %5916 = dma.done [#allocation6], 256
    $region61: #{tpu_custom_call.1} parent=1 // pred_fallthru
      _
    // Predicated region
    $region62: #{tpu_custom_call.1} parent=1 // pred_check
      _
    $region63: #{tpu_custom_call.1} parent=1 // pred_check_branch
      %5918 = sbr.rel (0) target = $region65
    $region64: #{tpu_custom_call.1} parent=1 // pred_region
      %5919 = dma.done [#allocation15], 256
    $region65: #{tpu_custom_call.1} parent=1 // pred_fallthru
      _
    %5920 = vsyncpa [#allocation5], 1
    %5921 = vsyncpa [#allocation8], 1
    %5922 = vsyncpa [#allocation11], 1
    %5923 = vsyncpa [#allocation6], 1
    %5924 = vsyncpa [#allocation15], 1

</llo_original>
